<compile_context>
chip_gen: v5e
topology: v5e:2x2
jax: 0.10.0
libtpu: 0.0.40
codegen_flags: <defaults>
</compile_context>

<pallas_src>
import jax
import jax.numpy as jnp
from jax.experimental import pallas as pl
from jax.experimental.pallas import tpu as pltpu

D_IN = 784
D_H = 400
D_Z = 20
ENC_W = 128         # single lane-dense block holding the packed (mu || logvar) head
LOGVAR_LANE = 64    # lane offset of logvar inside the packed head (mu sits at lane 0)


def _vae_kernel(x_ref, eps_ref,
                w1_ref, b1_ref,
                wenc_ref, benc_ref,
                w3_ref, b3_ref,
                w4_ref, b4_ref,
                recon_ref, enc_ref):
    # Activations are cast to bf16 only for the MXU; accumulation stays f32.
    x = x_ref[...].astype(jnp.bfloat16)

    # ---- encode: fc1 + relu ----
    h1 = jnp.dot(x, w1_ref[...], preferred_element_type=jnp.float32) + b1_ref[...]
    h1 = jnp.maximum(h1, 0.0)

    # ---- fused packed head: one [400,128] matmul; mu @ lanes [0,20), logvar @ [64,84) ----
    enc = jnp.dot(h1.astype(jnp.bfloat16), wenc_ref[...],
                  preferred_element_type=jnp.float32) + benc_ref[...]
    enc_ref[...] = enc.astype(enc_ref.dtype)   # single lane-dense mu||logvar writeback

    # ---- reparameterize (f32 elementwise; v5e has no bf16 VPU/EUP path) ----
    # Bring logvar onto lanes [0,20) with an XLU lane rotate (+64 == -64 mod 128).
    logvar = pltpu.roll(enc, shift=LOGVAR_LANE, axis=1)[:, :D_Z]
    mu = enc[:, :D_Z]
    std = jnp.exp(0.5 * logvar)
    z = eps_ref[...] * std + mu                # [tb, 20]

    # ---- decode: fc3 + relu, fc4 + sigmoid ----
    h3 = jnp.dot(z.astype(jnp.bfloat16), w3_ref[...],
                 preferred_element_type=jnp.float32) + b3_ref[...]
    h3 = jnp.maximum(h3, 0.0)
    logits = jnp.dot(h3.astype(jnp.bfloat16), w4_ref[...],
                     preferred_element_type=jnp.float32) + b4_ref[...]
    # Exact sigmoid, bounded in [0,1] (BCE-safe), one EUP push (tanh) per vreg.
    recon = 0.5 * jnp.tanh(0.5 * logits) + 0.5
    recon_ref[...] = recon.astype(recon_ref.dtype)


def vae_forward(x, eps, packed, *, tb=512, recon_dtype=jnp.float32):
    """Whole VAE forward in one batch-tiled Pallas call.

    x:   [B, 784] f32
    eps: [B, 20]  f32 (the randn_like noise)
    packed: output of pack_params() (packed/padded bf16 weights + f32 biases)
    Returns (recon [B,784] recon_dtype, mu [B,20] f32, logvar [B,20] f32).
    """
    B = x.shape[0]
    w1, b1, wenc, benc, w3, b3, w4, b4 = packed

    # Batch tile: multiple of 8 sublanes, capped so the grid keeps >= 2 steps
    # (v7x shards the "parallel" batch axis across its 2 TensorCores).
    tb = max(8, (min(tb, B) // 8) * 8)
    half = max(8, (((B + 1) // 2) // 8) * 8)   # round_down(ceil(B/2), 8)
    tb = min(tb, half)
    nb = pl.cdiv(B, tb)
    Bp = nb * tb

    # Pad the batch only when actually needed (avoids a wasted HBM round trip).
    if Bp != B:
        x = jnp.pad(x, ((0, Bp - B), (0, 0)))
        eps = jnp.pad(eps, ((0, Bp - B), (0, 0)))

    def bspec(cols):   # batch-tiled operand / result
        return pl.BlockSpec((tb, cols), lambda i: (i, 0))

    def wspec(shape):  # resident weight/bias: constant index_map => DMA'd once
        return pl.BlockSpec(shape, lambda i: (0,) * len(shape))

    inputs = (x, eps, w1, b1, wenc, benc, w3, b3, w4, b4)
    in_specs = [bspec(D_IN), bspec(D_Z)] + [wspec(a.shape) for a in inputs[2:]]

    out_shape = (
        jax.ShapeDtypeStruct((Bp, D_IN), recon_dtype),   # recon
        jax.ShapeDtypeStruct((Bp, ENC_W), jnp.float32),  # packed mu||logvar
    )
    out_specs = (bspec(D_IN), bspec(ENC_W))

    recon_p, enc_p = pl.pallas_call(
        _vae_kernel,
        out_shape=out_shape,
        grid=(nb,),
        in_specs=in_specs,
        out_specs=out_specs,
        compiler_params=pltpu.CompilerParams(
            dimension_semantics=("parallel",)),  # v7x: shard batch over 2 TCs
    )(*inputs)

    recon = recon_p[:B]
    mu = enc_p[:B, :D_Z]
    logvar = enc_p[:B, LOGVAR_LANE:LOGVAR_LANE + D_Z]
    return recon, mu, logvar


def init_params(key):
    """Deterministic synthetic parameters in PyTorch Linear shapes, stored
    transposed as [in, out], biases as [1, out]."""
    ks = jax.random.split(key, 10)

    def linear(kw, kb, fan_in, fan_out):
        bound = 1.0 / jnp.sqrt(fan_in)
        w = jax.random.uniform(kw, (fan_in, fan_out), jnp.float32, -bound, bound)
        b = jax.random.uniform(kb, (1, fan_out), jnp.float32, -bound, bound)
        return w, b

    w1, b1 = linear(ks[0], ks[1], D_IN, D_H)     # fc1
    w21, b21 = linear(ks[2], ks[3], D_H, D_Z)    # fc21 (mu)
    w22, b22 = linear(ks[4], ks[5], D_H, D_Z)    # fc22 (logvar)
    w3, b3 = linear(ks[6], ks[7], D_Z, D_H)      # fc3
    w4, b4 = linear(ks[8], ks[9], D_H, D_IN)     # fc4
    return (w1, b1, w21, b21, w22, b22, w3, b3, w4, b4)


def pack_params(params):
    """Pack the mu/logvar heads into a single 128-lane weight block (mu at lanes
    [0,20), logvar at [64,84), zeros elsewhere) and cast weights to bf16.
    Biases stay f32 and are added after the f32 MXU accumulate."""
    (w1, b1, w21, b21, w22, b22, w3, b3, w4, b4) = params

    wenc = jnp.zeros((D_H, ENC_W), jnp.float32)
    wenc = wenc.at[:, :D_Z].set(w21).at[:, LOGVAR_LANE:LOGVAR_LANE + D_Z].set(w22)
    benc = jnp.zeros((1, ENC_W), jnp.float32)
    benc = benc.at[:, :D_Z].set(b21).at[:, LOGVAR_LANE:LOGVAR_LANE + D_Z].set(b22)

    bf = jnp.bfloat16
    return (w1.astype(bf), b1,
            wenc.astype(bf), benc,
            w3.astype(bf), b3,
            w4.astype(bf), b4)


def vae_forward_ref(x, eps, packed):
    """Plain-JAX reference using the same (bf16-quantized, upcast) weights."""
    w1, b1, wenc, benc, w3, b3, w4, b4 = [a.astype(jnp.float32) for a in packed]
    h1 = jnp.maximum(x @ w1 + b1, 0.0)
    enc = h1 @ wenc + benc
    mu = enc[:, :D_Z]
    logvar = enc[:, LOGVAR_LANE:LOGVAR_LANE + D_Z]
    z = eps * jnp.exp(0.5 * logvar) + mu
    h3 = jnp.maximum(z @ w3 + b3, 0.0)
    recon = jax.nn.sigmoid(h3 @ w4 + b4)
    return recon, mu, logvar


if __name__ == "__main__":
    key = jax.random.PRNGKey(0)
    k_param, k_x, k_eps = jax.random.split(key, 3)

    B = 24  # small test batch; tb cap gives grid=(3,), exercising the batch tiling
    params = init_params(k_param)
    packed = pack_params(params)
    x = jax.random.uniform(k_x, (B, D_IN), jnp.float32)       # MNIST-like pixels in [0,1)
    eps = jax.random.normal(k_eps, (B, D_Z), jnp.float32)     # randn_like(std)

    recon, mu, logvar = vae_forward(x, eps, packed)
    jax.block_until_ready((recon, mu, logvar))

    assert recon.shape == (B, D_IN) and mu.shape == (B, D_Z) and logvar.shape == (B, D_Z)

    # Sanity check against a plain-JAX reference (bf16 matmul inputs in the kernel
    # => tolerances loosened accordingly).
    r_ref, mu_ref, lv_ref = vae_forward_ref(x, eps, packed)
    assert jnp.allclose(mu, mu_ref, atol=2e-2, rtol=2e-2)
    assert jnp.allclose(logvar, lv_ref, atol=2e-2, rtol=2e-2)
    assert jnp.allclose(recon, r_ref, atol=2e-2, rtol=2e-2)
    assert float(jnp.max(recon)) <= 1.0 and float(jnp.min(recon)) >= 0.0  # BCE-safe

    print("KERNEL_OK")
</pallas_src>

<mosaic_0001>
module attributes {stable_mosaic.version = 11 : i64} {
  func.func @_vae_kernel(%arg0: i32, %arg1: memref<8x784xf32, #tpu.memory_space<vmem>>, %arg2: memref<8x20xf32, #tpu.memory_space<vmem>>, %arg3: memref<784x400xbf16, #tpu.memory_space<vmem>>, %arg4: memref<1x400xf32, #tpu.memory_space<vmem>>, %arg5: memref<400x128xbf16, #tpu.memory_space<vmem>>, %arg6: memref<1x128xf32, #tpu.memory_space<vmem>>, %arg7: memref<20x400xbf16, #tpu.memory_space<vmem>>, %arg8: memref<1x400xf32, #tpu.memory_space<vmem>>, %arg9: memref<400x784xbf16, #tpu.memory_space<vmem>>, %arg10: memref<1x784xf32, #tpu.memory_space<vmem>>, %arg11: memref<8x784xf32, #tpu.memory_space<vmem>>, %arg12: memref<8x128xf32, #tpu.memory_space<vmem>>) attributes {dimension_semantics = [#tpu.dimension_semantics<parallel>], iteration_bounds = array<i64: 3>, scalar_prefetch = 0 : i64, scratch_operands = 0 : i64, tpu.core_type = #tpu.core_type<tc>, window_params = [{transform_indices = @transform_0, window_bounds = array<i64: 8, 784>}, {transform_indices = @transform_1, window_bounds = array<i64: 8, 20>}, {pipeline_mode = #tpu.pipeline_mode<synchronous>, transform_indices = @transform_2, window_bounds = array<i64: 784, 400>}, {pipeline_mode = #tpu.pipeline_mode<synchronous>, transform_indices = @transform_3, window_bounds = array<i64: 1, 400>}, {pipeline_mode = #tpu.pipeline_mode<synchronous>, transform_indices = @transform_4, window_bounds = array<i64: 400, 128>}, {pipeline_mode = #tpu.pipeline_mode<synchronous>, transform_indices = @transform_5, window_bounds = array<i64: 1, 128>}, {pipeline_mode = #tpu.pipeline_mode<synchronous>, transform_indices = @transform_6, window_bounds = array<i64: 20, 400>}, {pipeline_mode = #tpu.pipeline_mode<synchronous>, transform_indices = @transform_7, window_bounds = array<i64: 1, 400>}, {pipeline_mode = #tpu.pipeline_mode<synchronous>, transform_indices = @transform_8, window_bounds = array<i64: 400, 784>}, {pipeline_mode = #tpu.pipeline_mode<synchronous>, transform_indices = @transform_9, window_bounds = array<i64: 1, 784>}, {transform_indices = @transform_10, window_bounds = array<i64: 8, 784>}, {transform_indices = @transform_11, window_bounds = array<i64: 8, 128>}]} {
    %c0 = arith.constant 0 : index
    %c0_0 = arith.constant 0 : index
    %0 = vector.load %arg1[%c0, %c0_0] : memref<8x784xf32, #tpu.memory_space<vmem>>, vector<8x784xf32>
    %1 = arith.truncf %0 : vector<8x784xf32> to vector<8x784xbf16>
    %c0_1 = arith.constant 0 : index
    %c0_2 = arith.constant 0 : index
    %2 = vector.load %arg3[%c0_1, %c0_2] : memref<784x400xbf16, #tpu.memory_space<vmem>>, vector<784x400xbf16>
    %cst = arith.constant dense<0.000000e+00> : vector<8x400xf32>
    %3 = tpu.matmul %1, %2, %cst {dimension_numbers = #tpu.dot_dimension_numbers<[1], [0], [0], [1], [0, 0, 1, 1], [], []>} : vector<8x784xbf16>, vector<784x400xbf16>, vector<8x400xf32> -> vector<8x400xf32>
    %c0_3 = arith.constant 0 : index
    %c0_4 = arith.constant 0 : index
    %4 = vector.load %arg4[%c0_3, %c0_4] : memref<1x400xf32, #tpu.memory_space<vmem>>, vector<1x400xf32>
    %5 = vector.broadcast %4 : vector<1x400xf32> to vector<8x400xf32>
    %6 = arith.addf %3, %5 : vector<8x400xf32>
    %cst_5 = arith.constant 0.000000e+00 : f32
    %7 = vector.broadcast %cst_5 : f32 to vector<8x400xf32>
    %8 = arith.maximumf %6, %7 : vector<8x400xf32>
    %9 = arith.truncf %8 : vector<8x400xf32> to vector<8x400xbf16>
    %c0_6 = arith.constant 0 : index
    %c0_7 = arith.constant 0 : index
    %10 = vector.load %arg5[%c0_6, %c0_7] : memref<400x128xbf16, #tpu.memory_space<vmem>>, vector<400x128xbf16>
    %cst_8 = arith.constant dense<0.000000e+00> : vector<8x128xf32>
    %11 = tpu.matmul %9, %10, %cst_8 {dimension_numbers = #tpu.dot_dimension_numbers<[1], [0], [0], [1], [0, 0, 1, 1], [], []>} : vector<8x400xbf16>, vector<400x128xbf16>, vector<8x128xf32> -> vector<8x128xf32>
    %c0_9 = arith.constant 0 : index
    %c0_10 = arith.constant 0 : index
    %12 = vector.load %arg6[%c0_9, %c0_10] : memref<1x128xf32, #tpu.memory_space<vmem>>, vector<1x128xf32>
    %13 = vector.broadcast %12 : vector<1x128xf32> to vector<8x128xf32>
    %14 = arith.addf %11, %13 : vector<8x128xf32>
    %c0_11 = arith.constant 0 : index
    %c0_12 = arith.constant 0 : index
    %15 = vector.load %arg12[%c0_11, %c0_12] : memref<8x128xf32, #tpu.memory_space<vmem>>, vector<8x128xf32>
    tpu.vector_store %arg12[%c0_11, %c0_12], %14 {strides = array<i32>} : memref<8x128xf32, #tpu.memory_space<vmem>>, vector<8x128xf32>,
    %c64_i32 = arith.constant 64 : i32
    %16 = tpu.dynamic_rotate %14 by %c64_i32 dim 1 : vector<8x128xf32>, i32 -> vector<8x128xf32>
    %17 = vector.extract_strided_slice %16 {offsets = [0, 0], sizes = [8, 20], strides = [1, 1]} : vector<8x128xf32> to vector<8x20xf32>
    %18 = vector.extract_strided_slice %14 {offsets = [0, 0], sizes = [8, 20], strides = [1, 1]} : vector<8x128xf32> to vector<8x20xf32>
    %cst_13 = arith.constant 5.000000e-01 : f32
    %19 = vector.broadcast %cst_13 : f32 to vector<8x20xf32>
    %20 = arith.mulf %19, %17 : vector<8x20xf32>
    %21 = math.exp %20 : vector<8x20xf32>
    %c0_14 = arith.constant 0 : index
    %c0_15 = arith.constant 0 : index
    %22 = vector.load %arg2[%c0_14, %c0_15] : memref<8x20xf32, #tpu.memory_space<vmem>>, vector<8x20xf32>
    %23 = arith.mulf %22, %21 : vector<8x20xf32>
    %24 = arith.addf %23, %18 : vector<8x20xf32>
    %25 = arith.truncf %24 : vector<8x20xf32> to vector<8x20xbf16>
    %c0_16 = arith.constant 0 : index
    %c0_17 = arith.constant 0 : index
    %26 = vector.load %arg7[%c0_16, %c0_17] : memref<20x400xbf16, #tpu.memory_space<vmem>>, vector<20x400xbf16>
    %cst_18 = arith.constant dense<0.000000e+00> : vector<8x400xf32>
    %27 = tpu.matmul %25, %26, %cst_18 {dimension_numbers = #tpu.dot_dimension_numbers<[1], [0], [0], [1], [0, 0, 1, 1], [], []>} : vector<8x20xbf16>, vector<20x400xbf16>, vector<8x400xf32> -> vector<8x400xf32>
    %c0_19 = arith.constant 0 : index
    %c0_20 = arith.constant 0 : index
    %28 = vector.load %arg8[%c0_19, %c0_20] : memref<1x400xf32, #tpu.memory_space<vmem>>, vector<1x400xf32>
    %29 = vector.broadcast %28 : vector<1x400xf32> to vector<8x400xf32>
    %30 = arith.addf %27, %29 : vector<8x400xf32>
    %cst_21 = arith.constant 0.000000e+00 : f32
    %31 = vector.broadcast %cst_21 : f32 to vector<8x400xf32>
    %32 = arith.maximumf %30, %31 : vector<8x400xf32>
    %33 = arith.truncf %32 : vector<8x400xf32> to vector<8x400xbf16>
    %c0_22 = arith.constant 0 : index
    %c0_23 = arith.constant 0 : index
    %34 = vector.load %arg9[%c0_22, %c0_23] : memref<400x784xbf16, #tpu.memory_space<vmem>>, vector<400x784xbf16>
    %cst_24 = arith.constant dense<0.000000e+00> : vector<8x784xf32>
    %35 = tpu.matmul %33, %34, %cst_24 {dimension_numbers = #tpu.dot_dimension_numbers<[1], [0], [0], [1], [0, 0, 1, 1], [], []>} : vector<8x400xbf16>, vector<400x784xbf16>, vector<8x784xf32> -> vector<8x784xf32>
    %c0_25 = arith.constant 0 : index
    %c0_26 = arith.constant 0 : index
    %36 = vector.load %arg10[%c0_25, %c0_26] : memref<1x784xf32, #tpu.memory_space<vmem>>, vector<1x784xf32>
    %37 = vector.broadcast %36 : vector<1x784xf32> to vector<8x784xf32>
    %38 = arith.addf %35, %37 : vector<8x784xf32>
    %cst_27 = arith.constant 5.000000e-01 : f32
    %39 = vector.broadcast %cst_27 : f32 to vector<8x784xf32>
    %40 = arith.mulf %39, %38 : vector<8x784xf32>
    %41 = math.tanh %40 : vector<8x784xf32>
    %cst_28 = arith.constant 5.000000e-01 : f32
    %42 = vector.broadcast %cst_28 : f32 to vector<8x784xf32>
    %43 = arith.mulf %42, %41 : vector<8x784xf32>
    %cst_29 = arith.constant 5.000000e-01 : f32
    %44 = vector.broadcast %cst_29 : f32 to vector<8x784xf32>
    %45 = arith.addf %43, %44 : vector<8x784xf32>
    %c0_30 = arith.constant 0 : index
    %c0_31 = arith.constant 0 : index
    %46 = vector.load %arg11[%c0_30, %c0_31] : memref<8x784xf32, #tpu.memory_space<vmem>>, vector<8x784xf32>
    tpu.vector_store %arg11[%c0_30, %c0_31], %45 {strides = array<i32>} : memref<8x784xf32, #tpu.memory_space<vmem>>, vector<8x784xf32>,
    return
  }
  func.func @transform_0(%arg0: i32) -> (i32, i32) {
    %c0_i32 = arith.constant 0 : i32
    %c0_i32_0 = arith.constant 0 : i32
    return %arg0, %c0_i32 : i32, i32
  }
  func.func @transform_1(%arg0: i32) -> (i32, i32) {
    %c0_i32 = arith.constant 0 : i32
    %c0_i32_0 = arith.constant 0 : i32
    return %arg0, %c0_i32 : i32, i32
  }
  func.func @transform_2(%arg0: i32) -> (i32, i32) {
    %c0_i32 = arith.constant 0 : i32
    %c0_i32_0 = arith.constant 0 : i32
    %c0_i32_1 = arith.constant 0 : i32
    return %c0_i32, %c0_i32_0 : i32, i32
  }
  func.func @transform_3(%arg0: i32) -> (i32, i32) {
    %c0_i32 = arith.constant 0 : i32
    %c0_i32_0 = arith.constant 0 : i32
    %c0_i32_1 = arith.constant 0 : i32
    return %c0_i32, %c0_i32_0 : i32, i32
  }
  func.func @transform_4(%arg0: i32) -> (i32, i32) {
    %c0_i32 = arith.constant 0 : i32
    %c0_i32_0 = arith.constant 0 : i32
    %c0_i32_1 = arith.constant 0 : i32
    return %c0_i32, %c0_i32_0 : i32, i32
  }
  func.func @transform_5(%arg0: i32) -> (i32, i32) {
    %c0_i32 = arith.constant 0 : i32
    %c0_i32_0 = arith.constant 0 : i32
    %c0_i32_1 = arith.constant 0 : i32
    return %c0_i32, %c0_i32_0 : i32, i32
  }
  func.func @transform_6(%arg0: i32) -> (i32, i32) {
    %c0_i32 = arith.constant 0 : i32
    %c0_i32_0 = arith.constant 0 : i32
    %c0_i32_1 = arith.constant 0 : i32
    return %c0_i32, %c0_i32_0 : i32, i32
  }
  func.func @transform_7(%arg0: i32) -> (i32, i32) {
    %c0_i32 = arith.constant 0 : i32
    %c0_i32_0 = arith.constant 0 : i32
    %c0_i32_1 = arith.constant 0 : i32
    return %c0_i32, %c0_i32_0 : i32, i32
  }
  func.func @transform_8(%arg0: i32) -> (i32, i32) {
    %c0_i32 = arith.constant 0 : i32
    %c0_i32_0 = arith.constant 0 : i32
    %c0_i32_1 = arith.constant 0 : i32
    return %c0_i32, %c0_i32_0 : i32, i32
  }
  func.func @transform_9(%arg0: i32) -> (i32, i32) {
    %c0_i32 = arith.constant 0 : i32
    %c0_i32_0 = arith.constant 0 : i32
    %c0_i32_1 = arith.constant 0 : i32
    return %c0_i32, %c0_i32_0 : i32, i32
  }
  func.func @transform_10(%arg0: i32) -> (i32, i32) {
    %c0_i32 = arith.constant 0 : i32
    %c0_i32_0 = arith.constant 0 : i32
    return %arg0, %c0_i32 : i32, i32
  }
  func.func @transform_11(%arg0: i32) -> (i32, i32) {
    %c0_i32 = arith.constant 0 : i32
    %c0_i32_0 = arith.constant 0 : i32
    return %arg0, %c0_i32 : i32, i32
  }
}

</mosaic_0001>

<llo_original>
// kernel: tpu_custom_call.1
$region0: #{tpu_custom_call.1}
  #allocation0 [shape = 'u32[]', space=smem, size = 0x4, offset = 0x4, fixed_abs, tag = 'smem constant byte address 0x4 - core index']
  #allocation1 [shape = 'u32[72,128]{1,0:T(1,128)}', space=vmem, size = 0x9000, scoped, tag = 'internal scratch']
  %s0 = inlined_call_operand.vmem [shape: f32[24,784], index: 0, kind: input, shape index: {}]
  %s1 = inlined_call_operand.vmem [shape: f32[24,20], index: 1, kind: input, shape index: {}]
  %s2 = inlined_call_operand.vmem [shape: bf16[784,400], index: 2, kind: input, shape index: {}]
  %s3 = inlined_call_operand.vmem [shape: f32[1,400], index: 3, kind: input, shape index: {}]
  %s4 = inlined_call_operand.vmem [shape: bf16[400,128], index: 4, kind: input, shape index: {}]
  %s5 = inlined_call_operand.vmem [shape: f32[1,128], index: 5, kind: input, shape index: {}]
  %s6 = inlined_call_operand.vmem [shape: bf16[20,400], index: 6, kind: input, shape index: {}]
  %s7 = inlined_call_operand.vmem [shape: f32[1,400], index: 7, kind: input, shape index: {}]
  %s8 = inlined_call_operand.vmem [shape: bf16[400,784], index: 8, kind: input, shape index: {}]
  %s9 = inlined_call_operand.vmem [shape: f32[1,784], index: 9, kind: input, shape index: {}]
  %s10 = inlined_call_operand.hbm [shape: f32[24,784], index: 10, kind: output, shape index: {0}]
  %s11 = inlined_call_operand.hbm [shape: f32[24,128], index: 11, kind: output, shape index: {1}]
  %12 = xla_tuple %s10, %s11
  %s13 = sld [smem:[#allocation0]]
  $region81: #{tpu_custom_call.1} parent=0
    _
  %s15 = ssub.s32 1, %s13
  %s16 = scalar_select 0, %s15, %s13
  $region1: #{tpu_custom_call.1} parent=0
    #allocation2 [shape = 'u8[57344]{0}', space=vmem, size = 0xe000, scoped, tag = 'output window, operand 0']
    #allocation3 [shape = 's32[2]{0}', space=sflag, size = 0x8, scoped, tag = 'scoped memory for tpu_custom_call.1']
    #allocation4 [shape = 'u8[8192]{0}', space=vmem, size = 0x2000, scoped, tag = 'output window, operand 1']
    #allocation5 [shape = 's32[2]{0}', space=sflag, size = 0x8, scoped, tag = 'scoped memory for tpu_custom_call.1']
    %17 = vsyncpa [#allocation3], 0
    %s18 = scalar_lea.sflag [#allocation3], 1
    %19 = vsyncpa %s18, 0
    %20 = vsyncpa [#allocation5], 0
    %s21 = scalar_lea.sflag [#allocation5], 1
    %22 = vsyncpa %s21, 0
    loop: start=0, step=1, limit=5
    $region2: #{tpu_custom_call.1} parent=1 // loop_pre_header
      _
    $region3: #{tpu_custom_call.1} parent=1 // loop_header
      %s24 = sphi 0, %s28
      %p25 = scmp.ge.s32.totalorder %s24, 5
      %s34 = sphi 0, %s36
      %s37 = sphi 0, %s34
      %s38 = sphi 0, %s37
      %s54 = sphi 0, %s38
      %s60 = sphi 0, %s62
      %s63 = sphi 0, %s60
      %s64 = sphi 0, %s63
      %s80 = sphi 0, %s64
      %s84 = sphi 0, %s84
      %s86 = sphi 0, %s84
      %s87 = sphi 0, %s86
      %s101 = sphi 0, %s87
      %s105 = sphi 0, %s105
      %s107 = sphi 0, %s105
      %s108 = sphi 0, %s107
      %s122 = sphi 0, %s108
      %s126 = sphi 0, %s126
      %s128 = sphi 0, %s126
      %s129 = sphi 0, %s128
      %s143 = sphi 0, %s129
      %s147 = sphi 0, %s147
      %s149 = sphi 0, %s147
      %s150 = sphi 0, %s149
      %s164 = sphi 0, %s150
      %s168 = sphi 0, %s168
      %s170 = sphi 0, %s168
      %s171 = sphi 0, %s170
      %s185 = sphi 0, %s171
      %s189 = sphi 0, %s189
      %s191 = sphi 0, %s189
      %s192 = sphi 0, %s191
      %s206 = sphi 0, %s192
      %s210 = sphi 0, %s210
      %s212 = sphi 0, %s210
      %s213 = sphi 0, %s212
      %s227 = sphi 0, %s213
      %s231 = sphi 0, %s231
      %s233 = sphi 0, %s231
      %s234 = sphi 0, %s233
      %s248 = sphi 0, %s234
      %s254 = sphi 0, %s256
      %s257 = sphi 0, %s254
      %s258 = sphi 0, %s257
      %s274 = sphi 0, %s258
      %s280 = sphi 0, %s282
      %s283 = sphi 0, %s280
      %s284 = sphi 0, %s283
      %s300 = sphi 0, %s284
    $region4: #{tpu_custom_call.1} parent=1 // loop_header_branch
      %27 = sbr.rel (%p25) target = $region8
    $region5: #{tpu_custom_call.1} parent=1 // loop_body
      %s29 = ssub.s32 %s24, 1
      %s30 = ssub.s32 %s24, 2
      %s31 = sadd.s32 %s24, 1
      %s32 = ssub.s32 %s24, %s31
      %p33 = scmp.eq.s32.totalorder %s32, 0
      %s35 = sadd.s32 %s34, 1
      %s36 = scalar_select %p33, %s34, %s35
      %p39 = pneg %p33
      %p40 = scmp.eq.s32.totalorder %s24, 2
      %p41 = por %p39, %p40
      %p42 = scmp.ne.s32.totalorder %s34, %s37
      %p43 = scmp.eq.s32.totalorder %s24, 0
      %p44 = por %p42, %p43
      %p45 = scmp.ne.s32.totalorder %s34, %s37
      %p46 = scmp.eq.s32.totalorder %s29, 2
      %p47 = por %p45, %p46
      %p48 = scmp.ne.s32.totalorder %s37, %s38
      %p49 = scmp.eq.s32.totalorder %s29, 0
      %p50 = por %p48, %p49
      %p51 = scmp.ne.s32.totalorder %s37, %s38
      %p52 = scmp.eq.s32.totalorder %s30, 2
      %p53 = por %p51, %p52
      %p55 = scmp.ne.s32.totalorder %s38, %s54
      %p56 = scmp.eq.s32.totalorder %s30, 0
      %p57 = por %p55, %p56
      %s58 = ssub.s32 %s24, %s31
      %p59 = scmp.eq.s32.totalorder %s58, 0
      %s61 = sadd.s32 %s60, 1
      %s62 = scalar_select %p59, %s60, %s61
      %p65 = pneg %p59
      %p66 = scmp.eq.s32.totalorder %s24, 2
      %p67 = por %p65, %p66
      %p68 = scmp.ne.s32.totalorder %s60, %s63
      %p69 = scmp.eq.s32.totalorder %s24, 0
      %p70 = por %p68, %p69
      %p71 = scmp.ne.s32.totalorder %s60, %s63
      %p72 = scmp.eq.s32.totalorder %s29, 2
      %p73 = por %p71, %p72
      %p74 = scmp.ne.s32.totalorder %s63, %s64
      %p75 = scmp.eq.s32.totalorder %s29, 0
      %p76 = por %p74, %p75
      %p77 = scmp.ne.s32.totalorder %s63, %s64
      %p78 = scmp.eq.s32.totalorder %s30, 2
      %p79 = por %p77, %p78
      %p81 = scmp.ne.s32.totalorder %s64, %s80
      %p82 = scmp.eq.s32.totalorder %s30, 0
      %p83 = por %p81, %p82
      %s85 = sadd.s32 %s84, 1
      %p88 = scmp.eq.s32.totalorder %s24, 2
      %p89 = scmp.ne.s32.totalorder %s84, %s86
      %p90 = scmp.eq.s32.totalorder %s24, 0
      %p91 = por %p89, %p90
      %p92 = scmp.ne.s32.totalorder %s84, %s86
      %p93 = scmp.eq.s32.totalorder %s29, 2
      %p94 = por %p92, %p93
      %p95 = scmp.ne.s32.totalorder %s86, %s87
      %p96 = scmp.eq.s32.totalorder %s29, 0
      %p97 = por %p95, %p96
      %p98 = scmp.ne.s32.totalorder %s86, %s87
      %p99 = scmp.eq.s32.totalorder %s30, 2
      %p100 = por %p98, %p99
      %p102 = scmp.ne.s32.totalorder %s87, %s101
      %p103 = scmp.eq.s32.totalorder %s30, 0
      %p104 = por %p102, %p103
      %s106 = sadd.s32 %s105, 1
      %p109 = scmp.eq.s32.totalorder %s24, 2
      %p110 = scmp.ne.s32.totalorder %s105, %s107
      %p111 = scmp.eq.s32.totalorder %s24, 0
      %p112 = por %p110, %p111
      %p113 = scmp.ne.s32.totalorder %s105, %s107
      %p114 = scmp.eq.s32.totalorder %s29, 2
      %p115 = por %p113, %p114
      %p116 = scmp.ne.s32.totalorder %s107, %s108
      %p117 = scmp.eq.s32.totalorder %s29, 0
      %p118 = por %p116, %p117
      %p119 = scmp.ne.s32.totalorder %s107, %s108
      %p120 = scmp.eq.s32.totalorder %s30, 2
      %p121 = por %p119, %p120
      %p123 = scmp.ne.s32.totalorder %s108, %s122
      %p124 = scmp.eq.s32.totalorder %s30, 0
      %p125 = por %p123, %p124
      %s127 = sadd.s32 %s126, 1
      %p130 = scmp.eq.s32.totalorder %s24, 2
      %p131 = scmp.ne.s32.totalorder %s126, %s128
      %p132 = scmp.eq.s32.totalorder %s24, 0
      %p133 = por %p131, %p132
      %p134 = scmp.ne.s32.totalorder %s126, %s128
      %p135 = scmp.eq.s32.totalorder %s29, 2
      %p136 = por %p134, %p135
      %p137 = scmp.ne.s32.totalorder %s128, %s129
      %p138 = scmp.eq.s32.totalorder %s29, 0
      %p139 = por %p137, %p138
      %p140 = scmp.ne.s32.totalorder %s128, %s129
      %p141 = scmp.eq.s32.totalorder %s30, 2
      %p142 = por %p140, %p141
      %p144 = scmp.ne.s32.totalorder %s129, %s143
      %p145 = scmp.eq.s32.totalorder %s30, 0
      %p146 = por %p144, %p145
      %s148 = sadd.s32 %s147, 1
      %p151 = scmp.eq.s32.totalorder %s24, 2
      %p152 = scmp.ne.s32.totalorder %s147, %s149
      %p153 = scmp.eq.s32.totalorder %s24, 0
      %p154 = por %p152, %p153
      %p155 = scmp.ne.s32.totalorder %s147, %s149
      %p156 = scmp.eq.s32.totalorder %s29, 2
      %p157 = por %p155, %p156
      %p158 = scmp.ne.s32.totalorder %s149, %s150
      %p159 = scmp.eq.s32.totalorder %s29, 0
      %p160 = por %p158, %p159
      %p161 = scmp.ne.s32.totalorder %s149, %s150
      %p162 = scmp.eq.s32.totalorder %s30, 2
      %p163 = por %p161, %p162
      %p165 = scmp.ne.s32.totalorder %s150, %s164
      %p166 = scmp.eq.s32.totalorder %s30, 0
      %p167 = por %p165, %p166
      %s169 = sadd.s32 %s168, 1
      %p172 = scmp.eq.s32.totalorder %s24, 2
      %p173 = scmp.ne.s32.totalorder %s168, %s170
      %p174 = scmp.eq.s32.totalorder %s24, 0
      %p175 = por %p173, %p174
      %p176 = scmp.ne.s32.totalorder %s168, %s170
      %p177 = scmp.eq.s32.totalorder %s29, 2
      %p178 = por %p176, %p177
      %p179 = scmp.ne.s32.totalorder %s170, %s171
      %p180 = scmp.eq.s32.totalorder %s29, 0
      %p181 = por %p179, %p180
      %p182 = scmp.ne.s32.totalorder %s170, %s171
      %p183 = scmp.eq.s32.totalorder %s30, 2
      %p184 = por %p182, %p183
      %p186 = scmp.ne.s32.totalorder %s171, %s185
      %p187 = scmp.eq.s32.totalorder %s30, 0
      %p188 = por %p186, %p187
      %s190 = sadd.s32 %s189, 1
      %p193 = scmp.eq.s32.totalorder %s24, 2
      %p194 = scmp.ne.s32.totalorder %s189, %s191
      %p195 = scmp.eq.s32.totalorder %s24, 0
      %p196 = por %p194, %p195
      %p197 = scmp.ne.s32.totalorder %s189, %s191
      %p198 = scmp.eq.s32.totalorder %s29, 2
      %p199 = por %p197, %p198
      %p200 = scmp.ne.s32.totalorder %s191, %s192
      %p201 = scmp.eq.s32.totalorder %s29, 0
      %p202 = por %p200, %p201
      %p203 = scmp.ne.s32.totalorder %s191, %s192
      %p204 = scmp.eq.s32.totalorder %s30, 2
      %p205 = por %p203, %p204
      %p207 = scmp.ne.s32.totalorder %s192, %s206
      %p208 = scmp.eq.s32.totalorder %s30, 0
      %p209 = por %p207, %p208
      %s211 = sadd.s32 %s210, 1
      %p214 = scmp.eq.s32.totalorder %s24, 2
      %p215 = scmp.ne.s32.totalorder %s210, %s212
      %p216 = scmp.eq.s32.totalorder %s24, 0
      %p217 = por %p215, %p216
      %p218 = scmp.ne.s32.totalorder %s210, %s212
      %p219 = scmp.eq.s32.totalorder %s29, 2
      %p220 = por %p218, %p219
      %p221 = scmp.ne.s32.totalorder %s212, %s213
      %p222 = scmp.eq.s32.totalorder %s29, 0
      %p223 = por %p221, %p222
      %p224 = scmp.ne.s32.totalorder %s212, %s213
      %p225 = scmp.eq.s32.totalorder %s30, 2
      %p226 = por %p224, %p225
      %p228 = scmp.ne.s32.totalorder %s213, %s227
      %p229 = scmp.eq.s32.totalorder %s30, 0
      %p230 = por %p228, %p229
      %s232 = sadd.s32 %s231, 1
      %p235 = scmp.eq.s32.totalorder %s24, 2
      %p236 = scmp.ne.s32.totalorder %s231, %s233
      %p237 = scmp.eq.s32.totalorder %s24, 0
      %p238 = por %p236, %p237
      %p239 = scmp.ne.s32.totalorder %s231, %s233
      %p240 = scmp.eq.s32.totalorder %s29, 2
      %p241 = por %p239, %p240
      %p242 = scmp.ne.s32.totalorder %s233, %s234
      %p243 = scmp.eq.s32.totalorder %s29, 0
      %p244 = por %p242, %p243
      %p245 = scmp.ne.s32.totalorder %s233, %s234
      %p246 = scmp.eq.s32.totalorder %s30, 2
      %p247 = por %p245, %p246
      %p249 = scmp.ne.s32.totalorder %s234, %s248
      %p250 = scmp.eq.s32.totalorder %s30, 0
      %p251 = por %p249, %p250
      %s252 = ssub.s32 %s24, %s31
      %p253 = scmp.eq.s32.totalorder %s252, 0
      %s255 = sadd.s32 %s254, 1
      %s256 = scalar_select %p253, %s254, %s255
      %p259 = pneg %p253
      %p260 = scmp.eq.s32.totalorder %s24, 2
      %p261 = por %p259, %p260
      %p262 = scmp.ne.s32.totalorder %s254, %s257
      %p263 = scmp.eq.s32.totalorder %s24, 0
      %p264 = por %p262, %p263
      %p265 = scmp.ne.s32.totalorder %s254, %s257
      %p266 = scmp.eq.s32.totalorder %s29, 2
      %p267 = por %p265, %p266
      %p268 = scmp.ne.s32.totalorder %s257, %s258
      %p269 = scmp.eq.s32.totalorder %s29, 0
      %p270 = por %p268, %p269
      %p271 = scmp.ne.s32.totalorder %s257, %s258
      %p272 = scmp.eq.s32.totalorder %s30, 2
      %p273 = por %p271, %p272
      %p275 = scmp.ne.s32.totalorder %s258, %s274
      %p276 = scmp.eq.s32.totalorder %s30, 0
      %p277 = por %p275, %p276
      %s278 = ssub.s32 %s24, %s31
      %p279 = scmp.eq.s32.totalorder %s278, 0
      %s281 = sadd.s32 %s280, 1
      %s282 = scalar_select %p279, %s280, %s281
      %p285 = pneg %p279
      %p286 = scmp.eq.s32.totalorder %s24, 2
      %p287 = por %p285, %p286
      %p288 = scmp.ne.s32.totalorder %s280, %s283
      %p289 = scmp.eq.s32.totalorder %s24, 0
      %p290 = por %p288, %p289
      %p291 = scmp.ne.s32.totalorder %s280, %s283
      %p292 = scmp.eq.s32.totalorder %s29, 2
      %p293 = por %p291, %p292
      %p294 = scmp.ne.s32.totalorder %s283, %s284
      %p295 = scmp.eq.s32.totalorder %s29, 0
      %p296 = por %p294, %p295
      %p297 = scmp.ne.s32.totalorder %s283, %s284
      %p298 = scmp.eq.s32.totalorder %s30, 2
      %p299 = por %p297, %p298
      %p301 = scmp.ne.s32.totalorder %s284, %s300
      %p302 = scmp.eq.s32.totalorder %s30, 0
      %p303 = por %p301, %p302
      %p304 = scmp.le.s32.totalorder 1, %s24
      %p305 = scmp.lt.s32.totalorder %s24, 4
      %p306 = pnand %p304, %p305
      %p307 = pneg %p306
      // Predicated region
      $region9: #{tpu_custom_call.1} parent=5 // pred_check
        _
      $region10: #{tpu_custom_call.1} parent=5 // pred_check_branch
        %309 = sbr.rel (%p306) target = $region12
      $region11: #{tpu_custom_call.1} parent=5 // pred_region
        %s310 = ssub.s32 %s24, 1
        // Predicated region
        $region13: #{tpu_custom_call.1} parent=11 // pred_check
          %p311 = pneg %p97
        $region14: #{tpu_custom_call.1} parent=11 // pred_check_branch
          %313 = sbr.rel (%p311) target = $region16
        $region15: #{tpu_custom_call.1} parent=11 // pred_region
          _
        $region16: #{tpu_custom_call.1} parent=11 // pred_fallthru
          _
        // Predicated region
        $region17: #{tpu_custom_call.1} parent=11 // pred_check
          %p314 = pneg %p118
        $region18: #{tpu_custom_call.1} parent=11 // pred_check_branch
          %316 = sbr.rel (%p314) target = $region20
        $region19: #{tpu_custom_call.1} parent=11 // pred_region
          _
        $region20: #{tpu_custom_call.1} parent=11 // pred_fallthru
          _
        // Predicated region
        $region21: #{tpu_custom_call.1} parent=11 // pred_check
          %p317 = pneg %p139
        $region22: #{tpu_custom_call.1} parent=11 // pred_check_branch
          %319 = sbr.rel (%p317) target = $region24
        $region23: #{tpu_custom_call.1} parent=11 // pred_region
          _
        $region24: #{tpu_custom_call.1} parent=11 // pred_fallthru
          _
        // Predicated region
        $region25: #{tpu_custom_call.1} parent=11 // pred_check
          %p320 = pneg %p160
        $region26: #{tpu_custom_call.1} parent=11 // pred_check_branch
          %322 = sbr.rel (%p320) target = $region28
        $region27: #{tpu_custom_call.1} parent=11 // pred_region
          _
        $region28: #{tpu_custom_call.1} parent=11 // pred_fallthru
          _
        // Predicated region
        $region29: #{tpu_custom_call.1} parent=11 // pred_check
          %p323 = pneg %p181
        $region30: #{tpu_custom_call.1} parent=11 // pred_check_branch
          %325 = sbr.rel (%p323) target = $region32
        $region31: #{tpu_custom_call.1} parent=11 // pred_region
          _
        $region32: #{tpu_custom_call.1} parent=11 // pred_fallthru
          _
        // Predicated region
        $region33: #{tpu_custom_call.1} parent=11 // pred_check
          %p326 = pneg %p202
        $region34: #{tpu_custom_call.1} parent=11 // pred_check_branch
          %328 = sbr.rel (%p326) target = $region36
        $region35: #{tpu_custom_call.1} parent=11 // pred_region
          _
        $region36: #{tpu_custom_call.1} parent=11 // pred_fallthru
          _
        // Predicated region
        $region37: #{tpu_custom_call.1} parent=11 // pred_check
          %p329 = pneg %p223
        $region38: #{tpu_custom_call.1} parent=11 // pred_check_branch
          %331 = sbr.rel (%p329) target = $region40
        $region39: #{tpu_custom_call.1} parent=11 // pred_region
          _
        $region40: #{tpu_custom_call.1} parent=11 // pred_fallthru
          _
        // Predicated region
        $region41: #{tpu_custom_call.1} parent=11 // pred_check
          %p332 = pneg %p244
        $region42: #{tpu_custom_call.1} parent=11 // pred_check_branch
          %334 = sbr.rel (%p332) target = $region44
        $region43: #{tpu_custom_call.1} parent=11 // pred_region
          _
        $region44: #{tpu_custom_call.1} parent=11 // pred_fallthru
          _
      $region12: #{tpu_custom_call.1} parent=5 // pred_fallthru
        _
      %p335 = scmp.lt.s32.totalorder %s24, 3
      // Predicated region
      $region45: #{tpu_custom_call.1} parent=5 // pred_check
        %p336 = pneg %p335
      $region46: #{tpu_custom_call.1} parent=5 // pred_check_branch
        %338 = sbr.rel (%p336) target = $region48
      $region47: #{tpu_custom_call.1} parent=5 // pred_region
        // Predicated region
        $region49: #{tpu_custom_call.1} parent=47 // pred_check
          %p339 = pneg %p44
        $region50: #{tpu_custom_call.1} parent=47 // pred_check_branch
          %341 = sbr.rel (%p339) target = $region52
        $region51: #{tpu_custom_call.1} parent=47 // pred_region
          %p342 = scmp.lt.s32.totalorder %s24, 2
          %s343 = scalar_select %p342, %s24, 2
          %s344 = smul.addr %s343, 7
          %s345 = smul.addr %s344, 8
          %s346 = scalar_lea.vmem %s0, %s345
        $region52: #{tpu_custom_call.1} parent=47 // pred_fallthru
          _
        // Predicated region
        $region53: #{tpu_custom_call.1} parent=47 // pred_check
          %p347 = pneg %p70
        $region54: #{tpu_custom_call.1} parent=47 // pred_check_branch
          %349 = sbr.rel (%p347) target = $region56
        $region55: #{tpu_custom_call.1} parent=47 // pred_region
          %p350 = scmp.lt.s32.totalorder %s24, 2
          %s351 = scalar_select %p350, %s24, 2
          %s352 = smul.addr %s351, 8
          %s353 = scalar_lea.vmem %s1, %s352
        $region56: #{tpu_custom_call.1} parent=47 // pred_fallthru
          _
      $region48: #{tpu_custom_call.1} parent=5 // pred_fallthru
        _
      %p354 = scmp.le.s32.totalorder 1, %s24
      %p355 = scmp.lt.s32.totalorder %s24, 4
      %p356 = pnand %p354, %p355
      %p357 = pneg %p356
      // Predicated region
      $region57: #{tpu_custom_call.1} parent=5 // pred_check
        _
      $region58: #{tpu_custom_call.1} parent=5 // pred_check_branch
        %359 = sbr.rel (%p356) target = $region60
      $region59: #{tpu_custom_call.1} parent=5 // pred_region
        %s360 = ssub.s32 %s24, 1
        %p361 = scmp.lt.s32.totalorder %s29, 2
        %s362 = scalar_select %p361, %s29, 2
        %s363 = smul.addr %s362, 7
        %s364 = smul.addr %s363, 8
        %s365 = scalar_lea.vmem %s0, %s364
        %p366 = pneg %p50
        %p367 = pneg %p47
        %p368 = scmp.lt.s32.totalorder %s29, 2
        %s369 = scalar_select %p368, %s29, 2
        %s370 = smul.addr %s369, 8
        %s371 = scalar_lea.vmem %s1, %s370
        %p372 = pneg %p76
        %p373 = pneg %p73
        %p374 = pneg %p97
        %p375 = pneg %p94
        %p376 = pneg %p118
        %p377 = pneg %p115
        %p378 = pneg %p139
        %p379 = pneg %p136
        %p380 = pneg %p160
        %p381 = pneg %p157
        %p382 = pneg %p181
        %p383 = pneg %p178
        %p384 = pneg %p202
        %p385 = pneg %p199
        %p386 = pneg %p223
        %p387 = pneg %p220
        %p388 = pneg %p244
        %p389 = pneg %p241
        %p390 = pneg %p270
        %p391 = pneg %p267
        %s392 = sand.u32 %s257, 1
        %s393 = scalar_lea.sflag [#allocation3], %s392
        %s394 = sand.u32 %s257, 1
        %s395 = smul.addr %s394, 56
        %s396 = scalar_lea.vmem [#allocation2], %s395
        %p397 = pneg %p296
        %p398 = pneg %p293
        %s399 = sand.u32 %s283, 1
        %s400 = scalar_lea.sflag [#allocation5], %s399
        %s401 = sand.u32 %s283, 1
        %s402 = smul.addr %s401, 8
        %s403 = scalar_lea.vmem [#allocation4], %s402
        %p404 = scmp.lt.s32.totalorder %s29, 2
        %s405 = scalar_select %p404, %s29, 2
        %s406 = smul.addr %s405, 7
        %s407 = smul.addr %s406, 8
        %s408 = scalar_lea.vmem %s0, %s407
        %p409 = scmp.lt.s32.totalorder %s29, 2
        %s410 = scalar_select %p409, %s29, 2
        %s411 = smul.addr %s410, 8
        %s412 = scalar_lea.vmem %s1, %s411
        %v414 = vld [vmem:[%s408] sm:$0xff]
        %v415 = vld [vmem:[%s408 + $0x8] sm:$0xff]
        %v416 = vld [vmem:[%s408 + $0x10] sm:$0xff]
        %v417 = vld [vmem:[%s408 + $0x18] sm:$0xff]
        %v418 = vld [vmem:[%s408 + $0x20] sm:$0xff]
        %v419 = vld [vmem:[%s408 + $0x28] sm:$0xff]
        %v420 = vld [vmem:[%s408 + $0x30] sm:$0xff]
        %v421 = vpack.c.bf16 %v414, %v414
        %v422 = vpack.c.bf16 %v415, %v415
        %v423 = vpack.c.bf16 %v416, %v416
        %v424 = vpack.c.bf16 %v417, %v417
        %v425 = vpack.c.bf16 %v418, %v418
        %v426 = vpack.c.bf16 %v419, %v419
        %v427 = vpack.c.bf16 %v420, %v420
        %v428 = vld [vmem:[%s2] sm:$0xff]
        %v429 = vld [vmem:[%s2 + $0x8] sm:$0xff]
        %v430 = vld [vmem:[%s2 + $0x10] sm:$0xff]
        %v431 = vld [vmem:[%s2 + $0x18] sm:$0xff]
        %v432 = vld [vmem:[%s2 + $0x20] sm:$0xff]
        %v433 = vld [vmem:[%s2 + $0x28] sm:$0xff]
        %v434 = vld [vmem:[%s2 + $0x30] sm:$0xff]
        %v435 = vld [vmem:[%s2 + $0x38] sm:$0xff]
        %v436 = vld [vmem:[%s2 + $0x40] sm:$0xff]
        %v437 = vld [vmem:[%s2 + $0x48] sm:$0xff]
        %v438 = vld [vmem:[%s2 + $0x50] sm:$0xff]
        %v439 = vld [vmem:[%s2 + $0x58] sm:$0xff]
        %v440 = vld [vmem:[%s2 + $0x60] sm:$0xff]
        %v441 = vld [vmem:[%s2 + $0x68] sm:$0xff]
        %v442 = vld [vmem:[%s2 + $0x70] sm:$0xff]
        %v443 = vld [vmem:[%s2 + $0x78] sm:$0xff]
        %v444 = vld [vmem:[%s2 + $0x80] sm:$0xff]
        %v445 = vld [vmem:[%s2 + $0x88] sm:$0xff]
        %v446 = vld [vmem:[%s2 + $0x90] sm:$0xff]
        %v447 = vld [vmem:[%s2 + $0x98] sm:$0xff]
        %v448 = vld [vmem:[%s2 + $0xa0] sm:$0xff]
        %v449 = vld [vmem:[%s2 + $0xa8] sm:$0xff]
        %v450 = vld [vmem:[%s2 + $0xb0] sm:$0xff]
        %v451 = vld [vmem:[%s2 + $0xb8] sm:$0xff]
        %v452 = vld [vmem:[%s2 + $0xc0] sm:$0xff]
        %v453 = vld [vmem:[%s2 + $0xc8] sm:$0xff]
        %v454 = vld [vmem:[%s2 + $0xd0] sm:$0xff]
        %v455 = vld [vmem:[%s2 + $0xd8] sm:$0xff]
        %v456 = vld [vmem:[%s2 + $0xe0] sm:$0xff]
        %v457 = vld [vmem:[%s2 + $0xe8] sm:$0xff]
        %v458 = vld [vmem:[%s2 + $0xf0] sm:$0xff]
        %v459 = vld [vmem:[%s2 + $0xf8] sm:$0xff]
        %v460 = vld [vmem:[%s2 + $0x100] sm:$0xff]
        %v461 = vld [vmem:[%s2 + $0x108] sm:$0xff]
        %v462 = vld [vmem:[%s2 + $0x110] sm:$0xff]
        %v463 = vld [vmem:[%s2 + $0x118] sm:$0xff]
        %v464 = vld [vmem:[%s2 + $0x120] sm:$0xff]
        %v465 = vld [vmem:[%s2 + $0x128] sm:$0xff]
        %v466 = vld [vmem:[%s2 + $0x130] sm:$0xff]
        %v467 = vld [vmem:[%s2 + $0x138] sm:$0xff]
        %v468 = vld [vmem:[%s2 + $0x140] sm:$0xff]
        %v469 = vld [vmem:[%s2 + $0x148] sm:$0xff]
        %v470 = vld [vmem:[%s2 + $0x150] sm:$0xff]
        %v471 = vld [vmem:[%s2 + $0x158] sm:$0xff]
        %v472 = vld [vmem:[%s2 + $0x160] sm:$0xff]
        %v473 = vld [vmem:[%s2 + $0x168] sm:$0xff]
        %v474 = vld [vmem:[%s2 + $0x170] sm:$0xff]
        %v475 = vld [vmem:[%s2 + $0x178] sm:$0xff]
        %v476 = vld [vmem:[%s2 + $0x180] sm:$0xff]
        %v477 = vld [vmem:[%s2 + $0x188] sm:$0xff]
        %v478 = vld [vmem:[%s2 + $0x190] sm:$0xff]
        %v479 = vld [vmem:[%s2 + $0x198] sm:$0xff]
        %v480 = vld [vmem:[%s2 + $0x1a0] sm:$0xff]
        %v481 = vld [vmem:[%s2 + $0x1a8] sm:$0xff]
        %v482 = vld [vmem:[%s2 + $0x1b0] sm:$0xff]
        %v483 = vld [vmem:[%s2 + $0x1b8] sm:$0xff]
        %v484 = vld [vmem:[%s2 + $0x1c0] sm:$0xff]
        %v485 = vld [vmem:[%s2 + $0x1c8] sm:$0xff]
        %v486 = vld [vmem:[%s2 + $0x1d0] sm:$0xff]
        %v487 = vld [vmem:[%s2 + $0x1d8] sm:$0xff]
        %v488 = vld [vmem:[%s2 + $0x1e0] sm:$0xff]
        %v489 = vld [vmem:[%s2 + $0x1e8] sm:$0xff]
        %v490 = vld [vmem:[%s2 + $0x1f0] sm:$0xff]
        %v491 = vld [vmem:[%s2 + $0x1f8] sm:$0xff]
        %v492 = vld [vmem:[%s2 + $0x200] sm:$0xff]
        %v493 = vld [vmem:[%s2 + $0x208] sm:$0xff]
        %v494 = vld [vmem:[%s2 + $0x210] sm:$0xff]
        %v495 = vld [vmem:[%s2 + $0x218] sm:$0xff]
        %v496 = vld [vmem:[%s2 + $0x220] sm:$0xff]
        %v497 = vld [vmem:[%s2 + $0x228] sm:$0xff]
        %v498 = vld [vmem:[%s2 + $0x230] sm:$0xff]
        %v499 = vld [vmem:[%s2 + $0x238] sm:$0xff]
        %v500 = vld [vmem:[%s2 + $0x240] sm:$0xff]
        %v501 = vld [vmem:[%s2 + $0x248] sm:$0xff]
        %v502 = vld [vmem:[%s2 + $0x250] sm:$0xff]
        %v503 = vld [vmem:[%s2 + $0x258] sm:$0xff]
        %v504 = vld [vmem:[%s2 + $0x260] sm:$0xff]
        %v505 = vld [vmem:[%s2 + $0x268] sm:$0xff]
        %v506 = vld [vmem:[%s2 + $0x270] sm:$0xff]
        %v507 = vld [vmem:[%s2 + $0x278] sm:$0xff]
        %v508 = vld [vmem:[%s2 + $0x280] sm:$0xff]
        %v509 = vld [vmem:[%s2 + $0x288] sm:$0xff]
        %v510 = vld [vmem:[%s2 + $0x290] sm:$0xff]
        %v511 = vld [vmem:[%s2 + $0x298] sm:$0xff]
        %v512 = vld [vmem:[%s2 + $0x2a0] sm:$0xff]
        %v513 = vld [vmem:[%s2 + $0x2a8] sm:$0xff]
        %v514 = vld [vmem:[%s2 + $0x2b0] sm:$0xff]
        %v515 = vld [vmem:[%s2 + $0x2b8] sm:$0xff]
        %v516 = vld [vmem:[%s2 + $0x2c0] sm:$0xff]
        %v517 = vld [vmem:[%s2 + $0x2c8] sm:$0xff]
        %v518 = vld [vmem:[%s2 + $0x2d0] sm:$0xff]
        %v519 = vld [vmem:[%s2 + $0x2d8] sm:$0xff]
        %v520 = vld [vmem:[%s2 + $0x2e0] sm:$0xff]
        %v521 = vld [vmem:[%s2 + $0x2e8] sm:$0xff]
        %v522 = vld [vmem:[%s2 + $0x2f0] sm:$0xff]
        %v523 = vld [vmem:[%s2 + $0x2f8] sm:$0xff]
        %v524 = vld [vmem:[%s2 + $0x300] sm:$0xff]
        %v525 = vld [vmem:[%s2 + $0x308] sm:$0xff]
        %v526 = vld [vmem:[%s2 + $0x310] sm:$0xff]
        %v527 = vld [vmem:[%s2 + $0x318] sm:$0xff]
        %v528 = vld [vmem:[%s2 + $0x320] sm:$0xff]
        %v529 = vld [vmem:[%s2 + $0x328] sm:$0xff]
        %v530 = vld [vmem:[%s2 + $0x330] sm:$0xff]
        %v531 = vld [vmem:[%s2 + $0x338] sm:$0xff]
        %v532 = vld [vmem:[%s2 + $0x340] sm:$0xff]
        %v533 = vld [vmem:[%s2 + $0x348] sm:$0xff]
        %v534 = vld [vmem:[%s2 + $0x350] sm:$0xff]
        %v535 = vld [vmem:[%s2 + $0x358] sm:$0xff]
        %v536 = vld [vmem:[%s2 + $0x360] sm:$0xff]
        %v537 = vld [vmem:[%s2 + $0x368] sm:$0xff]
        %v538 = vld [vmem:[%s2 + $0x370] sm:$0xff]
        %v539 = vld [vmem:[%s2 + $0x378] sm:$0xff]
        %v540 = vld [vmem:[%s2 + $0x380] sm:$0xff]
        %v541 = vld [vmem:[%s2 + $0x388] sm:$0xff]
        %v542 = vld [vmem:[%s2 + $0x390] sm:$0xff]
        %v543 = vld [vmem:[%s2 + $0x398] sm:$0xff]
        %v544 = vld [vmem:[%s2 + $0x3a0] sm:$0xff]
        %v545 = vld [vmem:[%s2 + $0x3a8] sm:$0xff]
        %v546 = vld [vmem:[%s2 + $0x3b0] sm:$0xff]
        %v547 = vld [vmem:[%s2 + $0x3b8] sm:$0xff]
        %v548 = vld [vmem:[%s2 + $0x3c0] sm:$0xff]
        %v549 = vld [vmem:[%s2 + $0x3c8] sm:$0xff]
        %v550 = vld [vmem:[%s2 + $0x3d0] sm:$0xff]
        %v551 = vld [vmem:[%s2 + $0x3d8] sm:$0xff]
        %v552 = vld [vmem:[%s2 + $0x3e0] sm:$0xff]
        %v553 = vld [vmem:[%s2 + $0x3e8] sm:$0xff]
        %v554 = vld [vmem:[%s2 + $0x3f0] sm:$0xff]
        %v555 = vld [vmem:[%s2 + $0x3f8] sm:$0xff]
        %v556 = vld [vmem:[%s2 + $0x400] sm:$0xff]
        %v557 = vld [vmem:[%s2 + $0x408] sm:$0xff]
        %v558 = vld [vmem:[%s2 + $0x410] sm:$0xff]
        %v559 = vld [vmem:[%s2 + $0x418] sm:$0xff]
        %v560 = vld [vmem:[%s2 + $0x420] sm:$0xff]
        %v561 = vld [vmem:[%s2 + $0x428] sm:$0xff]
        %v562 = vld [vmem:[%s2 + $0x430] sm:$0xff]
        %v563 = vld [vmem:[%s2 + $0x438] sm:$0xff]
        %v564 = vld [vmem:[%s2 + $0x440] sm:$0xff]
        %v565 = vld [vmem:[%s2 + $0x448] sm:$0xff]
        %v566 = vld [vmem:[%s2 + $0x450] sm:$0xff]
        %v567 = vld [vmem:[%s2 + $0x458] sm:$0xff]
        %v568 = vld [vmem:[%s2 + $0x460] sm:$0xff]
        %v569 = vld [vmem:[%s2 + $0x468] sm:$0xff]
        %v570 = vld [vmem:[%s2 + $0x470] sm:$0xff]
        %v571 = vld [vmem:[%s2 + $0x478] sm:$0xff]
        %v572 = vld [vmem:[%s2 + $0x480] sm:$0xff]
        %v573 = vld [vmem:[%s2 + $0x488] sm:$0xff]
        %v574 = vld [vmem:[%s2 + $0x490] sm:$0xff]
        %v575 = vld [vmem:[%s2 + $0x498] sm:$0xff]
        %v576 = vld [vmem:[%s2 + $0x4a0] sm:$0xff]
        %v577 = vld [vmem:[%s2 + $0x4a8] sm:$0xff]
        %v578 = vld [vmem:[%s2 + $0x4b0] sm:$0xff]
        %v579 = vld [vmem:[%s2 + $0x4b8] sm:$0xff]
        %v580 = vld [vmem:[%s2 + $0x4c0] sm:$0xff]
        %v581 = vld [vmem:[%s2 + $0x4c8] sm:$0xff]
        %v582 = vld [vmem:[%s2 + $0x4d0] sm:$0xff]
        %v583 = vld [vmem:[%s2 + $0x4d8] sm:$0xff]
        %v584 = vld [vmem:[%s2 + $0x4e0] sm:$0xff]
        %v585 = vld [vmem:[%s2 + $0x4e8] sm:$0xff]
        %v586 = vld [vmem:[%s2 + $0x4f0] sm:$0xff]
        %v587 = vld [vmem:[%s2 + $0x4f8] sm:$0xff]
        %v588 = vld [vmem:[%s2 + $0x500] sm:$0xff]
        %v589 = vld [vmem:[%s2 + $0x508] sm:$0xff]
        %v590 = vld [vmem:[%s2 + $0x510] sm:$0xff]
        %v591 = vld [vmem:[%s2 + $0x518] sm:$0xff]
        %v592 = vld [vmem:[%s2 + $0x520] sm:$0xff]
        %v593 = vld [vmem:[%s2 + $0x528] sm:$0xff]
        %v594 = vld [vmem:[%s2 + $0x530] sm:$0xff]
        %v595 = vld [vmem:[%s2 + $0x538] sm:$0xff]
        %v596 = vld [vmem:[%s2 + $0x540] sm:$0xff]
        %v597 = vld [vmem:[%s2 + $0x548] sm:$0xff]
        %v598 = vld [vmem:[%s2 + $0x550] sm:$0xff]
        %v599 = vld [vmem:[%s2 + $0x558] sm:$0xff]
        %v600 = vld [vmem:[%s2 + $0x560] sm:$0xff]
        %v601 = vld [vmem:[%s2 + $0x568] sm:$0xff]
        %v602 = vld [vmem:[%s2 + $0x570] sm:$0xff]
        %v603 = vld [vmem:[%s2 + $0x578] sm:$0xff]
        %v604 = vld [vmem:[%s2 + $0x580] sm:$0xff]
        %v605 = vld [vmem:[%s2 + $0x588] sm:$0xff]
        %v606 = vld [vmem:[%s2 + $0x590] sm:$0xff]
        %v607 = vld [vmem:[%s2 + $0x598] sm:$0xff]
        %v608 = vld [vmem:[%s2 + $0x5a0] sm:$0xff]
        %v609 = vld [vmem:[%s2 + $0x5a8] sm:$0xff]
        %v610 = vld [vmem:[%s2 + $0x5b0] sm:$0xff]
        %v611 = vld [vmem:[%s2 + $0x5b8] sm:$0xff]
        %v612 = vld [vmem:[%s2 + $0x5c0] sm:$0xff]
        %v613 = vld [vmem:[%s2 + $0x5c8] sm:$0xff]
        %v614 = vld [vmem:[%s2 + $0x5d0] sm:$0xff]
        %v615 = vld [vmem:[%s2 + $0x5d8] sm:$0xff]
        %v616 = vld [vmem:[%s2 + $0x5e0] sm:$0xff]
        %v617 = vld [vmem:[%s2 + $0x5e8] sm:$0xff]
        %v618 = vld [vmem:[%s2 + $0x5f0] sm:$0xff]
        %v619 = vld [vmem:[%s2 + $0x5f8] sm:$0xff]
        %v620 = vld [vmem:[%s2 + $0x600] sm:$0xff]
        %v621 = vld [vmem:[%s2 + $0x608] sm:$0xff]
        %v622 = vld [vmem:[%s2 + $0x610] sm:$0xff]
        %v623 = vld [vmem:[%s2 + $0x618] sm:$0xff]
        %v624 = vld [vmem:[%s3] sm:$0xf]
        %v626 = vperm.slane %v624, 0
        %v627 = vperm.slane %v624, 1
        %v628 = vperm.slane %v624, 2
        %v629 = vperm.slane %v624, 3
        %v830 = vunpack.c.l.b16 %v428
        %v831 = vunpack.c.h.b16 %v428
        %v832 = vunpack.c.l.b16 %v429
        %v833 = vunpack.c.h.b16 %v429
        %v834 = vunpack.c.l.b16 %v430
        %v835 = vunpack.c.h.b16 %v430
        %v836 = vunpack.c.l.b16 %v431
        %v837 = vunpack.c.h.b16 %v431
        %v838 = vunpack.c.l.b16 %v432
        %v839 = vunpack.c.h.b16 %v432
        %v840 = vunpack.c.l.b16 %v433
        %v841 = vunpack.c.h.b16 %v433
        %v842 = vunpack.c.l.b16 %v434
        %v843 = vunpack.c.h.b16 %v434
        %v844 = vunpack.c.l.b16 %v435
        %v845 = vunpack.c.h.b16 %v435
        %v846 = vunpack.c.l.b16 %v436
        %v847 = vunpack.c.h.b16 %v436
        %v848 = vunpack.c.l.b16 %v437
        %v849 = vunpack.c.h.b16 %v437
        %v850 = vunpack.c.l.b16 %v438
        %v851 = vunpack.c.h.b16 %v438
        %v852 = vunpack.c.l.b16 %v439
        %v853 = vunpack.c.h.b16 %v439
        %v854 = vunpack.c.l.b16 %v440
        %v855 = vunpack.c.h.b16 %v440
        %v856 = vunpack.c.l.b16 %v441
        %v857 = vunpack.c.h.b16 %v441
        %v858 = vunpack.c.l.b16 %v442
        %v859 = vunpack.c.h.b16 %v442
        %v860 = vunpack.c.l.b16 %v443
        %v861 = vunpack.c.h.b16 %v443
        %v862 = vunpack.c.l.b16 %v444
        %v863 = vunpack.c.h.b16 %v444
        %v864 = vunpack.c.l.b16 %v445
        %v865 = vunpack.c.h.b16 %v445
        %v866 = vunpack.c.l.b16 %v446
        %v867 = vunpack.c.h.b16 %v446
        %v868 = vunpack.c.l.b16 %v447
        %v869 = vunpack.c.h.b16 %v447
        %v870 = vunpack.c.l.b16 %v448
        %v871 = vunpack.c.h.b16 %v448
        %v872 = vunpack.c.l.b16 %v449
        %v873 = vunpack.c.h.b16 %v449
        %v874 = vunpack.c.l.b16 %v450
        %v875 = vunpack.c.h.b16 %v450
        %v876 = vunpack.c.l.b16 %v451
        %v877 = vunpack.c.h.b16 %v451
        %v878 = vunpack.c.l.b16 %v452
        %v879 = vunpack.c.h.b16 %v452
        %v880 = vunpack.c.l.b16 %v453
        %v881 = vunpack.c.h.b16 %v453
        %v882 = vunpack.c.l.b16 %v454
        %v883 = vunpack.c.h.b16 %v454
        %v884 = vunpack.c.l.b16 %v455
        %v885 = vunpack.c.h.b16 %v455
        %v886 = vunpack.c.l.b16 %v456
        %v887 = vunpack.c.h.b16 %v456
        %v888 = vunpack.c.l.b16 %v457
        %v889 = vunpack.c.h.b16 %v457
        %v890 = vunpack.c.l.b16 %v458
        %v891 = vunpack.c.h.b16 %v458
        %v892 = vunpack.c.l.b16 %v459
        %v893 = vunpack.c.h.b16 %v459
        %v894 = vunpack.c.l.b16 %v460
        %v895 = vunpack.c.h.b16 %v460
        %v896 = vunpack.c.l.b16 %v461
        %v897 = vunpack.c.h.b16 %v461
        %v898 = vunpack.c.l.b16 %v462
        %v899 = vunpack.c.h.b16 %v462
        %v900 = vunpack.c.l.b16 %v463
        %v901 = vunpack.c.h.b16 %v463
        %v902 = vunpack.c.l.b16 %v464
        %v903 = vunpack.c.h.b16 %v464
        %v904 = vunpack.c.l.b16 %v465
        %v905 = vunpack.c.h.b16 %v465
        %v906 = vunpack.c.l.b16 %v466
        %v907 = vunpack.c.h.b16 %v466
        %v908 = vunpack.c.l.b16 %v467
        %v909 = vunpack.c.h.b16 %v467
        %v910 = vunpack.c.l.b16 %v468
        %v911 = vunpack.c.h.b16 %v468
        %v912 = vunpack.c.l.b16 %v469
        %v913 = vunpack.c.h.b16 %v469
        %v914 = vunpack.c.l.b16 %v470
        %v915 = vunpack.c.h.b16 %v470
        %v916 = vunpack.c.l.b16 %v471
        %v917 = vunpack.c.h.b16 %v471
        %v918 = vunpack.c.l.b16 %v472
        %v919 = vunpack.c.h.b16 %v472
        %v920 = vunpack.c.l.b16 %v473
        %v921 = vunpack.c.h.b16 %v473
        %v922 = vunpack.c.l.b16 %v474
        %v923 = vunpack.c.h.b16 %v474
        %v924 = vunpack.c.l.b16 %v475
        %v925 = vunpack.c.h.b16 %v475
        %v926 = vunpack.c.l.b16 %v476
        %v927 = vunpack.c.h.b16 %v476
        %v928 = vunpack.c.l.b16 %v477
        %v929 = vunpack.c.h.b16 %v477
        %v930 = vunpack.c.l.b16 %v478
        %v931 = vunpack.c.h.b16 %v478
        %v932 = vunpack.c.l.b16 %v479
        %v933 = vunpack.c.h.b16 %v479
        %v934 = vunpack.c.l.b16 %v480
        %v935 = vunpack.c.h.b16 %v480
        %v936 = vunpack.c.l.b16 %v481
        %v937 = vunpack.c.h.b16 %v481
        %v938 = vunpack.c.l.b16 %v482
        %v939 = vunpack.c.h.b16 %v482
        %v940 = vunpack.c.l.b16 %v483
        %v941 = vunpack.c.h.b16 %v483
        %v942 = vunpack.c.l.b16 %v484
        %v943 = vunpack.c.h.b16 %v484
        %v944 = vunpack.c.l.b16 %v485
        %v945 = vunpack.c.h.b16 %v485
        %v946 = vunpack.c.l.b16 %v486
        %v947 = vunpack.c.h.b16 %v486
        %v948 = vunpack.c.l.b16 %v487
        %v949 = vunpack.c.h.b16 %v487
        %v950 = vunpack.c.l.b16 %v488
        %v951 = vunpack.c.h.b16 %v488
        %v952 = vunpack.c.l.b16 %v489
        %v953 = vunpack.c.h.b16 %v489
        %v954 = vunpack.c.l.b16 %v490
        %v955 = vunpack.c.h.b16 %v490
        %v956 = vunpack.c.l.b16 %v491
        %v957 = vunpack.c.h.b16 %v491
        %v958 = vunpack.c.l.b16 %v492
        %v959 = vunpack.c.h.b16 %v492
        %v960 = vunpack.c.l.b16 %v493
        %v961 = vunpack.c.h.b16 %v493
        %v962 = vunpack.c.l.b16 %v494
        %v963 = vunpack.c.h.b16 %v494
        %v964 = vunpack.c.l.b16 %v495
        %v965 = vunpack.c.h.b16 %v495
        %v966 = vunpack.c.l.b16 %v496
        %v967 = vunpack.c.h.b16 %v496
        %v968 = vunpack.c.l.b16 %v497
        %v969 = vunpack.c.h.b16 %v497
        %v970 = vunpack.c.l.b16 %v498
        %v971 = vunpack.c.h.b16 %v498
        %v972 = vunpack.c.l.b16 %v499
        %v973 = vunpack.c.h.b16 %v499
        %v974 = vunpack.c.l.b16 %v500
        %v975 = vunpack.c.h.b16 %v500
        %v976 = vunpack.c.l.b16 %v501
        %v977 = vunpack.c.h.b16 %v501
        %v978 = vunpack.c.l.b16 %v502
        %v979 = vunpack.c.h.b16 %v502
        %v980 = vunpack.c.l.b16 %v503
        %v981 = vunpack.c.h.b16 %v503
        %v982 = vunpack.c.l.b16 %v504
        %v983 = vunpack.c.h.b16 %v504
        %v984 = vunpack.c.l.b16 %v505
        %v985 = vunpack.c.h.b16 %v505
        %v986 = vunpack.c.l.b16 %v506
        %v987 = vunpack.c.h.b16 %v506
        %v988 = vunpack.c.l.b16 %v507
        %v989 = vunpack.c.h.b16 %v507
        %v990 = vunpack.c.l.b16 %v508
        %v991 = vunpack.c.h.b16 %v508
        %v992 = vunpack.c.l.b16 %v509
        %v993 = vunpack.c.h.b16 %v509
        %v994 = vunpack.c.l.b16 %v510
        %v995 = vunpack.c.h.b16 %v510
        %v996 = vunpack.c.l.b16 %v511
        %v997 = vunpack.c.h.b16 %v511
        %v998 = vunpack.c.l.b16 %v512
        %v999 = vunpack.c.h.b16 %v512
        %v1000 = vunpack.c.l.b16 %v513
        %v1001 = vunpack.c.h.b16 %v513
        %v1002 = vunpack.c.l.b16 %v514
        %v1003 = vunpack.c.h.b16 %v514
        %v1004 = vunpack.c.l.b16 %v515
        %v1005 = vunpack.c.h.b16 %v515
        %v1006 = vunpack.c.l.b16 %v516
        %v1007 = vunpack.c.h.b16 %v516
        %v1008 = vunpack.c.l.b16 %v517
        %v1009 = vunpack.c.h.b16 %v517
        %v1010 = vunpack.c.l.b16 %v518
        %v1011 = vunpack.c.h.b16 %v518
        %v1012 = vunpack.c.l.b16 %v519
        %v1013 = vunpack.c.h.b16 %v519
        %v1014 = vunpack.c.l.b16 %v520
        %v1015 = vunpack.c.h.b16 %v520
        %v1016 = vunpack.c.l.b16 %v521
        %v1017 = vunpack.c.h.b16 %v521
        %v1018 = vunpack.c.l.b16 %v522
        %v1019 = vunpack.c.h.b16 %v522
        %v1020 = vunpack.c.l.b16 %v523
        %v1021 = vunpack.c.h.b16 %v523
        %v1022 = vunpack.c.l.b16 %v524
        %v1023 = vunpack.c.h.b16 %v524
        %v1024 = vunpack.c.l.b16 %v525
        %v1025 = vunpack.c.h.b16 %v525
        %v1026 = vunpack.c.l.b16 %v526
        %v1027 = vunpack.c.h.b16 %v526
        %v1028 = vunpack.c.l.b16 %v527
        %v1029 = vunpack.c.h.b16 %v527
        %v1030 = vunpack.c.l.b16 %v528
        %v1031 = vunpack.c.h.b16 %v528
        %v1032 = vunpack.c.l.b16 %v529
        %v1033 = vunpack.c.h.b16 %v529
        %v1034 = vunpack.c.l.b16 %v530
        %v1035 = vunpack.c.h.b16 %v530
        %v1036 = vunpack.c.l.b16 %v531
        %v1037 = vunpack.c.h.b16 %v531
        %v1038 = vunpack.c.l.b16 %v532
        %v1039 = vunpack.c.h.b16 %v532
        %v1040 = vunpack.c.l.b16 %v533
        %v1041 = vunpack.c.h.b16 %v533
        %v1042 = vunpack.c.l.b16 %v534
        %v1043 = vunpack.c.h.b16 %v534
        %v1044 = vunpack.c.l.b16 %v535
        %v1045 = vunpack.c.h.b16 %v535
        %v1046 = vunpack.c.l.b16 %v536
        %v1047 = vunpack.c.h.b16 %v536
        %v1048 = vunpack.c.l.b16 %v537
        %v1049 = vunpack.c.h.b16 %v537
        %v1050 = vunpack.c.l.b16 %v538
        %v1051 = vunpack.c.h.b16 %v538
        %v1052 = vunpack.c.l.b16 %v539
        %v1053 = vunpack.c.h.b16 %v539
        %v1054 = vunpack.c.l.b16 %v540
        %v1055 = vunpack.c.h.b16 %v540
        %v1056 = vunpack.c.l.b16 %v541
        %v1057 = vunpack.c.h.b16 %v541
        %v1058 = vunpack.c.l.b16 %v542
        %v1059 = vunpack.c.h.b16 %v542
        %v1060 = vunpack.c.l.b16 %v543
        %v1061 = vunpack.c.h.b16 %v543
        %v1062 = vunpack.c.l.b16 %v544
        %v1063 = vunpack.c.h.b16 %v544
        %v1064 = vunpack.c.l.b16 %v545
        %v1065 = vunpack.c.h.b16 %v545
        %v1066 = vunpack.c.l.b16 %v546
        %v1067 = vunpack.c.h.b16 %v546
        %v1068 = vunpack.c.l.b16 %v547
        %v1069 = vunpack.c.h.b16 %v547
        %v1070 = vunpack.c.l.b16 %v548
        %v1071 = vunpack.c.h.b16 %v548
        %v1072 = vunpack.c.l.b16 %v549
        %v1073 = vunpack.c.h.b16 %v549
        %v1074 = vunpack.c.l.b16 %v550
        %v1075 = vunpack.c.h.b16 %v550
        %v1076 = vunpack.c.l.b16 %v551
        %v1077 = vunpack.c.h.b16 %v551
        %v1078 = vunpack.c.l.b16 %v552
        %v1079 = vunpack.c.h.b16 %v552
        %v1080 = vunpack.c.l.b16 %v553
        %v1081 = vunpack.c.h.b16 %v553
        %v1082 = vunpack.c.l.b16 %v554
        %v1083 = vunpack.c.h.b16 %v554
        %v1084 = vunpack.c.l.b16 %v555
        %v1085 = vunpack.c.h.b16 %v555
        %v1086 = vunpack.c.l.b16 %v556
        %v1087 = vunpack.c.h.b16 %v556
        %v1088 = vunpack.c.l.b16 %v557
        %v1089 = vunpack.c.h.b16 %v557
        %v1090 = vunpack.c.l.b16 %v558
        %v1091 = vunpack.c.h.b16 %v558
        %v1092 = vunpack.c.l.b16 %v559
        %v1093 = vunpack.c.h.b16 %v559
        %v1094 = vunpack.c.l.b16 %v560
        %v1095 = vunpack.c.h.b16 %v560
        %v1096 = vunpack.c.l.b16 %v561
        %v1097 = vunpack.c.h.b16 %v561
        %v1098 = vunpack.c.l.b16 %v562
        %v1099 = vunpack.c.h.b16 %v562
        %v1100 = vunpack.c.l.b16 %v563
        %v1101 = vunpack.c.h.b16 %v563
        %v1102 = vunpack.c.l.b16 %v564
        %v1103 = vunpack.c.h.b16 %v564
        %v1104 = vunpack.c.l.b16 %v565
        %v1105 = vunpack.c.h.b16 %v565
        %v1106 = vunpack.c.l.b16 %v566
        %v1107 = vunpack.c.h.b16 %v566
        %v1108 = vunpack.c.l.b16 %v567
        %v1109 = vunpack.c.h.b16 %v567
        %v1110 = vunpack.c.l.b16 %v568
        %v1111 = vunpack.c.h.b16 %v568
        %v1112 = vunpack.c.l.b16 %v569
        %v1113 = vunpack.c.h.b16 %v569
        %v1114 = vunpack.c.l.b16 %v570
        %v1115 = vunpack.c.h.b16 %v570
        %v1116 = vunpack.c.l.b16 %v571
        %v1117 = vunpack.c.h.b16 %v571
        %v1118 = vunpack.c.l.b16 %v572
        %v1119 = vunpack.c.h.b16 %v572
        %v1120 = vunpack.c.l.b16 %v573
        %v1121 = vunpack.c.h.b16 %v573
        %v1122 = vunpack.c.l.b16 %v574
        %v1123 = vunpack.c.h.b16 %v574
        %v1124 = vunpack.c.l.b16 %v575
        %v1125 = vunpack.c.h.b16 %v575
        %v1126 = vunpack.c.l.b16 %v576
        %v1127 = vunpack.c.h.b16 %v576
        %v1128 = vunpack.c.l.b16 %v577
        %v1129 = vunpack.c.h.b16 %v577
        %v1130 = vunpack.c.l.b16 %v578
        %v1131 = vunpack.c.h.b16 %v578
        %v1132 = vunpack.c.l.b16 %v579
        %v1133 = vunpack.c.h.b16 %v579
        %v1134 = vunpack.c.l.b16 %v580
        %v1135 = vunpack.c.h.b16 %v580
        %v1136 = vunpack.c.l.b16 %v581
        %v1137 = vunpack.c.h.b16 %v581
        %v1138 = vunpack.c.l.b16 %v582
        %v1139 = vunpack.c.h.b16 %v582
        %v1140 = vunpack.c.l.b16 %v583
        %v1141 = vunpack.c.h.b16 %v583
        %v1142 = vunpack.c.l.b16 %v584
        %v1143 = vunpack.c.h.b16 %v584
        %v1144 = vunpack.c.l.b16 %v585
        %v1145 = vunpack.c.h.b16 %v585
        %v1146 = vunpack.c.l.b16 %v586
        %v1147 = vunpack.c.h.b16 %v586
        %v1148 = vunpack.c.l.b16 %v587
        %v1149 = vunpack.c.h.b16 %v587
        %v1150 = vunpack.c.l.b16 %v588
        %v1151 = vunpack.c.h.b16 %v588
        %v1152 = vunpack.c.l.b16 %v589
        %v1153 = vunpack.c.h.b16 %v589
        %v1154 = vunpack.c.l.b16 %v590
        %v1155 = vunpack.c.h.b16 %v590
        %v1156 = vunpack.c.l.b16 %v591
        %v1157 = vunpack.c.h.b16 %v591
        %v1158 = vunpack.c.l.b16 %v592
        %v1159 = vunpack.c.h.b16 %v592
        %v1160 = vunpack.c.l.b16 %v593
        %v1161 = vunpack.c.h.b16 %v593
        %v1162 = vunpack.c.l.b16 %v594
        %v1163 = vunpack.c.h.b16 %v594
        %v1164 = vunpack.c.l.b16 %v595
        %v1165 = vunpack.c.h.b16 %v595
        %v1166 = vunpack.c.l.b16 %v596
        %v1167 = vunpack.c.h.b16 %v596
        %v1168 = vunpack.c.l.b16 %v597
        %v1169 = vunpack.c.h.b16 %v597
        %v1170 = vunpack.c.l.b16 %v598
        %v1171 = vunpack.c.h.b16 %v598
        %v1172 = vunpack.c.l.b16 %v599
        %v1173 = vunpack.c.h.b16 %v599
        %v1174 = vunpack.c.l.b16 %v600
        %v1175 = vunpack.c.h.b16 %v600
        %v1176 = vunpack.c.l.b16 %v601
        %v1177 = vunpack.c.h.b16 %v601
        %v1178 = vunpack.c.l.b16 %v602
        %v1179 = vunpack.c.h.b16 %v602
        %v1180 = vunpack.c.l.b16 %v603
        %v1181 = vunpack.c.h.b16 %v603
        %v1182 = vunpack.c.l.b16 %v604
        %v1183 = vunpack.c.h.b16 %v604
        %v1184 = vunpack.c.l.b16 %v605
        %v1185 = vunpack.c.h.b16 %v605
        %v1186 = vunpack.c.l.b16 %v606
        %v1187 = vunpack.c.h.b16 %v606
        %v1188 = vunpack.c.l.b16 %v607
        %v1189 = vunpack.c.h.b16 %v607
        %v1190 = vunpack.c.l.b16 %v608
        %v1191 = vunpack.c.h.b16 %v608
        %v1192 = vunpack.c.l.b16 %v609
        %v1193 = vunpack.c.h.b16 %v609
        %v1194 = vunpack.c.l.b16 %v610
        %v1195 = vunpack.c.h.b16 %v610
        %v1196 = vunpack.c.l.b16 %v611
        %v1197 = vunpack.c.h.b16 %v611
        %v1198 = vunpack.c.l.b16 %v612
        %v1199 = vunpack.c.h.b16 %v612
        %v1200 = vunpack.c.l.b16 %v613
        %v1201 = vunpack.c.h.b16 %v613
        %v1202 = vunpack.c.l.b16 %v614
        %v1203 = vunpack.c.h.b16 %v614
        %v1204 = vunpack.c.l.b16 %v615
        %v1205 = vunpack.c.h.b16 %v615
        %v1206 = vunpack.c.l.b16 %v616
        %v1207 = vunpack.c.h.b16 %v616
        %v1208 = vunpack.c.l.b16 %v617
        %v1209 = vunpack.c.h.b16 %v617
        %v1210 = vunpack.c.l.b16 %v618
        %v1211 = vunpack.c.h.b16 %v618
        %v1212 = vunpack.c.l.b16 %v619
        %v1213 = vunpack.c.h.b16 %v619
        %v1214 = vunpack.c.l.b16 %v620
        %v1215 = vunpack.c.h.b16 %v620
        %v1216 = vunpack.c.l.b16 %v621
        %v1217 = vunpack.c.h.b16 %v621
        %v1218 = vunpack.c.l.b16 %v622
        %v1219 = vunpack.c.h.b16 %v622
        %v1220 = vunpack.c.l.b16 %v623
        %v1221 = vunpack.c.h.b16 %v623
        %v1222 = vpack.c.b16 %v834, %v830
        %v1223 = vpack.c.b16 %v835, %v831
        %v1224 = vpack.c.b16 %v836, %v832
        %v1225 = vpack.c.b16 %v837, %v833
        %v1226 = vpack.c.b16 %v842, %v838
        %v1227 = vpack.c.b16 %v843, %v839
        %v1228 = vpack.c.b16 %v844, %v840
        %v1229 = vpack.c.b16 %v845, %v841
        %v1230 = vpack.c.b16 %v850, %v846
        %v1231 = vpack.c.b16 %v851, %v847
        %v1232 = vpack.c.b16 %v852, %v848
        %v1233 = vpack.c.b16 %v853, %v849
        %v1234 = vpack.c.b16 %v858, %v854
        %v1235 = vpack.c.b16 %v859, %v855
        %v1236 = vpack.c.b16 %v860, %v856
        %v1237 = vpack.c.b16 %v861, %v857
        %v1238 = vpack.c.b16 %v866, %v862
        %v1239 = vpack.c.b16 %v867, %v863
        %v1240 = vpack.c.b16 %v868, %v864
        %v1241 = vpack.c.b16 %v869, %v865
        %v1242 = vpack.c.b16 %v874, %v870
        %v1243 = vpack.c.b16 %v875, %v871
        %v1244 = vpack.c.b16 %v876, %v872
        %v1245 = vpack.c.b16 %v877, %v873
        %v1246 = vpack.c.b16 %v882, %v878
        %v1247 = vpack.c.b16 %v883, %v879
        %v1248 = vpack.c.b16 %v884, %v880
        %v1249 = vpack.c.b16 %v885, %v881
        %v1250 = vpack.c.b16 %v890, %v886
        %v1251 = vpack.c.b16 %v891, %v887
        %v1252 = vpack.c.b16 %v892, %v888
        %v1253 = vpack.c.b16 %v893, %v889
        %v1254 = vpack.c.b16 %v898, %v894
        %v1255 = vpack.c.b16 %v899, %v895
        %v1256 = vpack.c.b16 %v900, %v896
        %v1257 = vpack.c.b16 %v901, %v897
        %v1258 = vpack.c.b16 %v906, %v902
        %v1259 = vpack.c.b16 %v907, %v903
        %v1260 = vpack.c.b16 %v908, %v904
        %v1261 = vpack.c.b16 %v909, %v905
        %v1262 = vpack.c.b16 %v914, %v910
        %v1263 = vpack.c.b16 %v915, %v911
        %v1264 = vpack.c.b16 %v916, %v912
        %v1265 = vpack.c.b16 %v917, %v913
        %v1266 = vpack.c.b16 %v922, %v918
        %v1267 = vpack.c.b16 %v923, %v919
        %v1268 = vpack.c.b16 %v924, %v920
        %v1269 = vpack.c.b16 %v925, %v921
        %v1270 = vpack.c.b16 %v930, %v926
        %v1271 = vpack.c.b16 %v931, %v927
        %v1272 = vpack.c.b16 %v932, %v928
        %v1273 = vpack.c.b16 %v933, %v929
        %v1274 = vpack.c.b16 %v938, %v934
        %v1275 = vpack.c.b16 %v939, %v935
        %v1276 = vpack.c.b16 %v940, %v936
        %v1277 = vpack.c.b16 %v941, %v937
        %v1278 = vpack.c.b16 %v946, %v942
        %v1279 = vpack.c.b16 %v947, %v943
        %v1280 = vpack.c.b16 %v948, %v944
        %v1281 = vpack.c.b16 %v949, %v945
        %v1282 = vpack.c.b16 %v954, %v950
        %v1283 = vpack.c.b16 %v955, %v951
        %v1284 = vpack.c.b16 %v956, %v952
        %v1285 = vpack.c.b16 %v957, %v953
        %v1286 = vpack.c.b16 %v962, %v958
        %v1287 = vpack.c.b16 %v963, %v959
        %v1288 = vpack.c.b16 %v964, %v960
        %v1289 = vpack.c.b16 %v965, %v961
        %v1290 = vpack.c.b16 %v970, %v966
        %v1291 = vpack.c.b16 %v971, %v967
        %v1292 = vpack.c.b16 %v972, %v968
        %v1293 = vpack.c.b16 %v973, %v969
        %v1294 = vpack.c.b16 %v978, %v974
        %v1295 = vpack.c.b16 %v979, %v975
        %v1296 = vpack.c.b16 %v980, %v976
        %v1297 = vpack.c.b16 %v981, %v977
        %v1298 = vpack.c.b16 %v986, %v982
        %v1299 = vpack.c.b16 %v987, %v983
        %v1300 = vpack.c.b16 %v988, %v984
        %v1301 = vpack.c.b16 %v989, %v985
        %v1302 = vpack.c.b16 %v994, %v990
        %v1303 = vpack.c.b16 %v995, %v991
        %v1304 = vpack.c.b16 %v996, %v992
        %v1305 = vpack.c.b16 %v997, %v993
        %v1306 = vpack.c.b16 %v1002, %v998
        %v1307 = vpack.c.b16 %v1003, %v999
        %v1308 = vpack.c.b16 %v1004, %v1000
        %v1309 = vpack.c.b16 %v1005, %v1001
        %v1310 = vpack.c.b16 %v1010, %v1006
        %v1311 = vpack.c.b16 %v1011, %v1007
        %v1312 = vpack.c.b16 %v1012, %v1008
        %v1313 = vpack.c.b16 %v1013, %v1009
        %v1314 = vpack.c.b16 %v1018, %v1014
        %v1315 = vpack.c.b16 %v1019, %v1015
        %v1316 = vpack.c.b16 %v1020, %v1016
        %v1317 = vpack.c.b16 %v1021, %v1017
        %v1318 = vpack.c.b16 %v1026, %v1022
        %v1319 = vpack.c.b16 %v1027, %v1023
        %v1320 = vpack.c.b16 %v1028, %v1024
        %v1321 = vpack.c.b16 %v1029, %v1025
        %v1322 = vpack.c.b16 %v1034, %v1030
        %v1323 = vpack.c.b16 %v1035, %v1031
        %v1324 = vpack.c.b16 %v1036, %v1032
        %v1325 = vpack.c.b16 %v1037, %v1033
        %v1326 = vpack.c.b16 %v1042, %v1038
        %v1327 = vpack.c.b16 %v1043, %v1039
        %v1328 = vpack.c.b16 %v1044, %v1040
        %v1329 = vpack.c.b16 %v1045, %v1041
        %v1330 = vpack.c.b16 %v1050, %v1046
        %v1331 = vpack.c.b16 %v1051, %v1047
        %v1332 = vpack.c.b16 %v1052, %v1048
        %v1333 = vpack.c.b16 %v1053, %v1049
        %v1334 = vpack.c.b16 %v1058, %v1054
        %v1335 = vpack.c.b16 %v1059, %v1055
        %v1336 = vpack.c.b16 %v1060, %v1056
        %v1337 = vpack.c.b16 %v1061, %v1057
        %v1338 = vpack.c.b16 %v1066, %v1062
        %v1339 = vpack.c.b16 %v1067, %v1063
        %v1340 = vpack.c.b16 %v1068, %v1064
        %v1341 = vpack.c.b16 %v1069, %v1065
        %v1342 = vpack.c.b16 %v1074, %v1070
        %v1343 = vpack.c.b16 %v1075, %v1071
        %v1344 = vpack.c.b16 %v1076, %v1072
        %v1345 = vpack.c.b16 %v1077, %v1073
        %v1346 = vpack.c.b16 %v1082, %v1078
        %v1347 = vpack.c.b16 %v1083, %v1079
        %v1348 = vpack.c.b16 %v1084, %v1080
        %v1349 = vpack.c.b16 %v1085, %v1081
        %v1350 = vpack.c.b16 %v1090, %v1086
        %v1351 = vpack.c.b16 %v1091, %v1087
        %v1352 = vpack.c.b16 %v1092, %v1088
        %v1353 = vpack.c.b16 %v1093, %v1089
        %v1354 = vpack.c.b16 %v1098, %v1094
        %v1355 = vpack.c.b16 %v1099, %v1095
        %v1356 = vpack.c.b16 %v1100, %v1096
        %v1357 = vpack.c.b16 %v1101, %v1097
        %v1358 = vpack.c.b16 %v1106, %v1102
        %v1359 = vpack.c.b16 %v1107, %v1103
        %v1360 = vpack.c.b16 %v1108, %v1104
        %v1361 = vpack.c.b16 %v1109, %v1105
        %v1362 = vpack.c.b16 %v1114, %v1110
        %v1363 = vpack.c.b16 %v1115, %v1111
        %v1364 = vpack.c.b16 %v1116, %v1112
        %v1365 = vpack.c.b16 %v1117, %v1113
        %v1366 = vpack.c.b16 %v1122, %v1118
        %v1367 = vpack.c.b16 %v1123, %v1119
        %v1368 = vpack.c.b16 %v1124, %v1120
        %v1369 = vpack.c.b16 %v1125, %v1121
        %v1370 = vpack.c.b16 %v1130, %v1126
        %v1371 = vpack.c.b16 %v1131, %v1127
        %v1372 = vpack.c.b16 %v1132, %v1128
        %v1373 = vpack.c.b16 %v1133, %v1129
        %v1374 = vpack.c.b16 %v1138, %v1134
        %v1375 = vpack.c.b16 %v1139, %v1135
        %v1376 = vpack.c.b16 %v1140, %v1136
        %v1377 = vpack.c.b16 %v1141, %v1137
        %v1378 = vpack.c.b16 %v1146, %v1142
        %v1379 = vpack.c.b16 %v1147, %v1143
        %v1380 = vpack.c.b16 %v1148, %v1144
        %v1381 = vpack.c.b16 %v1149, %v1145
        %v1382 = vpack.c.b16 %v1154, %v1150
        %v1383 = vpack.c.b16 %v1155, %v1151
        %v1384 = vpack.c.b16 %v1156, %v1152
        %v1385 = vpack.c.b16 %v1157, %v1153
        %v1386 = vpack.c.b16 %v1162, %v1158
        %v1387 = vpack.c.b16 %v1163, %v1159
        %v1388 = vpack.c.b16 %v1164, %v1160
        %v1389 = vpack.c.b16 %v1165, %v1161
        %v1390 = vpack.c.b16 %v1170, %v1166
        %v1391 = vpack.c.b16 %v1171, %v1167
        %v1392 = vpack.c.b16 %v1172, %v1168
        %v1393 = vpack.c.b16 %v1173, %v1169
        %v1394 = vpack.c.b16 %v1178, %v1174
        %v1395 = vpack.c.b16 %v1179, %v1175
        %v1396 = vpack.c.b16 %v1180, %v1176
        %v1397 = vpack.c.b16 %v1181, %v1177
        %v1398 = vpack.c.b16 %v1186, %v1182
        %v1399 = vpack.c.b16 %v1187, %v1183
        %v1400 = vpack.c.b16 %v1188, %v1184
        %v1401 = vpack.c.b16 %v1189, %v1185
        %v1402 = vpack.c.b16 %v1194, %v1190
        %v1403 = vpack.c.b16 %v1195, %v1191
        %v1404 = vpack.c.b16 %v1196, %v1192
        %v1405 = vpack.c.b16 %v1197, %v1193
        %v1406 = vpack.c.b16 %v1202, %v1198
        %v1407 = vpack.c.b16 %v1203, %v1199
        %v1408 = vpack.c.b16 %v1204, %v1200
        %v1409 = vpack.c.b16 %v1205, %v1201
        %v1410 = vpack.c.b16 %v1210, %v1206
        %v1411 = vpack.c.b16 %v1211, %v1207
        %v1412 = vpack.c.b16 %v1212, %v1208
        %v1413 = vpack.c.b16 %v1213, %v1209
        %v1414 = vpack.c.b16 %v1218, %v1214
        %v1415 = vpack.c.b16 %v1219, %v1215
        %v1416 = vpack.c.b16 %v1220, %v1216
        %v1417 = vpack.c.b16 %v1221, %v1217
        %vm1614 = vcmask 130048
        %v1616 = vsel %vm1614, %v427, 0
        %1618 = vmatpush.bf16.msra.mxu0 %v1250
        %1619 = vmatpush.bf16.msra.mxu0 %v1246
        %1620 = vmatpush.bf16.msra.mxu0 %v1242
        %1621 = vmatpush.bf16.msra.mxu0 %v1238
        %1622 = vmatpush.bf16.msra.mxu0 %v1234
        %1623 = vmatpush.bf16.msra.mxu0 %v1230
        %1624 = vmatpush.bf16.msra.mxu0 %v1226
        %1625 = vmatpush.bf16.msra.mxu0 %v1222
        %1626 = vmatmul.bf16.gmra.mxu0 %v421
        %v1627 = vpop.f32.mrf.mxu0
        %v1628 = vadd.f32 %v626, %v1627
        %v1629 = vpop.f32.mrf.mxu0
        %1630 = vdwg.mxu0
        %1631 = vmatpush.bf16.msra.mxu0 %v1282
        %1632 = vmatpush.bf16.msra.mxu0 %v1278
        %1633 = vmatpush.bf16.msra.mxu0 %v1274
        %1634 = vmatpush.bf16.msra.mxu0 %v1270
        %1635 = vmatpush.bf16.msra.mxu0 %v1266
        %1636 = vmatpush.bf16.msra.mxu0 %v1262
        %1637 = vmatpush.bf16.msra.mxu0 %v1258
        %1638 = vmatpush.bf16.msra.mxu0 %v1254
        %1639 = vmatmul.bf16.gmra.mxu0 %v422
        %v1640 = vpop.f32.mrf.mxu0
        %v1641 = vadd.f32 %v1628, %v1640
        %v1642 = vpop.f32.mrf.mxu0
        %1643 = vdwg.mxu0
        %1644 = vmatpush.bf16.msra.mxu0 %v1314
        %1645 = vmatpush.bf16.msra.mxu0 %v1310
        %1646 = vmatpush.bf16.msra.mxu0 %v1306
        %1647 = vmatpush.bf16.msra.mxu0 %v1302
        %1648 = vmatpush.bf16.msra.mxu0 %v1298
        %1649 = vmatpush.bf16.msra.mxu0 %v1294
        %1650 = vmatpush.bf16.msra.mxu0 %v1290
        %1651 = vmatpush.bf16.msra.mxu0 %v1286
        %1652 = vmatmul.bf16.gmra.mxu0 %v423
        %v1653 = vpop.f32.mrf.mxu0
        %v1654 = vadd.f32 %v1641, %v1653
        %v1655 = vpop.f32.mrf.mxu0
        %1656 = vdwg.mxu0
        %1657 = vmatpush.bf16.msra.mxu0 %v1346
        %1658 = vmatpush.bf16.msra.mxu0 %v1342
        %1659 = vmatpush.bf16.msra.mxu0 %v1338
        %1660 = vmatpush.bf16.msra.mxu0 %v1334
        %1661 = vmatpush.bf16.msra.mxu0 %v1330
        %1662 = vmatpush.bf16.msra.mxu0 %v1326
        %1663 = vmatpush.bf16.msra.mxu0 %v1322
        %1664 = vmatpush.bf16.msra.mxu0 %v1318
        %1665 = vmatmul.bf16.gmra.mxu0 %v424
        %v1666 = vpop.f32.mrf.mxu0
        %v1667 = vadd.f32 %v1654, %v1666
        %v1668 = vpop.f32.mrf.mxu0
        %1669 = vdwg.mxu0
        %1670 = vmatpush.bf16.msra.mxu0 %v1378
        %1671 = vmatpush.bf16.msra.mxu0 %v1374
        %1672 = vmatpush.bf16.msra.mxu0 %v1370
        %1673 = vmatpush.bf16.msra.mxu0 %v1366
        %1674 = vmatpush.bf16.msra.mxu0 %v1362
        %1675 = vmatpush.bf16.msra.mxu0 %v1358
        %1676 = vmatpush.bf16.msra.mxu0 %v1354
        %1677 = vmatpush.bf16.msra.mxu0 %v1350
        %1678 = vmatmul.bf16.gmra.mxu0 %v425
        %v1679 = vpop.f32.mrf.mxu0
        %v1680 = vadd.f32 %v1667, %v1679
        %v1681 = vpop.f32.mrf.mxu0
        %1682 = vdwg.mxu0
        %1683 = vmatpush.bf16.msra.mxu0 %v1410
        %1684 = vmatpush.bf16.msra.mxu0 %v1406
        %1685 = vmatpush.bf16.msra.mxu0 %v1402
        %1686 = vmatpush.bf16.msra.mxu0 %v1398
        %1687 = vmatpush.bf16.msra.mxu0 %v1394
        %1688 = vmatpush.bf16.msra.mxu0 %v1390
        %1689 = vmatpush.bf16.msra.mxu0 %v1386
        %1690 = vmatpush.bf16.msra.mxu0 %v1382
        %1691 = vmatmul.bf16.gmra.mxu0 %v426
        %v1692 = vpop.f32.mrf.mxu0
        %v1693 = vadd.f32 %v1680, %v1692
        %v1694 = vpop.f32.mrf.mxu0
        %1695 = vdwg.mxu0
        %1696 = vmatpush.bf16.msra.mxu0 0
        %1697 = vmatpush.bf16.msra.mxu0 0
        %1698 = vmatpush.bf16.msra.mxu0 0
        %1699 = vmatpush.bf16.msra.mxu0 0
        %1700 = vmatpush.bf16.msra.mxu0 0
        %1701 = vmatpush.bf16.msra.mxu0 0
        %1702 = vmatpush.bf16.msra.mxu0 0
        %1703 = vmatpush.bf16.msra.mxu0 %v1414
        %1704 = vmatmul.bf16.gmra.mxu0 %v1616
        %v1705 = vpop.f32.mrf.mxu0
        %v1706 = vadd.f32 %v1693, %v1705
        %v1707 = vpop.f32.mrf.mxu0
        %1708 = vdwg.mxu0
        %1709 = vmatpush.bf16.msra.mxu0 %v1251
        %1710 = vmatpush.bf16.msra.mxu0 %v1247
        %1711 = vmatpush.bf16.msra.mxu0 %v1243
        %1712 = vmatpush.bf16.msra.mxu0 %v1239
        %1713 = vmatpush.bf16.msra.mxu0 %v1235
        %1714 = vmatpush.bf16.msra.mxu0 %v1231
        %1715 = vmatpush.bf16.msra.mxu0 %v1227
        %1716 = vmatpush.bf16.msra.mxu0 %v1223
        %1717 = vmatmul.bf16.gmra.mxu0 %v421
        %v1718 = vpop.f32.mrf.mxu0
        %v1719 = vadd.f32 %v627, %v1718
        %v1720 = vpop.f32.mrf.mxu0
        %1721 = vdwg.mxu0
        %1722 = vmatpush.bf16.msra.mxu0 %v1283
        %1723 = vmatpush.bf16.msra.mxu0 %v1279
        %1724 = vmatpush.bf16.msra.mxu0 %v1275
        %1725 = vmatpush.bf16.msra.mxu0 %v1271
        %1726 = vmatpush.bf16.msra.mxu0 %v1267
        %1727 = vmatpush.bf16.msra.mxu0 %v1263
        %1728 = vmatpush.bf16.msra.mxu0 %v1259
        %1729 = vmatpush.bf16.msra.mxu0 %v1255
        %1730 = vmatmul.bf16.gmra.mxu0 %v422
        %v1731 = vpop.f32.mrf.mxu0
        %v1732 = vadd.f32 %v1719, %v1731
        %v1733 = vpop.f32.mrf.mxu0
        %1734 = vdwg.mxu0
        %1735 = vmatpush.bf16.msra.mxu0 %v1315
        %1736 = vmatpush.bf16.msra.mxu0 %v1311
        %1737 = vmatpush.bf16.msra.mxu0 %v1307
        %1738 = vmatpush.bf16.msra.mxu0 %v1303
        %1739 = vmatpush.bf16.msra.mxu0 %v1299
        %1740 = vmatpush.bf16.msra.mxu0 %v1295
        %1741 = vmatpush.bf16.msra.mxu0 %v1291
        %1742 = vmatpush.bf16.msra.mxu0 %v1287
        %1743 = vmatmul.bf16.gmra.mxu0 %v423
        %v1744 = vpop.f32.mrf.mxu0
        %v1745 = vadd.f32 %v1732, %v1744
        %v1746 = vpop.f32.mrf.mxu0
        %1747 = vdwg.mxu0
        %1748 = vmatpush.bf16.msra.mxu0 %v1347
        %1749 = vmatpush.bf16.msra.mxu0 %v1343
        %1750 = vmatpush.bf16.msra.mxu0 %v1339
        %1751 = vmatpush.bf16.msra.mxu0 %v1335
        %1752 = vmatpush.bf16.msra.mxu0 %v1331
        %1753 = vmatpush.bf16.msra.mxu0 %v1327
        %1754 = vmatpush.bf16.msra.mxu0 %v1323
        %1755 = vmatpush.bf16.msra.mxu0 %v1319
        %1756 = vmatmul.bf16.gmra.mxu0 %v424
        %v1757 = vpop.f32.mrf.mxu0
        %v1758 = vadd.f32 %v1745, %v1757
        %v1759 = vpop.f32.mrf.mxu0
        %1760 = vdwg.mxu0
        %1761 = vmatpush.bf16.msra.mxu0 %v1379
        %1762 = vmatpush.bf16.msra.mxu0 %v1375
        %1763 = vmatpush.bf16.msra.mxu0 %v1371
        %1764 = vmatpush.bf16.msra.mxu0 %v1367
        %1765 = vmatpush.bf16.msra.mxu0 %v1363
        %1766 = vmatpush.bf16.msra.mxu0 %v1359
        %1767 = vmatpush.bf16.msra.mxu0 %v1355
        %1768 = vmatpush.bf16.msra.mxu0 %v1351
        %1769 = vmatmul.bf16.gmra.mxu0 %v425
        %v1770 = vpop.f32.mrf.mxu0
        %v1771 = vadd.f32 %v1758, %v1770
        %v1772 = vpop.f32.mrf.mxu0
        %1773 = vdwg.mxu0
        %1774 = vmatpush.bf16.msra.mxu0 %v1411
        %1775 = vmatpush.bf16.msra.mxu0 %v1407
        %1776 = vmatpush.bf16.msra.mxu0 %v1403
        %1777 = vmatpush.bf16.msra.mxu0 %v1399
        %1778 = vmatpush.bf16.msra.mxu0 %v1395
        %1779 = vmatpush.bf16.msra.mxu0 %v1391
        %1780 = vmatpush.bf16.msra.mxu0 %v1387
        %1781 = vmatpush.bf16.msra.mxu0 %v1383
        %1782 = vmatmul.bf16.gmra.mxu0 %v426
        %v1783 = vpop.f32.mrf.mxu0
        %v1784 = vadd.f32 %v1771, %v1783
        %v1785 = vpop.f32.mrf.mxu0
        %1786 = vdwg.mxu0
        %1787 = vmatpush.bf16.msra.mxu0 0
        %1788 = vmatpush.bf16.msra.mxu0 0
        %1789 = vmatpush.bf16.msra.mxu0 0
        %1790 = vmatpush.bf16.msra.mxu0 0
        %1791 = vmatpush.bf16.msra.mxu0 0
        %1792 = vmatpush.bf16.msra.mxu0 0
        %1793 = vmatpush.bf16.msra.mxu0 0
        %1794 = vmatpush.bf16.msra.mxu0 %v1415
        %1795 = vmatmul.bf16.gmra.mxu0 %v1616
        %v1796 = vpop.f32.mrf.mxu0
        %v1797 = vadd.f32 %v1784, %v1796
        %v1798 = vpop.f32.mrf.mxu0
        %1799 = vdwg.mxu0
        %1800 = vmatpush.bf16.msra.mxu0 %v1252
        %1801 = vmatpush.bf16.msra.mxu0 %v1248
        %1802 = vmatpush.bf16.msra.mxu0 %v1244
        %1803 = vmatpush.bf16.msra.mxu0 %v1240
        %1804 = vmatpush.bf16.msra.mxu0 %v1236
        %1805 = vmatpush.bf16.msra.mxu0 %v1232
        %1806 = vmatpush.bf16.msra.mxu0 %v1228
        %1807 = vmatpush.bf16.msra.mxu0 %v1224
        %1808 = vmatmul.bf16.gmra.mxu0 %v421
        %v1809 = vpop.f32.mrf.mxu0
        %v1810 = vadd.f32 %v628, %v1809
        %v1811 = vpop.f32.mrf.mxu0
        %1812 = vdwg.mxu0
        %1813 = vmatpush.bf16.msra.mxu0 %v1284
        %1814 = vmatpush.bf16.msra.mxu0 %v1280
        %1815 = vmatpush.bf16.msra.mxu0 %v1276
        %1816 = vmatpush.bf16.msra.mxu0 %v1272
        %1817 = vmatpush.bf16.msra.mxu0 %v1268
        %1818 = vmatpush.bf16.msra.mxu0 %v1264
        %1819 = vmatpush.bf16.msra.mxu0 %v1260
        %1820 = vmatpush.bf16.msra.mxu0 %v1256
        %1821 = vmatmul.bf16.gmra.mxu0 %v422
        %v1822 = vpop.f32.mrf.mxu0
        %v1823 = vadd.f32 %v1810, %v1822
        %v1824 = vpop.f32.mrf.mxu0
        %1825 = vdwg.mxu0
        %1826 = vmatpush.bf16.msra.mxu0 %v1316
        %1827 = vmatpush.bf16.msra.mxu0 %v1312
        %1828 = vmatpush.bf16.msra.mxu0 %v1308
        %1829 = vmatpush.bf16.msra.mxu0 %v1304
        %1830 = vmatpush.bf16.msra.mxu0 %v1300
        %1831 = vmatpush.bf16.msra.mxu0 %v1296
        %1832 = vmatpush.bf16.msra.mxu0 %v1292
        %1833 = vmatpush.bf16.msra.mxu0 %v1288
        %1834 = vmatmul.bf16.gmra.mxu0 %v423
        %v1835 = vpop.f32.mrf.mxu0
        %v1836 = vadd.f32 %v1823, %v1835
        %v1837 = vpop.f32.mrf.mxu0
        %1838 = vdwg.mxu0
        %1839 = vmatpush.bf16.msra.mxu0 %v1348
        %1840 = vmatpush.bf16.msra.mxu0 %v1344
        %1841 = vmatpush.bf16.msra.mxu0 %v1340
        %1842 = vmatpush.bf16.msra.mxu0 %v1336
        %1843 = vmatpush.bf16.msra.mxu0 %v1332
        %1844 = vmatpush.bf16.msra.mxu0 %v1328
        %1845 = vmatpush.bf16.msra.mxu0 %v1324
        %1846 = vmatpush.bf16.msra.mxu0 %v1320
        %1847 = vmatmul.bf16.gmra.mxu0 %v424
        %v1848 = vpop.f32.mrf.mxu0
        %v1849 = vadd.f32 %v1836, %v1848
        %v1850 = vpop.f32.mrf.mxu0
        %1851 = vdwg.mxu0
        %1852 = vmatpush.bf16.msra.mxu0 %v1380
        %1853 = vmatpush.bf16.msra.mxu0 %v1376
        %1854 = vmatpush.bf16.msra.mxu0 %v1372
        %1855 = vmatpush.bf16.msra.mxu0 %v1368
        %1856 = vmatpush.bf16.msra.mxu0 %v1364
        %1857 = vmatpush.bf16.msra.mxu0 %v1360
        %1858 = vmatpush.bf16.msra.mxu0 %v1356
        %1859 = vmatpush.bf16.msra.mxu0 %v1352
        %1860 = vmatmul.bf16.gmra.mxu0 %v425
        %v1861 = vpop.f32.mrf.mxu0
        %v1862 = vadd.f32 %v1849, %v1861
        %v1863 = vpop.f32.mrf.mxu0
        %1864 = vdwg.mxu0
        %1865 = vmatpush.bf16.msra.mxu0 %v1412
        %1866 = vmatpush.bf16.msra.mxu0 %v1408
        %1867 = vmatpush.bf16.msra.mxu0 %v1404
        %1868 = vmatpush.bf16.msra.mxu0 %v1400
        %1869 = vmatpush.bf16.msra.mxu0 %v1396
        %1870 = vmatpush.bf16.msra.mxu0 %v1392
        %1871 = vmatpush.bf16.msra.mxu0 %v1388
        %1872 = vmatpush.bf16.msra.mxu0 %v1384
        %1873 = vmatmul.bf16.gmra.mxu0 %v426
        %v1874 = vpop.f32.mrf.mxu0
        %v1875 = vadd.f32 %v1862, %v1874
        %v1876 = vpop.f32.mrf.mxu0
        %1877 = vdwg.mxu0
        %1878 = vmatpush.bf16.msra.mxu0 0
        %1879 = vmatpush.bf16.msra.mxu0 0
        %1880 = vmatpush.bf16.msra.mxu0 0
        %1881 = vmatpush.bf16.msra.mxu0 0
        %1882 = vmatpush.bf16.msra.mxu0 0
        %1883 = vmatpush.bf16.msra.mxu0 0
        %1884 = vmatpush.bf16.msra.mxu0 0
        %1885 = vmatpush.bf16.msra.mxu0 %v1416
        %1886 = vmatmul.bf16.gmra.mxu0 %v1616
        %v1887 = vpop.f32.mrf.mxu0
        %v1888 = vadd.f32 %v1875, %v1887
        %v1889 = vpop.f32.mrf.mxu0
        %1890 = vdwg.mxu0
        %1891 = vmatpush.bf16.msra.mxu0 %v1253
        %1892 = vmatpush.bf16.msra.mxu0 %v1249
        %1893 = vmatpush.bf16.msra.mxu0 %v1245
        %1894 = vmatpush.bf16.msra.mxu0 %v1241
        %1895 = vmatpush.bf16.msra.mxu0 %v1237
        %1896 = vmatpush.bf16.msra.mxu0 %v1233
        %1897 = vmatpush.bf16.msra.mxu0 %v1229
        %1898 = vmatpush.bf16.msra.mxu0 %v1225
        %1899 = vmatmul.bf16.gmra.mxu0 %v421
        %v1900 = vpop.f32.mrf.mxu0
        %v1901 = vadd.f32 %v629, %v1900
        %v1902 = vpop.f32.mrf.mxu0
        %1903 = vdwg.mxu0
        %1904 = vmatpush.bf16.msra.mxu0 %v1285
        %1905 = vmatpush.bf16.msra.mxu0 %v1281
        %1906 = vmatpush.bf16.msra.mxu0 %v1277
        %1907 = vmatpush.bf16.msra.mxu0 %v1273
        %1908 = vmatpush.bf16.msra.mxu0 %v1269
        %1909 = vmatpush.bf16.msra.mxu0 %v1265
        %1910 = vmatpush.bf16.msra.mxu0 %v1261
        %1911 = vmatpush.bf16.msra.mxu0 %v1257
        %1912 = vmatmul.bf16.gmra.mxu0 %v422
        %v1913 = vpop.f32.mrf.mxu0
        %v1914 = vadd.f32 %v1901, %v1913
        %v1915 = vpop.f32.mrf.mxu0
        %1916 = vdwg.mxu0
        %1917 = vmatpush.bf16.msra.mxu0 %v1317
        %1918 = vmatpush.bf16.msra.mxu0 %v1313
        %1919 = vmatpush.bf16.msra.mxu0 %v1309
        %1920 = vmatpush.bf16.msra.mxu0 %v1305
        %1921 = vmatpush.bf16.msra.mxu0 %v1301
        %1922 = vmatpush.bf16.msra.mxu0 %v1297
        %1923 = vmatpush.bf16.msra.mxu0 %v1293
        %1924 = vmatpush.bf16.msra.mxu0 %v1289
        %1925 = vmatmul.bf16.gmra.mxu0 %v423
        %v1926 = vpop.f32.mrf.mxu0
        %v1927 = vadd.f32 %v1914, %v1926
        %v1928 = vpop.f32.mrf.mxu0
        %1929 = vdwg.mxu0
        %1930 = vmatpush.bf16.msra.mxu0 %v1349
        %1931 = vmatpush.bf16.msra.mxu0 %v1345
        %1932 = vmatpush.bf16.msra.mxu0 %v1341
        %1933 = vmatpush.bf16.msra.mxu0 %v1337
        %1934 = vmatpush.bf16.msra.mxu0 %v1333
        %1935 = vmatpush.bf16.msra.mxu0 %v1329
        %1936 = vmatpush.bf16.msra.mxu0 %v1325
        %1937 = vmatpush.bf16.msra.mxu0 %v1321
        %1938 = vmatmul.bf16.gmra.mxu0 %v424
        %v1939 = vpop.f32.mrf.mxu0
        %v1940 = vadd.f32 %v1927, %v1939
        %v1941 = vpop.f32.mrf.mxu0
        %1942 = vdwg.mxu0
        %1943 = vmatpush.bf16.msra.mxu0 %v1381
        %1944 = vmatpush.bf16.msra.mxu0 %v1377
        %1945 = vmatpush.bf16.msra.mxu0 %v1373
        %1946 = vmatpush.bf16.msra.mxu0 %v1369
        %1947 = vmatpush.bf16.msra.mxu0 %v1365
        %1948 = vmatpush.bf16.msra.mxu0 %v1361
        %1949 = vmatpush.bf16.msra.mxu0 %v1357
        %1950 = vmatpush.bf16.msra.mxu0 %v1353
        %1951 = vmatmul.bf16.gmra.mxu0 %v425
        %v1952 = vpop.f32.mrf.mxu0
        %v1953 = vadd.f32 %v1940, %v1952
        %v1954 = vpop.f32.mrf.mxu0
        %1955 = vdwg.mxu0
        %1956 = vmatpush.bf16.msra.mxu0 %v1413
        %1957 = vmatpush.bf16.msra.mxu0 %v1409
        %1958 = vmatpush.bf16.msra.mxu0 %v1405
        %1959 = vmatpush.bf16.msra.mxu0 %v1401
        %1960 = vmatpush.bf16.msra.mxu0 %v1397
        %1961 = vmatpush.bf16.msra.mxu0 %v1393
        %1962 = vmatpush.bf16.msra.mxu0 %v1389
        %1963 = vmatpush.bf16.msra.mxu0 %v1385
        %1964 = vmatmul.bf16.gmra.mxu0 %v426
        %v1965 = vpop.f32.mrf.mxu0
        %v1966 = vadd.f32 %v1953, %v1965
        %v1967 = vpop.f32.mrf.mxu0
        %1968 = vdwg.mxu0
        %1969 = vmatpush.bf16.msra.mxu0 0
        %1970 = vmatpush.bf16.msra.mxu0 0
        %1971 = vmatpush.bf16.msra.mxu0 0
        %1972 = vmatpush.bf16.msra.mxu0 0
        %1973 = vmatpush.bf16.msra.mxu0 0
        %1974 = vmatpush.bf16.msra.mxu0 0
        %1975 = vmatpush.bf16.msra.mxu0 0
        %1976 = vmatpush.bf16.msra.mxu0 %v1417
        %1977 = vmatmul.bf16.gmra.mxu0 %v1616
        %v1978 = vpop.f32.mrf.mxu0
        %v1979 = vadd.f32 %v1966, %v1978
        %v1980 = vpop.f32.mrf.mxu0
        %1981 = vdwg.mxu0
        %v1982 = vmax.f32 %v1706, 0.0
        %v1983 = vmax.f32 %v1797, 0.0
        %v1984 = vmax.f32 %v1888, 0.0
        %v1985 = vmax.f32 %v1979, 0.0
        %v1986 = vpack.c.bf16 %v1982, %v1982
        %v1987 = vpack.c.bf16 %v1983, %v1983
        %v1988 = vpack.c.bf16 %v1984, %v1984
        %v1989 = vpack.c.bf16 %v1985, %v1985
        %v1990 = vld [vmem:[%s4] sm:$0xf]
        %v1991 = vld [vmem:[%s4 + $0x4] sm:$0xf]
        %v1992 = vld [vmem:[%s4 + $0x8] sm:$0xf]
        %v1993 = vld [vmem:[%s4 + $0xc] sm:$0xf]
        %v1994 = vld [vmem:[%s4 + $0x10] sm:$0xf]
        %v1995 = vld [vmem:[%s4 + $0x14] sm:$0xf]
        %v1996 = vld [vmem:[%s4 + $0x18] sm:$0xf]
        %v1997 = vld [vmem:[%s4 + $0x1c] sm:$0xf]
        %v1998 = vld [vmem:[%s4 + $0x20] sm:$0xf]
        %v1999 = vld [vmem:[%s4 + $0x24] sm:$0xf]
        %v2000 = vld [vmem:[%s4 + $0x28] sm:$0xf]
        %v2001 = vld [vmem:[%s4 + $0x2c] sm:$0xf]
        %v2002 = vld [vmem:[%s4 + $0x30] sm:$0xf]
        %v2003 = vld [vmem:[%s4 + $0x34] sm:$0xf]
        %v2004 = vld [vmem:[%s4 + $0x38] sm:$0xf]
        %v2005 = vld [vmem:[%s4 + $0x3c] sm:$0xf]
        %v2006 = vld [vmem:[%s4 + $0x40] sm:$0xf]
        %v2007 = vld [vmem:[%s4 + $0x44] sm:$0xf]
        %v2008 = vld [vmem:[%s4 + $0x48] sm:$0xf]
        %v2009 = vld [vmem:[%s4 + $0x4c] sm:$0xf]
        %v2010 = vld [vmem:[%s4 + $0x50] sm:$0xf]
        %v2011 = vld [vmem:[%s4 + $0x54] sm:$0xf]
        %v2012 = vld [vmem:[%s4 + $0x58] sm:$0xf]
        %v2013 = vld [vmem:[%s4 + $0x5c] sm:$0xf]
        %v2014 = vld [vmem:[%s4 + $0x60] sm:$0xf]
        %v2015 = vld [vmem:[%s4 + $0x64] sm:$0xf]
        %v2016 = vld [vmem:[%s4 + $0x68] sm:$0xf]
        %v2017 = vld [vmem:[%s4 + $0x6c] sm:$0xf]
        %v2018 = vld [vmem:[%s4 + $0x70] sm:$0xf]
        %v2019 = vld [vmem:[%s4 + $0x74] sm:$0xf]
        %v2020 = vld [vmem:[%s4 + $0x78] sm:$0xf]
        %v2021 = vld [vmem:[%s4 + $0x7c] sm:$0xf]
        %v2022 = vld [vmem:[%s4 + $0x80] sm:$0xf]
        %v2023 = vld [vmem:[%s4 + $0x84] sm:$0xf]
        %v2024 = vld [vmem:[%s4 + $0x88] sm:$0xf]
        %v2025 = vld [vmem:[%s4 + $0x8c] sm:$0xf]
        %v2026 = vld [vmem:[%s4 + $0x90] sm:$0xf]
        %v2027 = vld [vmem:[%s4 + $0x94] sm:$0xf]
        %v2028 = vld [vmem:[%s4 + $0x98] sm:$0xf]
        %v2029 = vld [vmem:[%s4 + $0x9c] sm:$0xf]
        %v2030 = vld [vmem:[%s4 + $0xa0] sm:$0xf]
        %v2031 = vld [vmem:[%s4 + $0xa4] sm:$0xf]
        %v2032 = vld [vmem:[%s4 + $0xa8] sm:$0xf]
        %v2033 = vld [vmem:[%s4 + $0xac] sm:$0xf]
        %v2034 = vld [vmem:[%s4 + $0xb0] sm:$0xf]
        %v2035 = vld [vmem:[%s4 + $0xb4] sm:$0xf]
        %v2036 = vld [vmem:[%s4 + $0xb8] sm:$0xf]
        %v2037 = vld [vmem:[%s4 + $0xbc] sm:$0xf]
        %v2038 = vld [vmem:[%s4 + $0xc0] sm:$0xf]
        %v2039 = vld [vmem:[%s4 + $0xc4] sm:$0xf]
        %v2040 = vld [vmem:[%s5] sm:$0x1]
        %v2042 = vperm.slane %v2040, 0
        %v2094 = vunpack.c.l.b16 %v1990
        %v2095 = vunpack.c.l.b16 %v1991
        %v2096 = vunpack.c.l.b16 %v1992
        %v2097 = vunpack.c.l.b16 %v1993
        %v2098 = vunpack.c.l.b16 %v1994
        %v2099 = vunpack.c.l.b16 %v1995
        %v2100 = vunpack.c.l.b16 %v1996
        %v2101 = vunpack.c.l.b16 %v1997
        %v2102 = vunpack.c.l.b16 %v1998
        %v2103 = vunpack.c.l.b16 %v1999
        %v2104 = vunpack.c.l.b16 %v2000
        %v2105 = vunpack.c.l.b16 %v2001
        %v2106 = vunpack.c.l.b16 %v2002
        %v2107 = vunpack.c.l.b16 %v2003
        %v2108 = vunpack.c.l.b16 %v2004
        %v2109 = vunpack.c.l.b16 %v2005
        %v2110 = vunpack.c.l.b16 %v2006
        %v2111 = vunpack.c.l.b16 %v2007
        %v2112 = vunpack.c.l.b16 %v2008
        %v2113 = vunpack.c.l.b16 %v2009
        %v2114 = vunpack.c.l.b16 %v2010
        %v2115 = vunpack.c.l.b16 %v2011
        %v2116 = vunpack.c.l.b16 %v2012
        %v2117 = vunpack.c.l.b16 %v2013
        %v2118 = vunpack.c.l.b16 %v2014
        %v2119 = vunpack.c.l.b16 %v2015
        %v2120 = vunpack.c.l.b16 %v2016
        %v2121 = vunpack.c.l.b16 %v2017
        %v2122 = vunpack.c.l.b16 %v2018
        %v2123 = vunpack.c.l.b16 %v2019
        %v2124 = vunpack.c.l.b16 %v2020
        %v2125 = vunpack.c.l.b16 %v2021
        %v2126 = vunpack.c.l.b16 %v2022
        %v2127 = vunpack.c.l.b16 %v2023
        %v2128 = vunpack.c.l.b16 %v2024
        %v2129 = vunpack.c.l.b16 %v2025
        %v2130 = vunpack.c.l.b16 %v2026
        %v2131 = vunpack.c.l.b16 %v2027
        %v2132 = vunpack.c.l.b16 %v2028
        %v2133 = vunpack.c.l.b16 %v2029
        %v2134 = vunpack.c.l.b16 %v2030
        %v2135 = vunpack.c.l.b16 %v2031
        %v2136 = vunpack.c.l.b16 %v2032
        %v2137 = vunpack.c.l.b16 %v2033
        %v2138 = vunpack.c.l.b16 %v2034
        %v2139 = vunpack.c.l.b16 %v2035
        %v2140 = vunpack.c.l.b16 %v2036
        %v2141 = vunpack.c.l.b16 %v2037
        %v2142 = vunpack.c.l.b16 %v2038
        %v2143 = vunpack.c.l.b16 %v2039
        %v2144 = vpack.c.b16 %v2095, %v2094
        %v2145 = vpack.c.b16 %v2097, %v2096
        %v2146 = vpack.c.b16 %v2099, %v2098
        %v2147 = vpack.c.b16 %v2101, %v2100
        %v2148 = vpack.c.b16 %v2103, %v2102
        %v2149 = vpack.c.b16 %v2105, %v2104
        %v2150 = vpack.c.b16 %v2107, %v2106
        %v2151 = vpack.c.b16 %v2109, %v2108
        %v2152 = vpack.c.b16 %v2111, %v2110
        %v2153 = vpack.c.b16 %v2113, %v2112
        %v2154 = vpack.c.b16 %v2115, %v2114
        %v2155 = vpack.c.b16 %v2117, %v2116
        %v2156 = vpack.c.b16 %v2119, %v2118
        %v2157 = vpack.c.b16 %v2121, %v2120
        %v2158 = vpack.c.b16 %v2123, %v2122
        %v2159 = vpack.c.b16 %v2125, %v2124
        %v2160 = vpack.c.b16 %v2127, %v2126
        %v2161 = vpack.c.b16 %v2129, %v2128
        %v2162 = vpack.c.b16 %v2131, %v2130
        %v2163 = vpack.c.b16 %v2133, %v2132
        %v2164 = vpack.c.b16 %v2135, %v2134
        %v2165 = vpack.c.b16 %v2137, %v2136
        %v2166 = vpack.c.b16 %v2139, %v2138
        %v2167 = vpack.c.b16 %v2141, %v2140
        %v2168 = vpack.c.b16 %v2143, %v2142
        %v2195 = vsel %vm1614, %v1989, 0
        %2197 = vmatpush.bf16.msra.mxu0 %v2151
        %2198 = vmatpush.bf16.msra.mxu0 %v2150
        %2199 = vmatpush.bf16.msra.mxu0 %v2149
        %2200 = vmatpush.bf16.msra.mxu0 %v2148
        %2201 = vmatpush.bf16.msra.mxu0 %v2147
        %2202 = vmatpush.bf16.msra.mxu0 %v2146
        %2203 = vmatpush.bf16.msra.mxu0 %v2145
        %2204 = vmatpush.bf16.msra.mxu0 %v2144
        %2205 = vmatmul.bf16.gmra.mxu0 %v1986
        %v2206 = vpop.f32.mrf.mxu0
        %v2207 = vadd.f32 %v2042, %v2206
        %v2208 = vpop.f32.mrf.mxu0
        %2209 = vdwg.mxu0
        %2210 = vmatpush.bf16.msra.mxu0 %v2159
        %2211 = vmatpush.bf16.msra.mxu0 %v2158
        %2212 = vmatpush.bf16.msra.mxu0 %v2157
        %2213 = vmatpush.bf16.msra.mxu0 %v2156
        %2214 = vmatpush.bf16.msra.mxu0 %v2155
        %2215 = vmatpush.bf16.msra.mxu0 %v2154
        %2216 = vmatpush.bf16.msra.mxu0 %v2153
        %2217 = vmatpush.bf16.msra.mxu0 %v2152
        %2218 = vmatmul.bf16.gmra.mxu0 %v1987
        %v2219 = vpop.f32.mrf.mxu0
        %v2220 = vadd.f32 %v2207, %v2219
        %v2221 = vpop.f32.mrf.mxu0
        %2222 = vdwg.mxu0
        %2223 = vmatpush.bf16.msra.mxu0 %v2167
        %2224 = vmatpush.bf16.msra.mxu0 %v2166
        %2225 = vmatpush.bf16.msra.mxu0 %v2165
        %2226 = vmatpush.bf16.msra.mxu0 %v2164
        %2227 = vmatpush.bf16.msra.mxu0 %v2163
        %2228 = vmatpush.bf16.msra.mxu0 %v2162
        %2229 = vmatpush.bf16.msra.mxu0 %v2161
        %2230 = vmatpush.bf16.msra.mxu0 %v2160
        %2231 = vmatmul.bf16.gmra.mxu0 %v1988
        %v2232 = vpop.f32.mrf.mxu0
        %v2233 = vadd.f32 %v2220, %v2232
        %v2234 = vpop.f32.mrf.mxu0
        %2235 = vdwg.mxu0
        %2236 = vmatpush.bf16.msra.mxu0 0
        %2237 = vmatpush.bf16.msra.mxu0 0
        %2238 = vmatpush.bf16.msra.mxu0 0
        %2239 = vmatpush.bf16.msra.mxu0 0
        %2240 = vmatpush.bf16.msra.mxu0 0
        %2241 = vmatpush.bf16.msra.mxu0 0
        %2242 = vmatpush.bf16.msra.mxu0 0
        %2243 = vmatpush.bf16.msra.mxu0 %v2168
        %2244 = vmatmul.bf16.gmra.mxu0 %v2195
        %v2245 = vpop.f32.mrf.mxu0
        %v2246 = vadd.f32 %v2233, %v2245
        %v2247 = vpop.f32.mrf.mxu0
        %2248 = vdwg.mxu0
        %2249 = vst [vmem:[%s403] sm:$0xff] %v2246
        %2250 = vrot.lane.b32.xlu0 %v2246, 64
        %v2251 = vpop.permute.xlu0 %2250
        %v2252 = vmul.f32 %v2251, 0.5
        %v2253 = vmul.f32 %v2252, 1.442695
        %v2254 = vpow.pop %v2253
        %v2255 = vld [vmem:[%s412] sm:$0xff]
        %v2256 = vmul.f32 %v2255, %v2254
        %v2257 = vadd.f32 %v2256, %v2246
        %v2258 = vpack.c.bf16 %v2257, %v2257
        %v2259 = vld [vmem:[%s6] sm:$0xff]
        %v2260 = vld [vmem:[%s6 + $0x8] sm:$0xff]
        %v2261 = vld [vmem:[%s6 + $0x10] sm:$0xff]
        %v2262 = vld [vmem:[%s6 + $0x18] sm:$0xff]
        %v2263 = vld [vmem:[%s6 + $0x20] sm:$0x33]
        %v2264 = vld [vmem:[%s6 + $0x28] sm:$0x33]
        %v2265 = vld [vmem:[%s7] sm:$0xf]
        %v2267 = vperm.slane %v2265, 0
        %v2268 = vperm.slane %v2265, 1
        %v2269 = vperm.slane %v2265, 2
        %v2270 = vperm.slane %v2265, 3
        %v2281 = vunpack.c.l.b16 %v2259
        %v2282 = vunpack.c.h.b16 %v2259
        %v2283 = vunpack.c.l.b16 %v2260
        %v2284 = vunpack.c.h.b16 %v2260
        %v2285 = vunpack.c.l.b16 %v2261
        %v2286 = vunpack.c.h.b16 %v2261
        %v2287 = vunpack.c.l.b16 %v2262
        %v2288 = vunpack.c.h.b16 %v2262
        %v2289 = vunpack.c.l.b16 %v2263
        %v2290 = vunpack.c.h.b16 %v2263
        %v2291 = vunpack.c.l.b16 %v2264
        %v2292 = vunpack.c.h.b16 %v2264
        %v2293 = vpack.c.b16 %v2285, %v2281
        %v2294 = vpack.c.b16 %v2286, %v2282
        %v2295 = vpack.c.b16 %v2287, %v2283
        %v2296 = vpack.c.b16 %v2288, %v2284
        %v2297 = vpack.c.b16 %v2289, %v2289
        %v2298 = vpack.c.b16 %v2290, %v2290
        %v2299 = vpack.c.b16 %v2291, %v2291
        %v2300 = vpack.c.b16 %v2292, %v2292
        %vm2305 = vcmask 162816
        %v2307 = vsel %vm2305, %v2258, 0
        %vm2309 = vcmask 1041408
        %v2311 = vsel %vm2309, %v2297, 0
        %v2314 = vsel %vm2309, %v2298, 0
        %v2317 = vsel %vm2309, %v2299, 0
        %v2320 = vsel %vm2309, %v2300, 0
        %2322 = vmatpush.bf16.msra.mxu0 0
        %2323 = vmatpush.bf16.msra.mxu0 0
        %2324 = vmatpush.bf16.msra.mxu0 0
        %2325 = vmatpush.bf16.msra.mxu0 0
        %2326 = vmatpush.bf16.msra.mxu0 0
        %2327 = vmatpush.bf16.msra.mxu0 0
        %2328 = vmatpush.bf16.msra.mxu0 %v2311
        %2329 = vmatpush.bf16.msra.mxu0 %v2293
        %2330 = vmatmul.bf16.gmra.mxu0 %v2307
        %v2331 = vpop.f32.mrf.mxu0
        %v2332 = vadd.f32 %v2267, %v2331
        %v2333 = vpop.f32.mrf.mxu0
        %2334 = vdwg.mxu0
        %2335 = vmatpush.bf16.msra.mxu0 0
        %2336 = vmatpush.bf16.msra.mxu0 0
        %2337 = vmatpush.bf16.msra.mxu0 0
        %2338 = vmatpush.bf16.msra.mxu0 0
        %2339 = vmatpush.bf16.msra.mxu0 0
        %2340 = vmatpush.bf16.msra.mxu0 0
        %2341 = vmatpush.bf16.msra.mxu0 %v2314
        %2342 = vmatpush.bf16.msra.mxu0 %v2294
        %2343 = vmatmul.bf16.gmra.mxu0 %v2307
        %v2344 = vpop.f32.mrf.mxu0
        %v2345 = vadd.f32 %v2268, %v2344
        %v2346 = vpop.f32.mrf.mxu0
        %2347 = vdwg.mxu0
        %2348 = vmatpush.bf16.msra.mxu0 0
        %2349 = vmatpush.bf16.msra.mxu0 0
        %2350 = vmatpush.bf16.msra.mxu0 0
        %2351 = vmatpush.bf16.msra.mxu0 0
        %2352 = vmatpush.bf16.msra.mxu0 0
        %2353 = vmatpush.bf16.msra.mxu0 0
        %2354 = vmatpush.bf16.msra.mxu0 %v2317
        %2355 = vmatpush.bf16.msra.mxu0 %v2295
        %2356 = vmatmul.bf16.gmra.mxu0 %v2307
        %v2357 = vpop.f32.mrf.mxu0
        %v2358 = vadd.f32 %v2269, %v2357
        %v2359 = vpop.f32.mrf.mxu0
        %2360 = vdwg.mxu0
        %2361 = vmatpush.bf16.msra.mxu0 0
        %2362 = vmatpush.bf16.msra.mxu0 0
        %2363 = vmatpush.bf16.msra.mxu0 0
        %2364 = vmatpush.bf16.msra.mxu0 0
        %2365 = vmatpush.bf16.msra.mxu0 0
        %2366 = vmatpush.bf16.msra.mxu0 0
        %2367 = vmatpush.bf16.msra.mxu0 %v2320
        %2368 = vmatpush.bf16.msra.mxu0 %v2296
        %2369 = vmatmul.bf16.gmra.mxu0 %v2307
        %v2370 = vpop.f32.mrf.mxu0
        %v2371 = vadd.f32 %v2270, %v2370
        %v2372 = vpop.f32.mrf.mxu0
        %2373 = vdwg.mxu0
        %v2374 = vmax.f32 %v2332, 0.0
        %v2375 = vmax.f32 %v2345, 0.0
        %v2376 = vmax.f32 %v2358, 0.0
        %v2377 = vmax.f32 %v2371, 0.0
        %v2378 = vpack.c.bf16 %v2374, %v2374
        %v2379 = vpack.c.bf16 %v2375, %v2375
        %v2380 = vpack.c.bf16 %v2376, %v2376
        %v2381 = vpack.c.bf16 %v2377, %v2377
        %v2382 = vld [vmem:[%s8] sm:$0xff]
        %v2383 = vld [vmem:[%s8 + $0x8] sm:$0xff]
        %v2384 = vld [vmem:[%s8 + $0x10] sm:$0xff]
        %v2385 = vld [vmem:[%s8 + $0x18] sm:$0xf]
        %v2386 = vld [vmem:[%s8 + $0x1c] sm:$0xff]
        %v2387 = vld [vmem:[%s8 + $0x24] sm:$0xff]
        %v2388 = vld [vmem:[%s8 + $0x2c] sm:$0xff]
        %v2389 = vld [vmem:[%s8 + $0x34] sm:$0xf]
        %v2390 = vld [vmem:[%s8 + $0x38] sm:$0xff]
        %v2391 = vld [vmem:[%s8 + $0x40] sm:$0xff]
        %v2392 = vld [vmem:[%s8 + $0x48] sm:$0xff]
        %v2393 = vld [vmem:[%s8 + $0x50] sm:$0xf]
        %v2394 = vld [vmem:[%s8 + $0x54] sm:$0xff]
        %v2395 = vld [vmem:[%s8 + $0x5c] sm:$0xff]
        %v2396 = vld [vmem:[%s8 + $0x64] sm:$0xff]
        %v2397 = vld [vmem:[%s8 + $0x6c] sm:$0xf]
        %v2398 = vld [vmem:[%s8 + $0x70] sm:$0xff]
        %v2399 = vld [vmem:[%s8 + $0x78] sm:$0xff]
        %v2400 = vld [vmem:[%s8 + $0x80] sm:$0xff]
        %v2401 = vld [vmem:[%s8 + $0x88] sm:$0xf]
        %v2402 = vld [vmem:[%s8 + $0x8c] sm:$0xff]
        %v2403 = vld [vmem:[%s8 + $0x94] sm:$0xff]
        %v2404 = vld [vmem:[%s8 + $0x9c] sm:$0xff]
        %v2405 = vld [vmem:[%s8 + $0xa4] sm:$0xf]
        %v2406 = vld [vmem:[%s8 + $0xa8] sm:$0xff]
        %v2407 = vld [vmem:[%s8 + $0xb0] sm:$0xff]
        %v2408 = vld [vmem:[%s8 + $0xb8] sm:$0xff]
        %v2409 = vld [vmem:[%s8 + $0xc0] sm:$0xf]
        %v2410 = vld [vmem:[%s8 + $0xc4] sm:$0xff]
        %v2411 = vld [vmem:[%s8 + $0xcc] sm:$0xff]
        %v2412 = vld [vmem:[%s8 + $0xd4] sm:$0xff]
        %v2413 = vld [vmem:[%s8 + $0xdc] sm:$0xf]
        %v2414 = vld [vmem:[%s8 + $0xe0] sm:$0xff]
        %v2415 = vld [vmem:[%s8 + $0xe8] sm:$0xff]
        %v2416 = vld [vmem:[%s8 + $0xf0] sm:$0xff]
        %v2417 = vld [vmem:[%s8 + $0xf8] sm:$0xf]
        %v2418 = vld [vmem:[%s8 + $0xfc] sm:$0xff]
        %v2419 = vld [vmem:[%s8 + $0x104] sm:$0xff]
        %v2420 = vld [vmem:[%s8 + $0x10c] sm:$0xff]
        %v2421 = vld [vmem:[%s8 + $0x114] sm:$0xf]
        %v2422 = vld [vmem:[%s8 + $0x118] sm:$0xff]
        %v2423 = vld [vmem:[%s8 + $0x120] sm:$0xff]
        %v2424 = vld [vmem:[%s8 + $0x128] sm:$0xff]
        %v2425 = vld [vmem:[%s8 + $0x130] sm:$0xf]
        %v2426 = vld [vmem:[%s8 + $0x134] sm:$0xff]
        %v2427 = vld [vmem:[%s8 + $0x13c] sm:$0xff]
        %v2428 = vld [vmem:[%s8 + $0x144] sm:$0xff]
        %v2429 = vld [vmem:[%s8 + $0x14c] sm:$0xf]
        %v2430 = vld [vmem:[%s8 + $0x150] sm:$0xff]
        %v2431 = vld [vmem:[%s8 + $0x158] sm:$0xff]
        %v2432 = vld [vmem:[%s8 + $0x160] sm:$0xff]
        %v2433 = vld [vmem:[%s8 + $0x168] sm:$0xf]
        %v2434 = vld [vmem:[%s8 + $0x16c] sm:$0xff]
        %v2435 = vld [vmem:[%s8 + $0x174] sm:$0xff]
        %v2436 = vld [vmem:[%s8 + $0x17c] sm:$0xff]
        %v2437 = vld [vmem:[%s8 + $0x184] sm:$0xf]
        %v2438 = vld [vmem:[%s8 + $0x188] sm:$0xff]
        %v2439 = vld [vmem:[%s8 + $0x190] sm:$0xff]
        %v2440 = vld [vmem:[%s8 + $0x198] sm:$0xff]
        %v2441 = vld [vmem:[%s8 + $0x1a0] sm:$0xf]
        %v2442 = vld [vmem:[%s8 + $0x1a4] sm:$0xff]
        %v2443 = vld [vmem:[%s8 + $0x1ac] sm:$0xff]
        %v2444 = vld [vmem:[%s8 + $0x1b4] sm:$0xff]
        %v2445 = vld [vmem:[%s8 + $0x1bc] sm:$0xf]
        %v2446 = vld [vmem:[%s8 + $0x1c0] sm:$0xff]
        %v2447 = vld [vmem:[%s8 + $0x1c8] sm:$0xff]
        %v2448 = vld [vmem:[%s8 + $0x1d0] sm:$0xff]
        %v2449 = vld [vmem:[%s8 + $0x1d8] sm:$0xf]
        %v2450 = vld [vmem:[%s8 + $0x1dc] sm:$0xff]
        %v2451 = vld [vmem:[%s8 + $0x1e4] sm:$0xff]
        %v2452 = vld [vmem:[%s8 + $0x1ec] sm:$0xff]
        %v2453 = vld [vmem:[%s8 + $0x1f4] sm:$0xf]
        %v2454 = vld [vmem:[%s8 + $0x1f8] sm:$0xff]
        %v2455 = vld [vmem:[%s8 + $0x200] sm:$0xff]
        %v2456 = vld [vmem:[%s8 + $0x208] sm:$0xff]
        %v2457 = vld [vmem:[%s8 + $0x210] sm:$0xf]
        %v2458 = vld [vmem:[%s8 + $0x214] sm:$0xff]
        %v2459 = vld [vmem:[%s8 + $0x21c] sm:$0xff]
        %v2460 = vld [vmem:[%s8 + $0x224] sm:$0xff]
        %v2461 = vld [vmem:[%s8 + $0x22c] sm:$0xf]
        %v2462 = vld [vmem:[%s8 + $0x230] sm:$0xff]
        %v2463 = vld [vmem:[%s8 + $0x238] sm:$0xff]
        %v2464 = vld [vmem:[%s8 + $0x240] sm:$0xff]
        %v2465 = vld [vmem:[%s8 + $0x248] sm:$0xf]
        %v2466 = vld [vmem:[%s8 + $0x24c] sm:$0xff]
        %v2467 = vld [vmem:[%s8 + $0x254] sm:$0xff]
        %v2468 = vld [vmem:[%s8 + $0x25c] sm:$0xff]
        %v2469 = vld [vmem:[%s8 + $0x264] sm:$0xf]
        %v2470 = vld [vmem:[%s8 + $0x268] sm:$0xff]
        %v2471 = vld [vmem:[%s8 + $0x270] sm:$0xff]
        %v2472 = vld [vmem:[%s8 + $0x278] sm:$0xff]
        %v2473 = vld [vmem:[%s8 + $0x280] sm:$0xf]
        %v2474 = vld [vmem:[%s8 + $0x284] sm:$0xff]
        %v2475 = vld [vmem:[%s8 + $0x28c] sm:$0xff]
        %v2476 = vld [vmem:[%s8 + $0x294] sm:$0xff]
        %v2477 = vld [vmem:[%s8 + $0x29c] sm:$0xf]
        %v2478 = vld [vmem:[%s8 + $0x2a0] sm:$0xff]
        %v2479 = vld [vmem:[%s8 + $0x2a8] sm:$0xff]
        %v2480 = vld [vmem:[%s8 + $0x2b0] sm:$0xff]
        %v2481 = vld [vmem:[%s8 + $0x2b8] sm:$0xf]
        %v2482 = vld [vmem:[%s8 + $0x2bc] sm:$0xff]
        %v2483 = vld [vmem:[%s8 + $0x2c4] sm:$0xff]
        %v2484 = vld [vmem:[%s8 + $0x2cc] sm:$0xff]
        %v2485 = vld [vmem:[%s8 + $0x2d4] sm:$0xf]
        %v2486 = vld [vmem:[%s8 + $0x2d8] sm:$0xff]
        %v2487 = vld [vmem:[%s8 + $0x2e0] sm:$0xff]
        %v2488 = vld [vmem:[%s8 + $0x2e8] sm:$0xff]
        %v2489 = vld [vmem:[%s8 + $0x2f0] sm:$0xf]
        %v2490 = vld [vmem:[%s8 + $0x2f4] sm:$0xff]
        %v2491 = vld [vmem:[%s8 + $0x2fc] sm:$0xff]
        %v2492 = vld [vmem:[%s8 + $0x304] sm:$0xff]
        %v2493 = vld [vmem:[%s8 + $0x30c] sm:$0xf]
        %v2494 = vld [vmem:[%s8 + $0x310] sm:$0xff]
        %v2495 = vld [vmem:[%s8 + $0x318] sm:$0xff]
        %v2496 = vld [vmem:[%s8 + $0x320] sm:$0xff]
        %v2497 = vld [vmem:[%s8 + $0x328] sm:$0xf]
        %v2498 = vld [vmem:[%s8 + $0x32c] sm:$0xff]
        %v2499 = vld [vmem:[%s8 + $0x334] sm:$0xff]
        %v2500 = vld [vmem:[%s8 + $0x33c] sm:$0xff]
        %v2501 = vld [vmem:[%s8 + $0x344] sm:$0xf]
        %v2502 = vld [vmem:[%s8 + $0x348] sm:$0xff]
        %v2503 = vld [vmem:[%s8 + $0x350] sm:$0xff]
        %v2504 = vld [vmem:[%s8 + $0x358] sm:$0xff]
        %v2505 = vld [vmem:[%s8 + $0x360] sm:$0xf]
        %v2506 = vld [vmem:[%s8 + $0x364] sm:$0xff]
        %v2507 = vld [vmem:[%s8 + $0x36c] sm:$0xff]
        %v2508 = vld [vmem:[%s8 + $0x374] sm:$0xff]
        %v2509 = vld [vmem:[%s8 + $0x37c] sm:$0xf]
        %v2510 = vld [vmem:[%s8 + $0x380] sm:$0xff]
        %v2511 = vld [vmem:[%s8 + $0x388] sm:$0xff]
        %v2512 = vld [vmem:[%s8 + $0x390] sm:$0xff]
        %v2513 = vld [vmem:[%s8 + $0x398] sm:$0xf]
        %v2514 = vld [vmem:[%s8 + $0x39c] sm:$0xff]
        %v2515 = vld [vmem:[%s8 + $0x3a4] sm:$0xff]
        %v2516 = vld [vmem:[%s8 + $0x3ac] sm:$0xff]
        %v2517 = vld [vmem:[%s8 + $0x3b4] sm:$0xf]
        %v2518 = vld [vmem:[%s8 + $0x3b8] sm:$0xff]
        %v2519 = vld [vmem:[%s8 + $0x3c0] sm:$0xff]
        %v2520 = vld [vmem:[%s8 + $0x3c8] sm:$0xff]
        %v2521 = vld [vmem:[%s8 + $0x3d0] sm:$0xf]
        %v2522 = vld [vmem:[%s8 + $0x3d4] sm:$0xff]
        %v2523 = vld [vmem:[%s8 + $0x3dc] sm:$0xff]
        %v2524 = vld [vmem:[%s8 + $0x3e4] sm:$0xff]
        %v2525 = vld [vmem:[%s8 + $0x3ec] sm:$0xf]
        %v2526 = vld [vmem:[%s8 + $0x3f0] sm:$0xff]
        %v2527 = vld [vmem:[%s8 + $0x3f8] sm:$0xff]
        %v2528 = vld [vmem:[%s8 + $0x400] sm:$0xff]
        %v2529 = vld [vmem:[%s8 + $0x408] sm:$0xf]
        %v2530 = vld [vmem:[%s8 + $0x40c] sm:$0xff]
        %v2531 = vld [vmem:[%s8 + $0x414] sm:$0xff]
        %v2532 = vld [vmem:[%s8 + $0x41c] sm:$0xff]
        %v2533 = vld [vmem:[%s8 + $0x424] sm:$0xf]
        %v2534 = vld [vmem:[%s8 + $0x428] sm:$0xff]
        %v2535 = vld [vmem:[%s8 + $0x430] sm:$0xff]
        %v2536 = vld [vmem:[%s8 + $0x438] sm:$0xff]
        %v2537 = vld [vmem:[%s8 + $0x440] sm:$0xf]
        %v2538 = vld [vmem:[%s8 + $0x444] sm:$0xff]
        %v2539 = vld [vmem:[%s8 + $0x44c] sm:$0xff]
        %v2540 = vld [vmem:[%s8 + $0x454] sm:$0xff]
        %v2541 = vld [vmem:[%s8 + $0x45c] sm:$0xf]
        %v2542 = vld [vmem:[%s8 + $0x460] sm:$0xff]
        %v2543 = vld [vmem:[%s8 + $0x468] sm:$0xff]
        %v2544 = vld [vmem:[%s8 + $0x470] sm:$0xff]
        %v2545 = vld [vmem:[%s8 + $0x478] sm:$0xf]
        %v2546 = vld [vmem:[%s8 + $0x47c] sm:$0xff]
        %v2547 = vld [vmem:[%s8 + $0x484] sm:$0xff]
        %v2548 = vld [vmem:[%s8 + $0x48c] sm:$0xff]
        %v2549 = vld [vmem:[%s8 + $0x494] sm:$0xf]
        %v2550 = vld [vmem:[%s8 + $0x498] sm:$0xff]
        %v2551 = vld [vmem:[%s8 + $0x4a0] sm:$0xff]
        %v2552 = vld [vmem:[%s8 + $0x4a8] sm:$0xff]
        %v2553 = vld [vmem:[%s8 + $0x4b0] sm:$0xf]
        %v2554 = vld [vmem:[%s8 + $0x4b4] sm:$0xff]
        %v2555 = vld [vmem:[%s8 + $0x4bc] sm:$0xff]
        %v2556 = vld [vmem:[%s8 + $0x4c4] sm:$0xff]
        %v2557 = vld [vmem:[%s8 + $0x4cc] sm:$0xf]
        %v2558 = vld [vmem:[%s8 + $0x4d0] sm:$0xff]
        %v2559 = vld [vmem:[%s8 + $0x4d8] sm:$0xff]
        %v2560 = vld [vmem:[%s8 + $0x4e0] sm:$0xff]
        %v2561 = vld [vmem:[%s8 + $0x4e8] sm:$0xf]
        %v2562 = vld [vmem:[%s8 + $0x4ec] sm:$0xff]
        %v2563 = vld [vmem:[%s8 + $0x4f4] sm:$0xff]
        %v2564 = vld [vmem:[%s8 + $0x4fc] sm:$0xff]
        %v2565 = vld [vmem:[%s8 + $0x504] sm:$0xf]
        %v2566 = vld [vmem:[%s8 + $0x508] sm:$0xff]
        %v2567 = vld [vmem:[%s8 + $0x510] sm:$0xff]
        %v2568 = vld [vmem:[%s8 + $0x518] sm:$0xff]
        %v2569 = vld [vmem:[%s8 + $0x520] sm:$0xf]
        %v2570 = vld [vmem:[%s8 + $0x524] sm:$0xff]
        %v2571 = vld [vmem:[%s8 + $0x52c] sm:$0xff]
        %v2572 = vld [vmem:[%s8 + $0x534] sm:$0xff]
        %v2573 = vld [vmem:[%s8 + $0x53c] sm:$0xf]
        %v2574 = vld [vmem:[%s8 + $0x540] sm:$0xff]
        %v2575 = vld [vmem:[%s8 + $0x548] sm:$0xff]
        %v2576 = vld [vmem:[%s8 + $0x550] sm:$0xff]
        %v2577 = vld [vmem:[%s8 + $0x558] sm:$0xf]
        %v2578 = vld [vmem:[%s8 + $0x55c] sm:$0xff]
        %v2579 = vld [vmem:[%s8 + $0x564] sm:$0xff]
        %v2580 = vld [vmem:[%s8 + $0x56c] sm:$0xff]
        %v2581 = vld [vmem:[%s8 + $0x574] sm:$0xf]
        %v2582 = vld [vmem:[%s9] sm:$0x7f]
        %v2584 = vperm.slane %v2582, 0
        %v2585 = vperm.slane %v2582, 1
        %v2586 = vperm.slane %v2582, 2
        %v2587 = vperm.slane %v2582, 3
        %v2588 = vperm.slane %v2582, 4
        %v2589 = vperm.slane %v2582, 5
        %v2590 = vperm.slane %v2582, 6
        %v2798 = vunpack.c.l.b16 %v2382
        %v2799 = vunpack.c.h.b16 %v2382
        %v2800 = vunpack.c.l.b16 %v2383
        %v2801 = vunpack.c.h.b16 %v2383
        %v2802 = vunpack.c.l.b16 %v2384
        %v2803 = vunpack.c.h.b16 %v2384
        %v2804 = vunpack.c.l.b16 %v2385
        %v2805 = vunpack.c.l.b16 %v2386
        %v2806 = vunpack.c.h.b16 %v2386
        %v2807 = vunpack.c.l.b16 %v2387
        %v2808 = vunpack.c.h.b16 %v2387
        %v2809 = vunpack.c.l.b16 %v2388
        %v2810 = vunpack.c.h.b16 %v2388
        %v2811 = vunpack.c.l.b16 %v2389
        %v2812 = vunpack.c.l.b16 %v2390
        %v2813 = vunpack.c.h.b16 %v2390
        %v2814 = vunpack.c.l.b16 %v2391
        %v2815 = vunpack.c.h.b16 %v2391
        %v2816 = vunpack.c.l.b16 %v2392
        %v2817 = vunpack.c.h.b16 %v2392
        %v2818 = vunpack.c.l.b16 %v2393
        %v2819 = vunpack.c.l.b16 %v2394
        %v2820 = vunpack.c.h.b16 %v2394
        %v2821 = vunpack.c.l.b16 %v2395
        %v2822 = vunpack.c.h.b16 %v2395
        %v2823 = vunpack.c.l.b16 %v2396
        %v2824 = vunpack.c.h.b16 %v2396
        %v2825 = vunpack.c.l.b16 %v2397
        %v2826 = vunpack.c.l.b16 %v2398
        %v2827 = vunpack.c.h.b16 %v2398
        %v2828 = vunpack.c.l.b16 %v2399
        %v2829 = vunpack.c.h.b16 %v2399
        %v2830 = vunpack.c.l.b16 %v2400
        %v2831 = vunpack.c.h.b16 %v2400
        %v2832 = vunpack.c.l.b16 %v2401
        %v2833 = vunpack.c.l.b16 %v2402
        %v2834 = vunpack.c.h.b16 %v2402
        %v2835 = vunpack.c.l.b16 %v2403
        %v2836 = vunpack.c.h.b16 %v2403
        %v2837 = vunpack.c.l.b16 %v2404
        %v2838 = vunpack.c.h.b16 %v2404
        %v2839 = vunpack.c.l.b16 %v2405
        %v2840 = vunpack.c.l.b16 %v2406
        %v2841 = vunpack.c.h.b16 %v2406
        %v2842 = vunpack.c.l.b16 %v2407
        %v2843 = vunpack.c.h.b16 %v2407
        %v2844 = vunpack.c.l.b16 %v2408
        %v2845 = vunpack.c.h.b16 %v2408
        %v2846 = vunpack.c.l.b16 %v2409
        %v2847 = vunpack.c.l.b16 %v2410
        %v2848 = vunpack.c.h.b16 %v2410
        %v2849 = vunpack.c.l.b16 %v2411
        %v2850 = vunpack.c.h.b16 %v2411
        %v2851 = vunpack.c.l.b16 %v2412
        %v2852 = vunpack.c.h.b16 %v2412
        %v2853 = vunpack.c.l.b16 %v2413
        %v2854 = vunpack.c.l.b16 %v2414
        %v2855 = vunpack.c.h.b16 %v2414
        %v2856 = vunpack.c.l.b16 %v2415
        %v2857 = vunpack.c.h.b16 %v2415
        %v2858 = vunpack.c.l.b16 %v2416
        %v2859 = vunpack.c.h.b16 %v2416
        %v2860 = vunpack.c.l.b16 %v2417
        %v2861 = vunpack.c.l.b16 %v2418
        %v2862 = vunpack.c.h.b16 %v2418
        %v2863 = vunpack.c.l.b16 %v2419
        %v2864 = vunpack.c.h.b16 %v2419
        %v2865 = vunpack.c.l.b16 %v2420
        %v2866 = vunpack.c.h.b16 %v2420
        %v2867 = vunpack.c.l.b16 %v2421
        %v2868 = vunpack.c.l.b16 %v2422
        %v2869 = vunpack.c.h.b16 %v2422
        %v2870 = vunpack.c.l.b16 %v2423
        %v2871 = vunpack.c.h.b16 %v2423
        %v2872 = vunpack.c.l.b16 %v2424
        %v2873 = vunpack.c.h.b16 %v2424
        %v2874 = vunpack.c.l.b16 %v2425
        %v2875 = vunpack.c.l.b16 %v2426
        %v2876 = vunpack.c.h.b16 %v2426
        %v2877 = vunpack.c.l.b16 %v2427
        %v2878 = vunpack.c.h.b16 %v2427
        %v2879 = vunpack.c.l.b16 %v2428
        %v2880 = vunpack.c.h.b16 %v2428
        %v2881 = vunpack.c.l.b16 %v2429
        %v2882 = vunpack.c.l.b16 %v2430
        %v2883 = vunpack.c.h.b16 %v2430
        %v2884 = vunpack.c.l.b16 %v2431
        %v2885 = vunpack.c.h.b16 %v2431
        %v2886 = vunpack.c.l.b16 %v2432
        %v2887 = vunpack.c.h.b16 %v2432
        %v2888 = vunpack.c.l.b16 %v2433
        %v2889 = vunpack.c.l.b16 %v2434
        %v2890 = vunpack.c.h.b16 %v2434
        %v2891 = vunpack.c.l.b16 %v2435
        %v2892 = vunpack.c.h.b16 %v2435
        %v2893 = vunpack.c.l.b16 %v2436
        %v2894 = vunpack.c.h.b16 %v2436
        %v2895 = vunpack.c.l.b16 %v2437
        %v2896 = vunpack.c.l.b16 %v2438
        %v2897 = vunpack.c.h.b16 %v2438
        %v2898 = vunpack.c.l.b16 %v2439
        %v2899 = vunpack.c.h.b16 %v2439
        %v2900 = vunpack.c.l.b16 %v2440
        %v2901 = vunpack.c.h.b16 %v2440
        %v2902 = vunpack.c.l.b16 %v2441
        %v2903 = vunpack.c.l.b16 %v2442
        %v2904 = vunpack.c.h.b16 %v2442
        %v2905 = vunpack.c.l.b16 %v2443
        %v2906 = vunpack.c.h.b16 %v2443
        %v2907 = vunpack.c.l.b16 %v2444
        %v2908 = vunpack.c.h.b16 %v2444
        %v2909 = vunpack.c.l.b16 %v2445
        %v2910 = vunpack.c.l.b16 %v2446
        %v2911 = vunpack.c.h.b16 %v2446
        %v2912 = vunpack.c.l.b16 %v2447
        %v2913 = vunpack.c.h.b16 %v2447
        %v2914 = vunpack.c.l.b16 %v2448
        %v2915 = vunpack.c.h.b16 %v2448
        %v2916 = vunpack.c.l.b16 %v2449
        %v2917 = vunpack.c.l.b16 %v2450
        %v2918 = vunpack.c.h.b16 %v2450
        %v2919 = vunpack.c.l.b16 %v2451
        %v2920 = vunpack.c.h.b16 %v2451
        %v2921 = vunpack.c.l.b16 %v2452
        %v2922 = vunpack.c.h.b16 %v2452
        %v2923 = vunpack.c.l.b16 %v2453
        %v2924 = vunpack.c.l.b16 %v2454
        %v2925 = vunpack.c.h.b16 %v2454
        %v2926 = vunpack.c.l.b16 %v2455
        %v2927 = vunpack.c.h.b16 %v2455
        %v2928 = vunpack.c.l.b16 %v2456
        %v2929 = vunpack.c.h.b16 %v2456
        %v2930 = vunpack.c.l.b16 %v2457
        %v2931 = vunpack.c.l.b16 %v2458
        %v2932 = vunpack.c.h.b16 %v2458
        %v2933 = vunpack.c.l.b16 %v2459
        %v2934 = vunpack.c.h.b16 %v2459
        %v2935 = vunpack.c.l.b16 %v2460
        %v2936 = vunpack.c.h.b16 %v2460
        %v2937 = vunpack.c.l.b16 %v2461
        %v2938 = vunpack.c.l.b16 %v2462
        %v2939 = vunpack.c.h.b16 %v2462
        %v2940 = vunpack.c.l.b16 %v2463
        %v2941 = vunpack.c.h.b16 %v2463
        %v2942 = vunpack.c.l.b16 %v2464
        %v2943 = vunpack.c.h.b16 %v2464
        %v2944 = vunpack.c.l.b16 %v2465
        %v2945 = vunpack.c.l.b16 %v2466
        %v2946 = vunpack.c.h.b16 %v2466
        %v2947 = vunpack.c.l.b16 %v2467
        %v2948 = vunpack.c.h.b16 %v2467
        %v2949 = vunpack.c.l.b16 %v2468
        %v2950 = vunpack.c.h.b16 %v2468
        %v2951 = vunpack.c.l.b16 %v2469
        %v2952 = vunpack.c.l.b16 %v2470
        %v2953 = vunpack.c.h.b16 %v2470
        %v2954 = vunpack.c.l.b16 %v2471
        %v2955 = vunpack.c.h.b16 %v2471
        %v2956 = vunpack.c.l.b16 %v2472
        %v2957 = vunpack.c.h.b16 %v2472
        %v2958 = vunpack.c.l.b16 %v2473
        %v2959 = vunpack.c.l.b16 %v2474
        %v2960 = vunpack.c.h.b16 %v2474
        %v2961 = vunpack.c.l.b16 %v2475
        %v2962 = vunpack.c.h.b16 %v2475
        %v2963 = vunpack.c.l.b16 %v2476
        %v2964 = vunpack.c.h.b16 %v2476
        %v2965 = vunpack.c.l.b16 %v2477
        %v2966 = vunpack.c.l.b16 %v2478
        %v2967 = vunpack.c.h.b16 %v2478
        %v2968 = vunpack.c.l.b16 %v2479
        %v2969 = vunpack.c.h.b16 %v2479
        %v2970 = vunpack.c.l.b16 %v2480
        %v2971 = vunpack.c.h.b16 %v2480
        %v2972 = vunpack.c.l.b16 %v2481
        %v2973 = vunpack.c.l.b16 %v2482
        %v2974 = vunpack.c.h.b16 %v2482
        %v2975 = vunpack.c.l.b16 %v2483
        %v2976 = vunpack.c.h.b16 %v2483
        %v2977 = vunpack.c.l.b16 %v2484
        %v2978 = vunpack.c.h.b16 %v2484
        %v2979 = vunpack.c.l.b16 %v2485
        %v2980 = vunpack.c.l.b16 %v2486
        %v2981 = vunpack.c.h.b16 %v2486
        %v2982 = vunpack.c.l.b16 %v2487
        %v2983 = vunpack.c.h.b16 %v2487
        %v2984 = vunpack.c.l.b16 %v2488
        %v2985 = vunpack.c.h.b16 %v2488
        %v2986 = vunpack.c.l.b16 %v2489
        %v2987 = vunpack.c.l.b16 %v2490
        %v2988 = vunpack.c.h.b16 %v2490
        %v2989 = vunpack.c.l.b16 %v2491
        %v2990 = vunpack.c.h.b16 %v2491
        %v2991 = vunpack.c.l.b16 %v2492
        %v2992 = vunpack.c.h.b16 %v2492
        %v2993 = vunpack.c.l.b16 %v2493
        %v2994 = vunpack.c.l.b16 %v2494
        %v2995 = vunpack.c.h.b16 %v2494
        %v2996 = vunpack.c.l.b16 %v2495
        %v2997 = vunpack.c.h.b16 %v2495
        %v2998 = vunpack.c.l.b16 %v2496
        %v2999 = vunpack.c.h.b16 %v2496
        %v3000 = vunpack.c.l.b16 %v2497
        %v3001 = vunpack.c.l.b16 %v2498
        %v3002 = vunpack.c.h.b16 %v2498
        %v3003 = vunpack.c.l.b16 %v2499
        %v3004 = vunpack.c.h.b16 %v2499
        %v3005 = vunpack.c.l.b16 %v2500
        %v3006 = vunpack.c.h.b16 %v2500
        %v3007 = vunpack.c.l.b16 %v2501
        %v3008 = vunpack.c.l.b16 %v2502
        %v3009 = vunpack.c.h.b16 %v2502
        %v3010 = vunpack.c.l.b16 %v2503
        %v3011 = vunpack.c.h.b16 %v2503
        %v3012 = vunpack.c.l.b16 %v2504
        %v3013 = vunpack.c.h.b16 %v2504
        %v3014 = vunpack.c.l.b16 %v2505
        %v3015 = vunpack.c.l.b16 %v2506
        %v3016 = vunpack.c.h.b16 %v2506
        %v3017 = vunpack.c.l.b16 %v2507
        %v3018 = vunpack.c.h.b16 %v2507
        %v3019 = vunpack.c.l.b16 %v2508
        %v3020 = vunpack.c.h.b16 %v2508
        %v3021 = vunpack.c.l.b16 %v2509
        %v3022 = vunpack.c.l.b16 %v2510
        %v3023 = vunpack.c.h.b16 %v2510
        %v3024 = vunpack.c.l.b16 %v2511
        %v3025 = vunpack.c.h.b16 %v2511
        %v3026 = vunpack.c.l.b16 %v2512
        %v3027 = vunpack.c.h.b16 %v2512
        %v3028 = vunpack.c.l.b16 %v2513
        %v3029 = vunpack.c.l.b16 %v2514
        %v3030 = vunpack.c.h.b16 %v2514
        %v3031 = vunpack.c.l.b16 %v2515
        %v3032 = vunpack.c.h.b16 %v2515
        %v3033 = vunpack.c.l.b16 %v2516
        %v3034 = vunpack.c.h.b16 %v2516
        %v3035 = vunpack.c.l.b16 %v2517
        %v3036 = vunpack.c.l.b16 %v2518
        %v3037 = vunpack.c.h.b16 %v2518
        %v3038 = vunpack.c.l.b16 %v2519
        %v3039 = vunpack.c.h.b16 %v2519
        %v3040 = vunpack.c.l.b16 %v2520
        %v3041 = vunpack.c.h.b16 %v2520
        %v3042 = vunpack.c.l.b16 %v2521
        %v3043 = vunpack.c.l.b16 %v2522
        %v3044 = vunpack.c.h.b16 %v2522
        %v3045 = vunpack.c.l.b16 %v2523
        %v3046 = vunpack.c.h.b16 %v2523
        %v3047 = vunpack.c.l.b16 %v2524
        %v3048 = vunpack.c.h.b16 %v2524
        %v3049 = vunpack.c.l.b16 %v2525
        %v3050 = vunpack.c.l.b16 %v2526
        %v3051 = vunpack.c.h.b16 %v2526
        %v3052 = vunpack.c.l.b16 %v2527
        %v3053 = vunpack.c.h.b16 %v2527
        %v3054 = vunpack.c.l.b16 %v2528
        %v3055 = vunpack.c.h.b16 %v2528
        %v3056 = vunpack.c.l.b16 %v2529
        %v3057 = vunpack.c.l.b16 %v2530
        %v3058 = vunpack.c.h.b16 %v2530
        %v3059 = vunpack.c.l.b16 %v2531
        %v3060 = vunpack.c.h.b16 %v2531
        %v3061 = vunpack.c.l.b16 %v2532
        %v3062 = vunpack.c.h.b16 %v2532
        %v3063 = vunpack.c.l.b16 %v2533
        %v3064 = vunpack.c.l.b16 %v2534
        %v3065 = vunpack.c.h.b16 %v2534
        %v3066 = vunpack.c.l.b16 %v2535
        %v3067 = vunpack.c.h.b16 %v2535
        %v3068 = vunpack.c.l.b16 %v2536
        %v3069 = vunpack.c.h.b16 %v2536
        %v3070 = vunpack.c.l.b16 %v2537
        %v3071 = vunpack.c.l.b16 %v2538
        %v3072 = vunpack.c.h.b16 %v2538
        %v3073 = vunpack.c.l.b16 %v2539
        %v3074 = vunpack.c.h.b16 %v2539
        %v3075 = vunpack.c.l.b16 %v2540
        %v3076 = vunpack.c.h.b16 %v2540
        %v3077 = vunpack.c.l.b16 %v2541
        %v3078 = vunpack.c.l.b16 %v2542
        %v3079 = vunpack.c.h.b16 %v2542
        %v3080 = vunpack.c.l.b16 %v2543
        %v3081 = vunpack.c.h.b16 %v2543
        %v3082 = vunpack.c.l.b16 %v2544
        %v3083 = vunpack.c.h.b16 %v2544
        %v3084 = vunpack.c.l.b16 %v2545
        %v3085 = vunpack.c.l.b16 %v2546
        %v3086 = vunpack.c.h.b16 %v2546
        %v3087 = vunpack.c.l.b16 %v2547
        %v3088 = vunpack.c.h.b16 %v2547
        %v3089 = vunpack.c.l.b16 %v2548
        %v3090 = vunpack.c.h.b16 %v2548
        %v3091 = vunpack.c.l.b16 %v2549
        %v3092 = vunpack.c.l.b16 %v2550
        %v3093 = vunpack.c.h.b16 %v2550
        %v3094 = vunpack.c.l.b16 %v2551
        %v3095 = vunpack.c.h.b16 %v2551
        %v3096 = vunpack.c.l.b16 %v2552
        %v3097 = vunpack.c.h.b16 %v2552
        %v3098 = vunpack.c.l.b16 %v2553
        %v3099 = vunpack.c.l.b16 %v2554
        %v3100 = vunpack.c.h.b16 %v2554
        %v3101 = vunpack.c.l.b16 %v2555
        %v3102 = vunpack.c.h.b16 %v2555
        %v3103 = vunpack.c.l.b16 %v2556
        %v3104 = vunpack.c.h.b16 %v2556
        %v3105 = vunpack.c.l.b16 %v2557
        %v3106 = vunpack.c.l.b16 %v2558
        %v3107 = vunpack.c.h.b16 %v2558
        %v3108 = vunpack.c.l.b16 %v2559
        %v3109 = vunpack.c.h.b16 %v2559
        %v3110 = vunpack.c.l.b16 %v2560
        %v3111 = vunpack.c.h.b16 %v2560
        %v3112 = vunpack.c.l.b16 %v2561
        %v3113 = vunpack.c.l.b16 %v2562
        %v3114 = vunpack.c.h.b16 %v2562
        %v3115 = vunpack.c.l.b16 %v2563
        %v3116 = vunpack.c.h.b16 %v2563
        %v3117 = vunpack.c.l.b16 %v2564
        %v3118 = vunpack.c.h.b16 %v2564
        %v3119 = vunpack.c.l.b16 %v2565
        %v3120 = vunpack.c.l.b16 %v2566
        %v3121 = vunpack.c.h.b16 %v2566
        %v3122 = vunpack.c.l.b16 %v2567
        %v3123 = vunpack.c.h.b16 %v2567
        %v3124 = vunpack.c.l.b16 %v2568
        %v3125 = vunpack.c.h.b16 %v2568
        %v3126 = vunpack.c.l.b16 %v2569
        %v3127 = vunpack.c.l.b16 %v2570
        %v3128 = vunpack.c.h.b16 %v2570
        %v3129 = vunpack.c.l.b16 %v2571
        %v3130 = vunpack.c.h.b16 %v2571
        %v3131 = vunpack.c.l.b16 %v2572
        %v3132 = vunpack.c.h.b16 %v2572
        %v3133 = vunpack.c.l.b16 %v2573
        %v3134 = vunpack.c.l.b16 %v2574
        %v3135 = vunpack.c.h.b16 %v2574
        %v3136 = vunpack.c.l.b16 %v2575
        %v3137 = vunpack.c.h.b16 %v2575
        %v3138 = vunpack.c.l.b16 %v2576
        %v3139 = vunpack.c.h.b16 %v2576
        %v3140 = vunpack.c.l.b16 %v2577
        %v3141 = vunpack.c.l.b16 %v2578
        %v3142 = vunpack.c.h.b16 %v2578
        %v3143 = vunpack.c.l.b16 %v2579
        %v3144 = vunpack.c.h.b16 %v2579
        %v3145 = vunpack.c.l.b16 %v2580
        %v3146 = vunpack.c.h.b16 %v2580
        %v3147 = vunpack.c.l.b16 %v2581
        %v3148 = vpack.c.b16 %v2805, %v2798
        %v3149 = vpack.c.b16 %v2806, %v2799
        %v3150 = vpack.c.b16 %v2807, %v2800
        %v3151 = vpack.c.b16 %v2808, %v2801
        %v3152 = vpack.c.b16 %v2809, %v2802
        %v3153 = vpack.c.b16 %v2810, %v2803
        %v3154 = vpack.c.b16 %v2811, %v2804
        %v3155 = vpack.c.b16 %v2819, %v2812
        %v3156 = vpack.c.b16 %v2820, %v2813
        %v3157 = vpack.c.b16 %v2821, %v2814
        %v3158 = vpack.c.b16 %v2822, %v2815
        %v3159 = vpack.c.b16 %v2823, %v2816
        %v3160 = vpack.c.b16 %v2824, %v2817
        %v3161 = vpack.c.b16 %v2825, %v2818
        %v3162 = vpack.c.b16 %v2833, %v2826
        %v3163 = vpack.c.b16 %v2834, %v2827
        %v3164 = vpack.c.b16 %v2835, %v2828
        %v3165 = vpack.c.b16 %v2836, %v2829
        %v3166 = vpack.c.b16 %v2837, %v2830
        %v3167 = vpack.c.b16 %v2838, %v2831
        %v3168 = vpack.c.b16 %v2839, %v2832
        %v3169 = vpack.c.b16 %v2847, %v2840
        %v3170 = vpack.c.b16 %v2848, %v2841
        %v3171 = vpack.c.b16 %v2849, %v2842
        %v3172 = vpack.c.b16 %v2850, %v2843
        %v3173 = vpack.c.b16 %v2851, %v2844
        %v3174 = vpack.c.b16 %v2852, %v2845
        %v3175 = vpack.c.b16 %v2853, %v2846
        %v3176 = vpack.c.b16 %v2861, %v2854
        %v3177 = vpack.c.b16 %v2862, %v2855
        %v3178 = vpack.c.b16 %v2863, %v2856
        %v3179 = vpack.c.b16 %v2864, %v2857
        %v3180 = vpack.c.b16 %v2865, %v2858
        %v3181 = vpack.c.b16 %v2866, %v2859
        %v3182 = vpack.c.b16 %v2867, %v2860
        %v3183 = vpack.c.b16 %v2875, %v2868
        %v3184 = vpack.c.b16 %v2876, %v2869
        %v3185 = vpack.c.b16 %v2877, %v2870
        %v3186 = vpack.c.b16 %v2878, %v2871
        %v3187 = vpack.c.b16 %v2879, %v2872
        %v3188 = vpack.c.b16 %v2880, %v2873
        %v3189 = vpack.c.b16 %v2881, %v2874
        %v3190 = vpack.c.b16 %v2889, %v2882
        %v3191 = vpack.c.b16 %v2890, %v2883
        %v3192 = vpack.c.b16 %v2891, %v2884
        %v3193 = vpack.c.b16 %v2892, %v2885
        %v3194 = vpack.c.b16 %v2893, %v2886
        %v3195 = vpack.c.b16 %v2894, %v2887
        %v3196 = vpack.c.b16 %v2895, %v2888
        %v3197 = vpack.c.b16 %v2903, %v2896
        %v3198 = vpack.c.b16 %v2904, %v2897
        %v3199 = vpack.c.b16 %v2905, %v2898
        %v3200 = vpack.c.b16 %v2906, %v2899
        %v3201 = vpack.c.b16 %v2907, %v2900
        %v3202 = vpack.c.b16 %v2908, %v2901
        %v3203 = vpack.c.b16 %v2909, %v2902
        %v3204 = vpack.c.b16 %v2917, %v2910
        %v3205 = vpack.c.b16 %v2918, %v2911
        %v3206 = vpack.c.b16 %v2919, %v2912
        %v3207 = vpack.c.b16 %v2920, %v2913
        %v3208 = vpack.c.b16 %v2921, %v2914
        %v3209 = vpack.c.b16 %v2922, %v2915
        %v3210 = vpack.c.b16 %v2923, %v2916
        %v3211 = vpack.c.b16 %v2931, %v2924
        %v3212 = vpack.c.b16 %v2932, %v2925
        %v3213 = vpack.c.b16 %v2933, %v2926
        %v3214 = vpack.c.b16 %v2934, %v2927
        %v3215 = vpack.c.b16 %v2935, %v2928
        %v3216 = vpack.c.b16 %v2936, %v2929
        %v3217 = vpack.c.b16 %v2937, %v2930
        %v3218 = vpack.c.b16 %v2945, %v2938
        %v3219 = vpack.c.b16 %v2946, %v2939
        %v3220 = vpack.c.b16 %v2947, %v2940
        %v3221 = vpack.c.b16 %v2948, %v2941
        %v3222 = vpack.c.b16 %v2949, %v2942
        %v3223 = vpack.c.b16 %v2950, %v2943
        %v3224 = vpack.c.b16 %v2951, %v2944
        %v3225 = vpack.c.b16 %v2959, %v2952
        %v3226 = vpack.c.b16 %v2960, %v2953
        %v3227 = vpack.c.b16 %v2961, %v2954
        %v3228 = vpack.c.b16 %v2962, %v2955
        %v3229 = vpack.c.b16 %v2963, %v2956
        %v3230 = vpack.c.b16 %v2964, %v2957
        %v3231 = vpack.c.b16 %v2965, %v2958
        %v3232 = vpack.c.b16 %v2973, %v2966
        %v3233 = vpack.c.b16 %v2974, %v2967
        %v3234 = vpack.c.b16 %v2975, %v2968
        %v3235 = vpack.c.b16 %v2976, %v2969
        %v3236 = vpack.c.b16 %v2977, %v2970
        %v3237 = vpack.c.b16 %v2978, %v2971
        %v3238 = vpack.c.b16 %v2979, %v2972
        %v3239 = vpack.c.b16 %v2987, %v2980
        %v3240 = vpack.c.b16 %v2988, %v2981
        %v3241 = vpack.c.b16 %v2989, %v2982
        %v3242 = vpack.c.b16 %v2990, %v2983
        %v3243 = vpack.c.b16 %v2991, %v2984
        %v3244 = vpack.c.b16 %v2992, %v2985
        %v3245 = vpack.c.b16 %v2993, %v2986
        %v3246 = vpack.c.b16 %v3001, %v2994
        %v3247 = vpack.c.b16 %v3002, %v2995
        %v3248 = vpack.c.b16 %v3003, %v2996
        %v3249 = vpack.c.b16 %v3004, %v2997
        %v3250 = vpack.c.b16 %v3005, %v2998
        %v3251 = vpack.c.b16 %v3006, %v2999
        %v3252 = vpack.c.b16 %v3007, %v3000
        %v3253 = vpack.c.b16 %v3015, %v3008
        %v3254 = vpack.c.b16 %v3016, %v3009
        %v3255 = vpack.c.b16 %v3017, %v3010
        %v3256 = vpack.c.b16 %v3018, %v3011
        %v3257 = vpack.c.b16 %v3019, %v3012
        %v3258 = vpack.c.b16 %v3020, %v3013
        %v3259 = vpack.c.b16 %v3021, %v3014
        %v3260 = vpack.c.b16 %v3029, %v3022
        %v3261 = vpack.c.b16 %v3030, %v3023
        %v3262 = vpack.c.b16 %v3031, %v3024
        %v3263 = vpack.c.b16 %v3032, %v3025
        %v3264 = vpack.c.b16 %v3033, %v3026
        %v3265 = vpack.c.b16 %v3034, %v3027
        %v3266 = vpack.c.b16 %v3035, %v3028
        %v3267 = vpack.c.b16 %v3043, %v3036
        %v3268 = vpack.c.b16 %v3044, %v3037
        %v3269 = vpack.c.b16 %v3045, %v3038
        %v3270 = vpack.c.b16 %v3046, %v3039
        %v3271 = vpack.c.b16 %v3047, %v3040
        %v3272 = vpack.c.b16 %v3048, %v3041
        %v3273 = vpack.c.b16 %v3049, %v3042
        %v3274 = vpack.c.b16 %v3057, %v3050
        %v3275 = vpack.c.b16 %v3058, %v3051
        %v3276 = vpack.c.b16 %v3059, %v3052
        %v3277 = vpack.c.b16 %v3060, %v3053
        %v3278 = vpack.c.b16 %v3061, %v3054
        %v3279 = vpack.c.b16 %v3062, %v3055
        %v3280 = vpack.c.b16 %v3063, %v3056
        %v3281 = vpack.c.b16 %v3071, %v3064
        %v3282 = vpack.c.b16 %v3072, %v3065
        %v3283 = vpack.c.b16 %v3073, %v3066
        %v3284 = vpack.c.b16 %v3074, %v3067
        %v3285 = vpack.c.b16 %v3075, %v3068
        %v3286 = vpack.c.b16 %v3076, %v3069
        %v3287 = vpack.c.b16 %v3077, %v3070
        %v3288 = vpack.c.b16 %v3085, %v3078
        %v3289 = vpack.c.b16 %v3086, %v3079
        %v3290 = vpack.c.b16 %v3087, %v3080
        %v3291 = vpack.c.b16 %v3088, %v3081
        %v3292 = vpack.c.b16 %v3089, %v3082
        %v3293 = vpack.c.b16 %v3090, %v3083
        %v3294 = vpack.c.b16 %v3091, %v3084
        %v3295 = vpack.c.b16 %v3099, %v3092
        %v3296 = vpack.c.b16 %v3100, %v3093
        %v3297 = vpack.c.b16 %v3101, %v3094
        %v3298 = vpack.c.b16 %v3102, %v3095
        %v3299 = vpack.c.b16 %v3103, %v3096
        %v3300 = vpack.c.b16 %v3104, %v3097
        %v3301 = vpack.c.b16 %v3105, %v3098
        %v3302 = vpack.c.b16 %v3113, %v3106
        %v3303 = vpack.c.b16 %v3114, %v3107
        %v3304 = vpack.c.b16 %v3115, %v3108
        %v3305 = vpack.c.b16 %v3116, %v3109
        %v3306 = vpack.c.b16 %v3117, %v3110
        %v3307 = vpack.c.b16 %v3118, %v3111
        %v3308 = vpack.c.b16 %v3119, %v3112
        %v3309 = vpack.c.b16 %v3127, %v3120
        %v3310 = vpack.c.b16 %v3128, %v3121
        %v3311 = vpack.c.b16 %v3129, %v3122
        %v3312 = vpack.c.b16 %v3130, %v3123
        %v3313 = vpack.c.b16 %v3131, %v3124
        %v3314 = vpack.c.b16 %v3132, %v3125
        %v3315 = vpack.c.b16 %v3133, %v3126
        %v3316 = vpack.c.b16 %v3141, %v3134
        %v3317 = vpack.c.b16 %v3142, %v3135
        %v3318 = vpack.c.b16 %v3143, %v3136
        %v3319 = vpack.c.b16 %v3144, %v3137
        %v3320 = vpack.c.b16 %v3145, %v3138
        %v3321 = vpack.c.b16 %v3146, %v3139
        %v3322 = vpack.c.b16 %v3147, %v3140
        %v3499 = vsel %vm1614, %v2381, 0
        %3501 = vmatpush.bf16.msra.mxu0 %v3197
        %3502 = vmatpush.bf16.msra.mxu0 %v3190
        %3503 = vmatpush.bf16.msra.mxu0 %v3183
        %3504 = vmatpush.bf16.msra.mxu0 %v3176
        %3505 = vmatpush.bf16.msra.mxu0 %v3169
        %3506 = vmatpush.bf16.msra.mxu0 %v3162
        %3507 = vmatpush.bf16.msra.mxu0 %v3155
        %3508 = vmatpush.bf16.msra.mxu0 %v3148
        %3509 = vmatmul.bf16.gmra.mxu0 %v2378
        %v3510 = vpop.f32.mrf.mxu0
        %v3511 = vadd.f32 %v2584, %v3510
        %v3512 = vpop.f32.mrf.mxu0
        %3513 = vdwg.mxu0
        %3514 = vmatpush.bf16.msra.mxu0 %v3253
        %3515 = vmatpush.bf16.msra.mxu0 %v3246
        %3516 = vmatpush.bf16.msra.mxu0 %v3239
        %3517 = vmatpush.bf16.msra.mxu0 %v3232
        %3518 = vmatpush.bf16.msra.mxu0 %v3225
        %3519 = vmatpush.bf16.msra.mxu0 %v3218
        %3520 = vmatpush.bf16.msra.mxu0 %v3211
        %3521 = vmatpush.bf16.msra.mxu0 %v3204
        %3522 = vmatmul.bf16.gmra.mxu0 %v2379
        %v3523 = vpop.f32.mrf.mxu0
        %v3524 = vadd.f32 %v3511, %v3523
        %v3525 = vpop.f32.mrf.mxu0
        %3526 = vdwg.mxu0
        %3527 = vmatpush.bf16.msra.mxu0 %v3309
        %3528 = vmatpush.bf16.msra.mxu0 %v3302
        %3529 = vmatpush.bf16.msra.mxu0 %v3295
        %3530 = vmatpush.bf16.msra.mxu0 %v3288
        %3531 = vmatpush.bf16.msra.mxu0 %v3281
        %3532 = vmatpush.bf16.msra.mxu0 %v3274
        %3533 = vmatpush.bf16.msra.mxu0 %v3267
        %3534 = vmatpush.bf16.msra.mxu0 %v3260
        %3535 = vmatmul.bf16.gmra.mxu0 %v2380
        %v3536 = vpop.f32.mrf.mxu0
        %v3537 = vadd.f32 %v3524, %v3536
        %v3538 = vpop.f32.mrf.mxu0
        %3539 = vdwg.mxu0
        %3540 = vmatpush.bf16.msra.mxu0 0
        %3541 = vmatpush.bf16.msra.mxu0 0
        %3542 = vmatpush.bf16.msra.mxu0 0
        %3543 = vmatpush.bf16.msra.mxu0 0
        %3544 = vmatpush.bf16.msra.mxu0 0
        %3545 = vmatpush.bf16.msra.mxu0 0
        %3546 = vmatpush.bf16.msra.mxu0 0
        %3547 = vmatpush.bf16.msra.mxu0 %v3316
        %3548 = vmatmul.bf16.gmra.mxu0 %v3499
        %v3549 = vpop.f32.mrf.mxu0
        %v3550 = vadd.f32 %v3537, %v3549
        %v3551 = vpop.f32.mrf.mxu0
        %3552 = vdwg.mxu0
        %3553 = vmatpush.bf16.msra.mxu0 %v3198
        %3554 = vmatpush.bf16.msra.mxu0 %v3191
        %3555 = vmatpush.bf16.msra.mxu0 %v3184
        %3556 = vmatpush.bf16.msra.mxu0 %v3177
        %3557 = vmatpush.bf16.msra.mxu0 %v3170
        %3558 = vmatpush.bf16.msra.mxu0 %v3163
        %3559 = vmatpush.bf16.msra.mxu0 %v3156
        %3560 = vmatpush.bf16.msra.mxu0 %v3149
        %3561 = vmatmul.bf16.gmra.mxu0 %v2378
        %v3562 = vpop.f32.mrf.mxu0
        %v3563 = vadd.f32 %v2585, %v3562
        %v3564 = vpop.f32.mrf.mxu0
        %3565 = vdwg.mxu0
        %3566 = vmatpush.bf16.msra.mxu0 %v3254
        %3567 = vmatpush.bf16.msra.mxu0 %v3247
        %3568 = vmatpush.bf16.msra.mxu0 %v3240
        %3569 = vmatpush.bf16.msra.mxu0 %v3233
        %3570 = vmatpush.bf16.msra.mxu0 %v3226
        %3571 = vmatpush.bf16.msra.mxu0 %v3219
        %3572 = vmatpush.bf16.msra.mxu0 %v3212
        %3573 = vmatpush.bf16.msra.mxu0 %v3205
        %3574 = vmatmul.bf16.gmra.mxu0 %v2379
        %v3575 = vpop.f32.mrf.mxu0
        %v3576 = vadd.f32 %v3563, %v3575
        %v3577 = vpop.f32.mrf.mxu0
        %3578 = vdwg.mxu0
        %3579 = vmatpush.bf16.msra.mxu0 %v3310
        %3580 = vmatpush.bf16.msra.mxu0 %v3303
        %3581 = vmatpush.bf16.msra.mxu0 %v3296
        %3582 = vmatpush.bf16.msra.mxu0 %v3289
        %3583 = vmatpush.bf16.msra.mxu0 %v3282
        %3584 = vmatpush.bf16.msra.mxu0 %v3275
        %3585 = vmatpush.bf16.msra.mxu0 %v3268
        %3586 = vmatpush.bf16.msra.mxu0 %v3261
        %3587 = vmatmul.bf16.gmra.mxu0 %v2380
        %v3588 = vpop.f32.mrf.mxu0
        %v3589 = vadd.f32 %v3576, %v3588
        %v3590 = vpop.f32.mrf.mxu0
        %3591 = vdwg.mxu0
        %3592 = vmatpush.bf16.msra.mxu0 0
        %3593 = vmatpush.bf16.msra.mxu0 0
        %3594 = vmatpush.bf16.msra.mxu0 0
        %3595 = vmatpush.bf16.msra.mxu0 0
        %3596 = vmatpush.bf16.msra.mxu0 0
        %3597 = vmatpush.bf16.msra.mxu0 0
        %3598 = vmatpush.bf16.msra.mxu0 0
        %3599 = vmatpush.bf16.msra.mxu0 %v3317
        %3600 = vmatmul.bf16.gmra.mxu0 %v3499
        %v3601 = vpop.f32.mrf.mxu0
        %v3602 = vadd.f32 %v3589, %v3601
        %v3603 = vpop.f32.mrf.mxu0
        %3604 = vdwg.mxu0
        %3605 = vmatpush.bf16.msra.mxu0 %v3199
        %3606 = vmatpush.bf16.msra.mxu0 %v3192
        %3607 = vmatpush.bf16.msra.mxu0 %v3185
        %3608 = vmatpush.bf16.msra.mxu0 %v3178
        %3609 = vmatpush.bf16.msra.mxu0 %v3171
        %3610 = vmatpush.bf16.msra.mxu0 %v3164
        %3611 = vmatpush.bf16.msra.mxu0 %v3157
        %3612 = vmatpush.bf16.msra.mxu0 %v3150
        %3613 = vmatmul.bf16.gmra.mxu0 %v2378
        %v3614 = vpop.f32.mrf.mxu0
        %v3615 = vadd.f32 %v2586, %v3614
        %v3616 = vpop.f32.mrf.mxu0
        %3617 = vdwg.mxu0
        %3618 = vmatpush.bf16.msra.mxu0 %v3255
        %3619 = vmatpush.bf16.msra.mxu0 %v3248
        %3620 = vmatpush.bf16.msra.mxu0 %v3241
        %3621 = vmatpush.bf16.msra.mxu0 %v3234
        %3622 = vmatpush.bf16.msra.mxu0 %v3227
        %3623 = vmatpush.bf16.msra.mxu0 %v3220
        %3624 = vmatpush.bf16.msra.mxu0 %v3213
        %3625 = vmatpush.bf16.msra.mxu0 %v3206
        %3626 = vmatmul.bf16.gmra.mxu0 %v2379
        %v3627 = vpop.f32.mrf.mxu0
        %v3628 = vadd.f32 %v3615, %v3627
        %v3629 = vpop.f32.mrf.mxu0
        %3630 = vdwg.mxu0
        %3631 = vmatpush.bf16.msra.mxu0 %v3311
        %3632 = vmatpush.bf16.msra.mxu0 %v3304
        %3633 = vmatpush.bf16.msra.mxu0 %v3297
        %3634 = vmatpush.bf16.msra.mxu0 %v3290
        %3635 = vmatpush.bf16.msra.mxu0 %v3283
        %3636 = vmatpush.bf16.msra.mxu0 %v3276
        %3637 = vmatpush.bf16.msra.mxu0 %v3269
        %3638 = vmatpush.bf16.msra.mxu0 %v3262
        %3639 = vmatmul.bf16.gmra.mxu0 %v2380
        %v3640 = vpop.f32.mrf.mxu0
        %v3641 = vadd.f32 %v3628, %v3640
        %v3642 = vpop.f32.mrf.mxu0
        %3643 = vdwg.mxu0
        %3644 = vmatpush.bf16.msra.mxu0 0
        %3645 = vmatpush.bf16.msra.mxu0 0
        %3646 = vmatpush.bf16.msra.mxu0 0
        %3647 = vmatpush.bf16.msra.mxu0 0
        %3648 = vmatpush.bf16.msra.mxu0 0
        %3649 = vmatpush.bf16.msra.mxu0 0
        %3650 = vmatpush.bf16.msra.mxu0 0
        %3651 = vmatpush.bf16.msra.mxu0 %v3318
        %3652 = vmatmul.bf16.gmra.mxu0 %v3499
        %v3653 = vpop.f32.mrf.mxu0
        %v3654 = vadd.f32 %v3641, %v3653
        %v3655 = vpop.f32.mrf.mxu0
        %3656 = vdwg.mxu0
        %3657 = vmatpush.bf16.msra.mxu0 %v3200
        %3658 = vmatpush.bf16.msra.mxu0 %v3193
        %3659 = vmatpush.bf16.msra.mxu0 %v3186
        %3660 = vmatpush.bf16.msra.mxu0 %v3179
        %3661 = vmatpush.bf16.msra.mxu0 %v3172
        %3662 = vmatpush.bf16.msra.mxu0 %v3165
        %3663 = vmatpush.bf16.msra.mxu0 %v3158
        %3664 = vmatpush.bf16.msra.mxu0 %v3151
        %3665 = vmatmul.bf16.gmra.mxu0 %v2378
        %v3666 = vpop.f32.mrf.mxu0
        %v3667 = vadd.f32 %v2587, %v3666
        %v3668 = vpop.f32.mrf.mxu0
        %3669 = vdwg.mxu0
        %3670 = vmatpush.bf16.msra.mxu0 %v3256
        %3671 = vmatpush.bf16.msra.mxu0 %v3249
        %3672 = vmatpush.bf16.msra.mxu0 %v3242
        %3673 = vmatpush.bf16.msra.mxu0 %v3235
        %3674 = vmatpush.bf16.msra.mxu0 %v3228
        %3675 = vmatpush.bf16.msra.mxu0 %v3221
        %3676 = vmatpush.bf16.msra.mxu0 %v3214
        %3677 = vmatpush.bf16.msra.mxu0 %v3207
        %3678 = vmatmul.bf16.gmra.mxu0 %v2379
        %v3679 = vpop.f32.mrf.mxu0
        %v3680 = vadd.f32 %v3667, %v3679
        %v3681 = vpop.f32.mrf.mxu0
        %3682 = vdwg.mxu0
        %3683 = vmatpush.bf16.msra.mxu0 %v3312
        %3684 = vmatpush.bf16.msra.mxu0 %v3305
        %3685 = vmatpush.bf16.msra.mxu0 %v3298
        %3686 = vmatpush.bf16.msra.mxu0 %v3291
        %3687 = vmatpush.bf16.msra.mxu0 %v3284
        %3688 = vmatpush.bf16.msra.mxu0 %v3277
        %3689 = vmatpush.bf16.msra.mxu0 %v3270
        %3690 = vmatpush.bf16.msra.mxu0 %v3263
        %3691 = vmatmul.bf16.gmra.mxu0 %v2380
        %v3692 = vpop.f32.mrf.mxu0
        %v3693 = vadd.f32 %v3680, %v3692
        %v3694 = vpop.f32.mrf.mxu0
        %3695 = vdwg.mxu0
        %3696 = vmatpush.bf16.msra.mxu0 0
        %3697 = vmatpush.bf16.msra.mxu0 0
        %3698 = vmatpush.bf16.msra.mxu0 0
        %3699 = vmatpush.bf16.msra.mxu0 0
        %3700 = vmatpush.bf16.msra.mxu0 0
        %3701 = vmatpush.bf16.msra.mxu0 0
        %3702 = vmatpush.bf16.msra.mxu0 0
        %3703 = vmatpush.bf16.msra.mxu0 %v3319
        %3704 = vmatmul.bf16.gmra.mxu0 %v3499
        %v3705 = vpop.f32.mrf.mxu0
        %v3706 = vadd.f32 %v3693, %v3705
        %v3707 = vpop.f32.mrf.mxu0
        %3708 = vdwg.mxu0
        %3709 = vmatpush.bf16.msra.mxu0 %v3201
        %3710 = vmatpush.bf16.msra.mxu0 %v3194
        %3711 = vmatpush.bf16.msra.mxu0 %v3187
        %3712 = vmatpush.bf16.msra.mxu0 %v3180
        %3713 = vmatpush.bf16.msra.mxu0 %v3173
        %3714 = vmatpush.bf16.msra.mxu0 %v3166
        %3715 = vmatpush.bf16.msra.mxu0 %v3159
        %3716 = vmatpush.bf16.msra.mxu0 %v3152
        %3717 = vmatmul.bf16.gmra.mxu0 %v2378
        %v3718 = vpop.f32.mrf.mxu0
        %v3719 = vadd.f32 %v2588, %v3718
        %v3720 = vpop.f32.mrf.mxu0
        %3721 = vdwg.mxu0
        %3722 = vmatpush.bf16.msra.mxu0 %v3257
        %3723 = vmatpush.bf16.msra.mxu0 %v3250
        %3724 = vmatpush.bf16.msra.mxu0 %v3243
        %3725 = vmatpush.bf16.msra.mxu0 %v3236
        %3726 = vmatpush.bf16.msra.mxu0 %v3229
        %3727 = vmatpush.bf16.msra.mxu0 %v3222
        %3728 = vmatpush.bf16.msra.mxu0 %v3215
        %3729 = vmatpush.bf16.msra.mxu0 %v3208
        %3730 = vmatmul.bf16.gmra.mxu0 %v2379
        %v3731 = vpop.f32.mrf.mxu0
        %v3732 = vadd.f32 %v3719, %v3731
        %v3733 = vpop.f32.mrf.mxu0
        %3734 = vdwg.mxu0
        %3735 = vmatpush.bf16.msra.mxu0 %v3313
        %3736 = vmatpush.bf16.msra.mxu0 %v3306
        %3737 = vmatpush.bf16.msra.mxu0 %v3299
        %3738 = vmatpush.bf16.msra.mxu0 %v3292
        %3739 = vmatpush.bf16.msra.mxu0 %v3285
        %3740 = vmatpush.bf16.msra.mxu0 %v3278
        %3741 = vmatpush.bf16.msra.mxu0 %v3271
        %3742 = vmatpush.bf16.msra.mxu0 %v3264
        %3743 = vmatmul.bf16.gmra.mxu0 %v2380
        %v3744 = vpop.f32.mrf.mxu0
        %v3745 = vadd.f32 %v3732, %v3744
        %v3746 = vpop.f32.mrf.mxu0
        %3747 = vdwg.mxu0
        %3748 = vmatpush.bf16.msra.mxu0 0
        %3749 = vmatpush.bf16.msra.mxu0 0
        %3750 = vmatpush.bf16.msra.mxu0 0
        %3751 = vmatpush.bf16.msra.mxu0 0
        %3752 = vmatpush.bf16.msra.mxu0 0
        %3753 = vmatpush.bf16.msra.mxu0 0
        %3754 = vmatpush.bf16.msra.mxu0 0
        %3755 = vmatpush.bf16.msra.mxu0 %v3320
        %3756 = vmatmul.bf16.gmra.mxu0 %v3499
        %v3757 = vpop.f32.mrf.mxu0
        %v3758 = vadd.f32 %v3745, %v3757
        %v3759 = vpop.f32.mrf.mxu0
        %3760 = vdwg.mxu0
        %3761 = vmatpush.bf16.msra.mxu0 %v3202
        %3762 = vmatpush.bf16.msra.mxu0 %v3195
        %3763 = vmatpush.bf16.msra.mxu0 %v3188
        %3764 = vmatpush.bf16.msra.mxu0 %v3181
        %3765 = vmatpush.bf16.msra.mxu0 %v3174
        %3766 = vmatpush.bf16.msra.mxu0 %v3167
        %3767 = vmatpush.bf16.msra.mxu0 %v3160
        %3768 = vmatpush.bf16.msra.mxu0 %v3153
        %3769 = vmatmul.bf16.gmra.mxu0 %v2378
        %v3770 = vpop.f32.mrf.mxu0
        %v3771 = vadd.f32 %v2589, %v3770
        %v3772 = vpop.f32.mrf.mxu0
        %3773 = vdwg.mxu0
        %3774 = vmatpush.bf16.msra.mxu0 %v3258
        %3775 = vmatpush.bf16.msra.mxu0 %v3251
        %3776 = vmatpush.bf16.msra.mxu0 %v3244
        %3777 = vmatpush.bf16.msra.mxu0 %v3237
        %3778 = vmatpush.bf16.msra.mxu0 %v3230
        %3779 = vmatpush.bf16.msra.mxu0 %v3223
        %3780 = vmatpush.bf16.msra.mxu0 %v3216
        %3781 = vmatpush.bf16.msra.mxu0 %v3209
        %3782 = vmatmul.bf16.gmra.mxu0 %v2379
        %v3783 = vpop.f32.mrf.mxu0
        %v3784 = vadd.f32 %v3771, %v3783
        %v3785 = vpop.f32.mrf.mxu0
        %3786 = vdwg.mxu0
        %3787 = vmatpush.bf16.msra.mxu0 %v3314
        %3788 = vmatpush.bf16.msra.mxu0 %v3307
        %3789 = vmatpush.bf16.msra.mxu0 %v3300
        %3790 = vmatpush.bf16.msra.mxu0 %v3293
        %3791 = vmatpush.bf16.msra.mxu0 %v3286
        %3792 = vmatpush.bf16.msra.mxu0 %v3279
        %3793 = vmatpush.bf16.msra.mxu0 %v3272
        %3794 = vmatpush.bf16.msra.mxu0 %v3265
        %3795 = vmatmul.bf16.gmra.mxu0 %v2380
        %v3796 = vpop.f32.mrf.mxu0
        %v3797 = vadd.f32 %v3784, %v3796
        %v3798 = vpop.f32.mrf.mxu0
        %3799 = vdwg.mxu0
        %3800 = vmatpush.bf16.msra.mxu0 0
        %3801 = vmatpush.bf16.msra.mxu0 0
        %3802 = vmatpush.bf16.msra.mxu0 0
        %3803 = vmatpush.bf16.msra.mxu0 0
        %3804 = vmatpush.bf16.msra.mxu0 0
        %3805 = vmatpush.bf16.msra.mxu0 0
        %3806 = vmatpush.bf16.msra.mxu0 0
        %3807 = vmatpush.bf16.msra.mxu0 %v3321
        %3808 = vmatmul.bf16.gmra.mxu0 %v3499
        %v3809 = vpop.f32.mrf.mxu0
        %v3810 = vadd.f32 %v3797, %v3809
        %v3811 = vpop.f32.mrf.mxu0
        %3812 = vdwg.mxu0
        %3813 = vmatpush.bf16.msra.mxu0 %v3203
        %3814 = vmatpush.bf16.msra.mxu0 %v3196
        %3815 = vmatpush.bf16.msra.mxu0 %v3189
        %3816 = vmatpush.bf16.msra.mxu0 %v3182
        %3817 = vmatpush.bf16.msra.mxu0 %v3175
        %3818 = vmatpush.bf16.msra.mxu0 %v3168
        %3819 = vmatpush.bf16.msra.mxu0 %v3161
        %3820 = vmatpush.bf16.msra.mxu0 %v3154
        %3821 = vmatmul.bf16.gmra.mxu0 %v2378
        %v3822 = vpop.f32.mrf.mxu0
        %v3823 = vadd.f32 %v2590, %v3822
        %v3824 = vpop.f32.mrf.mxu0
        %3825 = vdwg.mxu0
        %3826 = vmatpush.bf16.msra.mxu0 %v3259
        %3827 = vmatpush.bf16.msra.mxu0 %v3252
        %3828 = vmatpush.bf16.msra.mxu0 %v3245
        %3829 = vmatpush.bf16.msra.mxu0 %v3238
        %3830 = vmatpush.bf16.msra.mxu0 %v3231
        %3831 = vmatpush.bf16.msra.mxu0 %v3224
        %3832 = vmatpush.bf16.msra.mxu0 %v3217
        %3833 = vmatpush.bf16.msra.mxu0 %v3210
        %3834 = vmatmul.bf16.gmra.mxu0 %v2379
        %v3835 = vpop.f32.mrf.mxu0
        %v3836 = vadd.f32 %v3823, %v3835
        %v3837 = vpop.f32.mrf.mxu0
        %3838 = vdwg.mxu0
        %3839 = vmatpush.bf16.msra.mxu0 %v3315
        %3840 = vmatpush.bf16.msra.mxu0 %v3308
        %3841 = vmatpush.bf16.msra.mxu0 %v3301
        %3842 = vmatpush.bf16.msra.mxu0 %v3294
        %3843 = vmatpush.bf16.msra.mxu0 %v3287
        %3844 = vmatpush.bf16.msra.mxu0 %v3280
        %3845 = vmatpush.bf16.msra.mxu0 %v3273
        %3846 = vmatpush.bf16.msra.mxu0 %v3266
        %3847 = vmatmul.bf16.gmra.mxu0 %v2380
        %v3848 = vpop.f32.mrf.mxu0
        %v3849 = vadd.f32 %v3836, %v3848
        %v3850 = vpop.f32.mrf.mxu0
        %3851 = vdwg.mxu0
        %3852 = vmatpush.bf16.msra.mxu0 0
        %3853 = vmatpush.bf16.msra.mxu0 0
        %3854 = vmatpush.bf16.msra.mxu0 0
        %3855 = vmatpush.bf16.msra.mxu0 0
        %3856 = vmatpush.bf16.msra.mxu0 0
        %3857 = vmatpush.bf16.msra.mxu0 0
        %3858 = vmatpush.bf16.msra.mxu0 0
        %3859 = vmatpush.bf16.msra.mxu0 %v3322
        %3860 = vmatmul.bf16.gmra.mxu0 %v3499
        %v3861 = vpop.f32.mrf.mxu0
        %v3862 = vadd.f32 %v3849, %v3861
        %v3863 = vpop.f32.mrf.mxu0
        %3864 = vdwg.mxu0
        %v3865 = vmul.f32 %v3550, 0.5
        %v3866 = vmul.f32 %v3602, 0.5
        %v3867 = vmul.f32 %v3654, 0.5
        %v3868 = vmul.f32 %v3706, 0.5
        %v3869 = vmul.f32 %v3758, 0.5
        %v3870 = vmul.f32 %v3810, 0.5
        %v3871 = vmul.f32 %v3862, 0.5
        %v3872 = vtanh.pop %v3865
        %v3873 = vtanh.pop %v3866
        %v3874 = vtanh.pop %v3867
        %v3875 = vtanh.pop %v3868
        %v3876 = vtanh.pop %v3869
        %v3877 = vtanh.pop %v3870
        %v3878 = vtanh.pop %v3871
        %v3879 = vmul.f32 %v3872, 0.5
        %v3880 = vmul.f32 %v3873, 0.5
        %v3881 = vmul.f32 %v3874, 0.5
        %v3882 = vmul.f32 %v3875, 0.5
        %v3883 = vmul.f32 %v3876, 0.5
        %v3884 = vmul.f32 %v3877, 0.5
        %v3885 = vmul.f32 %v3878, 0.5
        %v3886 = vadd.f32 %v3879, 0.5
        %v3887 = vadd.f32 %v3880, 0.5
        %v3888 = vadd.f32 %v3881, 0.5
        %v3889 = vadd.f32 %v3882, 0.5
        %v3890 = vadd.f32 %v3883, 0.5
        %v3891 = vadd.f32 %v3884, 0.5
        %v3892 = vadd.f32 %v3885, 0.5
        %3893 = vst [vmem:[%s396] sm:$0xff] %v3886
        %3894 = vst [vmem:[%s396 + $0x8] sm:$0xff] %v3887
        %3895 = vst [vmem:[%s396 + $0x10] sm:$0xff] %v3888
        %3896 = vst [vmem:[%s396 + $0x18] sm:$0xff] %v3889
        %3897 = vst [vmem:[%s396 + $0x20] sm:$0xff] %v3890
        %3898 = vst [vmem:[%s396 + $0x28] sm:$0xff] %v3891
        %3899 = vst.msk [vmem:[%s396 + $0x30] sm:$0xff] %vm1614, %v3892
        %s3900 = sand.u32 %s257, 1
        %s3901 = scalar_lea.sflag [#allocation3], %s3900
        %s3902 = sand.u32 %s257, 1
        %s3903 = smul.addr %s3902, 56
        %s3904 = scalar_lea.vmem [#allocation2], %s3903
        %s3905 = sand.u32 %s283, 1
        %s3906 = scalar_lea.sflag [#allocation5], %s3905
        %s3907 = sand.u32 %s283, 1
        %s3908 = smul.addr %s3907, 8
        %s3909 = scalar_lea.vmem [#allocation4], %s3908
        // Predicated region
        $region61: #{tpu_custom_call.1} parent=59 // pred_check
          %p3910 = pneg %p267
        $region62: #{tpu_custom_call.1} parent=59 // pred_check_branch
          %3912 = sbr.rel (%p3910) target = $region64
        $region63: #{tpu_custom_call.1} parent=59 // pred_region
          %3914 = vsyncadd %s3901, 0
          %s3915 = smul.addr %s29, 7
          %s3916 = smul.addr %s3915, 8
          %s3917 = scalar_lea.hbm %s10, %s3916
          %s3919 = sshll.u32 %s3904, 4
          %s3920 = int_to_ptr.vmem [resolvable:$true] %s3919
          %s3921 = sshll.u32 %s3917, 4
          %s3922 = int_to_ptr.hbm [resolvable:$true] %s3921
          %3924 = dma.vmem_to_hbm [thread:$0]  %s3920, 896, %s3922, %s3901
        $region64: #{tpu_custom_call.1} parent=59 // pred_fallthru
          _
        // Predicated region
        $region65: #{tpu_custom_call.1} parent=59 // pred_check
          %p3925 = pneg %p293
        $region66: #{tpu_custom_call.1} parent=59 // pred_check_branch
          %3927 = sbr.rel (%p3925) target = $region68
        $region67: #{tpu_custom_call.1} parent=59 // pred_region
          %3929 = vsyncadd %s3906, 0
          %s3930 = smul.addr %s29, 8
          %s3931 = scalar_lea.hbm %s11, %s3930
          %s3933 = sshll.u32 %s3909, 4
          %s3934 = int_to_ptr.vmem [resolvable:$true] %s3933
          %s3935 = sshll.u32 %s3931, 4
          %s3936 = int_to_ptr.hbm [resolvable:$true] %s3935
          %3938 = dma.vmem_to_hbm [thread:$0]  %s3934, 128, %s3936, %s3906
        $region68: #{tpu_custom_call.1} parent=59 // pred_fallthru
          _
      $region60: #{tpu_custom_call.1} parent=5 // pred_fallthru
        _
      %p3939 = scmp.le.s32.totalorder 2, %s24
      // Predicated region
      $region69: #{tpu_custom_call.1} parent=5 // pred_check
        %p3940 = pneg %p3939
      $region70: #{tpu_custom_call.1} parent=5 // pred_check_branch
        %3942 = sbr.rel (%p3940) target = $region72
      $region71: #{tpu_custom_call.1} parent=5 // pred_region
        %s3943 = ssub.s32 %s24, 2
        // Predicated region
        $region73: #{tpu_custom_call.1} parent=71 // pred_check
          %p3944 = pneg %p273
        $region74: #{tpu_custom_call.1} parent=71 // pred_check_branch
          %3946 = sbr.rel (%p3944) target = $region76
        $region75: #{tpu_custom_call.1} parent=71 // pred_region
          %s3947 = sand.u32 %s258, 1
          %s3948 = scalar_lea.sflag [#allocation3], %s3947
          %s3949 = sand.u32 %s258, 1
          %s3950 = smul.addr %s3949, 56
          %s3951 = scalar_lea.vmem [#allocation2], %s3950
          %3953 = dma.done %s3948, 896
        $region76: #{tpu_custom_call.1} parent=71 // pred_fallthru
          _
        // Predicated region
        $region77: #{tpu_custom_call.1} parent=71 // pred_check
          %p3954 = pneg %p299
        $region78: #{tpu_custom_call.1} parent=71 // pred_check_branch
          %3956 = sbr.rel (%p3954) target = $region80
        $region79: #{tpu_custom_call.1} parent=71 // pred_region
          %s3957 = sand.u32 %s284, 1
          %s3958 = scalar_lea.sflag [#allocation5], %s3957
          %s3959 = sand.u32 %s284, 1
          %s3960 = smul.addr %s3959, 8
          %s3961 = scalar_lea.vmem [#allocation4], %s3960
          %3963 = dma.done %s3958, 128
        $region80: #{tpu_custom_call.1} parent=71 // pred_fallthru
          _
      $region72: #{tpu_custom_call.1} parent=5 // pred_fallthru
        _
    $region6: #{tpu_custom_call.1} parent=1 // loop_footer
      %s28 = sadd.s32 1, %s24
    $region7: #{tpu_custom_call.1} parent=1 // loop_footer_branch
      %23 = sbr.rel target = $region3
    $region8: #{tpu_custom_call.1} parent=1 // loop_exit
      _
    %3964 = vsyncpa [#allocation3], 1
    %s3965 = scalar_lea.sflag [#allocation3], 1
    %3966 = vsyncpa %s3965, 1
    %3967 = vsyncpa [#allocation5], 1
    %s3968 = scalar_lea.sflag [#allocation5], 1
    %3969 = vsyncpa %s3968, 1

</llo_original>
